<compile_context>
chip_gen: v7x
topology: tpu7x:2x2x1
jax: 0.10.0
libtpu: 0.0.40
codegen_flags: <defaults>
</compile_context>

<pallas_src>
import functools
import math

import jax
import jax.numpy as jnp
import numpy as np
from jax.experimental import pallas as pl
from jax.experimental.pallas import tpu as pltpu


# ----------------------------------------------------------------------------- kernel
def _decoder_kernel(layer_size, Hp, *refs):
    (enc_ref, encp_ref, emb_ref, h0_ref,
     att_wh_ref, att_b_ref, att_v_ref, wi_emb_ref) = refs[:8]
    gru_refs = refs[8:8 + 4 * layer_size]
    out_wh_ref, out_wc_ref, out_b_ref = refs[8 + 4 * layer_size: 11 + 4 * layer_size]
    logp_ref, hid_ref, attw_ref = refs[11 + 4 * layer_size:]

    enc = enc_ref[...]                                   # (Bp, S, Hp) bf16
    Bp, S, _ = enc.shape
    bf16 = jnp.bfloat16

    # ---------------- attention (enc @ att_we was precomputed per sequence) ---------
    h_top = h0_ref[layer_size - 1]                       # (Bp, Hp) f32
    hproj = jnp.dot(h_top.astype(bf16), att_wh_ref[...],
                    preferred_element_type=jnp.float32)  # (Bp, Hp) f32
    en = encp_ref[...].astype(jnp.float32) + hproj[:, None, :] + att_b_ref[...][None, :, :]
    en = jnp.maximum(en, 0.0)                            # relu
    scores = jnp.sum(en * att_v_ref[...][None, :, :], axis=-1)          # (Bp, S)
    scores = scores - jnp.max(scores, axis=-1, keepdims=True)
    e = jnp.exp(scores)
    attw = e / jnp.sum(e, axis=-1, keepdims=True)                        # softmax over S
    attw_ref[...] = attw.astype(attw_ref.dtype)

    # ---------------- context: batched matmul on the MXU ----------------------------
    ctx = jnp.einsum('bqs,bsh->bqh', attw[:, None, :].astype(bf16), enc,
                     preferred_element_type=jnp.float32)                 # (Bp, 1, Hp)
    context = ctx[:, 0, :]                                               # (Bp, Hp) f32

    # ---------------- stacked GRU (single time step) --------------------------------
    emb = emb_ref[...]                                   # (Bp, Ep) bf16
    x = context                                          # f32
    for l in range(layer_size):
        wi_ref, wh_ref, bi_ref, bh_ref = gru_refs[4 * l: 4 * l + 4]
        h_prev = h0_ref[l]                               # (Bp, Hp) f32
        gi = jnp.dot(x.astype(bf16), wi_ref[...],
                     preferred_element_type=jnp.float32) + bi_ref[...]
        if l == 0:
            # layer-0 input is [emb ; context]; the concat is replaced by two dots
            gi = gi + jnp.dot(emb, wi_emb_ref[...], preferred_element_type=jnp.float32)
        gh = jnp.dot(h_prev.astype(bf16), wh_ref[...],
                     preferred_element_type=jnp.float32) + bh_ref[...]
        r = jax.nn.sigmoid(gi[:, :Hp] + gh[:, :Hp])
        z = jax.nn.sigmoid(gi[:, Hp:2 * Hp] + gh[:, Hp:2 * Hp])
        n = jnp.tanh(gi[:, 2 * Hp:] + r * gh[:, 2 * Hp:])
        h_new = (1.0 - z) * n + z * h_prev
        hid_ref[l] = h_new.astype(hid_ref.dtype)
        x = h_new
    # TODO(synk): PyTorch GRU inter-layer dropout is train-mode only; omitted (eval semantics).

    # ---------------- output projection (split weights, no concat) + log_softmax ----
    y = jnp.dot(x.astype(bf16), out_wh_ref[...], preferred_element_type=jnp.float32)
    y = y + jnp.dot(context.astype(bf16), out_wc_ref[...], preferred_element_type=jnp.float32)
    y = y + out_b_ref[...]                               # padded vocab cols carry -1e9 bias
    y = y - jnp.max(y, axis=-1, keepdims=True)
    logp_ref[...] = (y - jnp.log(jnp.sum(jnp.exp(y), axis=-1, keepdims=True))
                     ).astype(logp_ref.dtype)


# ----------------------------------------------------------------------------- wrapper
@jax.jit
def decoder_forward(packed, emb, enc, enc_proj, h0):
    """One decode step. All operands are already padded / bf16-packed."""
    L = len(packed['gru'])
    Bp, S, Hp = enc.shape
    Vp = packed['out_W_h'].shape[1]

    operands = [enc, enc_proj, emb, h0,
                packed['att_wh'], packed['att_b'], packed['att_v'],
                packed['wi_emb']]
    for g in packed['gru']:
        operands += [g['wi'], g['wh'], g['bi'], g['bh']]
    operands += [packed['out_W_h'], packed['out_W_ctx'], packed['out_b']]

    def spec(a):
        n = a.ndim
        return pl.BlockSpec(a.shape, lambda i, n=n: (0,) * n)

    out_shape = (jax.ShapeDtypeStruct((Bp, Vp), jnp.float32),
                 jax.ShapeDtypeStruct((L, Bp, Hp), jnp.float32),
                 jax.ShapeDtypeStruct((Bp, S), jnp.float32))
    out_specs = (pl.BlockSpec((Bp, Vp), lambda i: (0, 0)),
                 pl.BlockSpec((L, Bp, Hp), lambda i: (0, 0, 0)),
                 pl.BlockSpec((Bp, S), lambda i: (0, 0)))

    kernel = functools.partial(_decoder_kernel, L, Hp)
    return pl.pallas_call(
        kernel,
        grid=(1,),
        in_specs=[spec(a) for a in operands],
        out_specs=out_specs,
        out_shape=out_shape,
        input_output_aliases={3: 1},     # h0 -> hidden output (in-place GRU state update)
        compiler_params=pltpu.CompilerParams(
            dimension_semantics=("arbitrary",),
            vmem_limit_bytes=32 * 1024 * 1024),
    )(*operands)


# ----------------------------------------------------------------------------- host prep
def _round_up(x, m):
    return ((x + m - 1) // m) * m


def _pad2(x, rows, cols, fill=0.0):
    return jnp.pad(x, ((0, rows - x.shape[0]), (0, cols - x.shape[1])),
                   constant_values=fill)


def _pad_gates(w, Hp):
    """(in, 3H) with gates [r|z|n] -> (in, 3*Hp), each gate zero-padded to Hp."""
    inn, threeH = w.shape
    H = threeH // 3
    w = w.reshape(inn, 3, H)
    w = jnp.pad(w, ((0, 0), (0, 0), (0, Hp - H)))
    return w.reshape(inn, 3 * Hp)


def pack_params(p, Hp, Ep, Vp):
    """Pad / split / cast all weights once (host side, outside the decode loop)."""
    H = p['att_wh'].shape[0]
    E = p['embed'].shape[1]
    V = p['out_W'].shape[1]
    bf = jnp.bfloat16
    packed = dict(
        embed=jnp.pad(p['embed'], ((0, 0), (0, Ep - E))).astype(bf),
        att_we=_pad2(p['att_we'], Hp, Hp).astype(bf),
        att_wh=_pad2(p['att_wh'], Hp, Hp).astype(bf),
        att_b=_pad2(p['att_b'], 1, Hp),
        att_v=_pad2(p['att_v'], 1, Hp),
        out_W_h=_pad2(p['out_W'][:H], Hp, Vp).astype(bf),
        out_W_ctx=_pad2(p['out_W'][H:], Hp, Vp).astype(bf),
        out_b=_pad2(p['out_b'], 1, Vp, fill=-1e9),   # mask padded vocab columns
        gru=[],
    )
    g0 = p['gru'][0]
    packed['wi_emb'] = _pad2(_pad_gates(g0['wi_T'][:E], Hp), Ep, 3 * Hp).astype(bf)
    for l, g in enumerate(p['gru']):
        wi = g['wi_T'][E:] if l == 0 else g['wi_T']          # (H, 3H)
        packed['gru'].append(dict(
            wi=_pad2(_pad_gates(wi, Hp), Hp, 3 * Hp).astype(bf),
            wh=_pad2(_pad_gates(g['wh_T'], Hp), Hp, 3 * Hp).astype(bf),
            bi=_pad_gates(g['bi'], Hp),
            bh=_pad_gates(g['bh'], Hp),
        ))
    return packed


def prepare_encoder(packed, encoder_outs, Bp, Hp):
    """Once per sequence: transpose to batch-major, pad, and precompute enc @ att_we."""
    S, B, H = encoder_outs.shape
    enc = jnp.transpose(encoder_outs, (1, 0, 2))                         # (B, S, H)
    enc = jnp.pad(enc, ((0, Bp - B), (0, 0), (0, Hp - H))).astype(jnp.bfloat16)
    enc_proj = jnp.einsum('bsh,hk->bsk', enc, packed['att_we'],
                          preferred_element_type=jnp.float32).astype(jnp.bfloat16)
    return enc, enc_proj


# ----------------------------------------------------------------------------- reference
def decoder_ref(packed, emb, enc, enc_proj, h0):
    """Pure-JAX reference consuming exactly the same packed operands as the kernel."""
    bf = jnp.bfloat16
    Hp = h0.shape[-1]
    h_top = h0[-1]
    hproj = jnp.dot(h_top.astype(bf), packed['att_wh'], preferred_element_type=jnp.float32)
    en = jax.nn.relu(enc_proj.astype(jnp.float32) + hproj[:, None, :] + packed['att_b'][None])
    scores = jnp.sum(en * packed['att_v'][None], axis=-1)
    attw = jax.nn.softmax(scores, axis=-1)
    context = jnp.einsum('bqs,bsh->bqh', attw[:, None, :].astype(bf), enc,
                         preferred_element_type=jnp.float32)[:, 0]
    x = context
    hs = []
    for l, g in enumerate(packed['gru']):
        h_prev = h0[l]
        gi = jnp.dot(x.astype(bf), g['wi'], preferred_element_type=jnp.float32) + g['bi']
        if l == 0:
            gi = gi + jnp.dot(emb, packed['wi_emb'], preferred_element_type=jnp.float32)
        gh = jnp.dot(h_prev.astype(bf), g['wh'], preferred_element_type=jnp.float32) + g['bh']
        r = jax.nn.sigmoid(gi[:, :Hp] + gh[:, :Hp])
        z = jax.nn.sigmoid(gi[:, Hp:2 * Hp] + gh[:, Hp:2 * Hp])
        n = jnp.tanh(gi[:, 2 * Hp:] + r * gh[:, 2 * Hp:])
        h_new = (1.0 - z) * n + z * h_prev
        hs.append(h_new)
        x = h_new
    hidden = jnp.stack(hs)
    y = (jnp.dot(x.astype(bf), packed['out_W_h'], preferred_element_type=jnp.float32)
         + jnp.dot(context.astype(bf), packed['out_W_ctx'], preferred_element_type=jnp.float32)
         + packed['out_b'])
    return jax.nn.log_softmax(y, axis=-1), hidden, attw


# ----------------------------------------------------------------------------- params
def init_params(key, vocab_size, embed_dim, hidden, layer_size):
    keys = jax.random.split(key, 6 + 4 * layer_size)
    ki = iter(keys)
    u = lambda k, shape, s: jax.random.uniform(k, shape, jnp.float32, -s, s)

    s_att = 1.0 / math.sqrt(2 * hidden)
    att_W = u(next(ki), (2 * hidden, hidden), s_att)        # [enc ; hidden] -> hidden
    params = dict(
        embed=jax.random.normal(next(ki), (vocab_size, embed_dim), jnp.float32),
        att_we=att_W[:hidden],
        att_wh=att_W[hidden:],
        att_b=u(next(ki), (1, hidden), s_att),
        att_v=u(next(ki), (1, hidden), 1.0 / math.sqrt(hidden)),
        gru=[],
    )
    s_gru = 1.0 / math.sqrt(hidden)
    for l in range(layer_size):
        in_l = (hidden + embed_dim) if l == 0 else hidden
        params['gru'].append(dict(
            wi_T=u(next(ki), (in_l, 3 * hidden), s_gru),
            wh_T=u(next(ki), (hidden, 3 * hidden), s_gru),
            bi=u(next(ki), (1, 3 * hidden), s_gru),
            bh=u(next(ki), (1, 3 * hidden), s_gru),
        ))
    s_out = 1.0 / math.sqrt(2 * hidden)
    params['out_W'] = u(next(ki), (2 * hidden, vocab_size), s_out)
    params['out_b'] = u(next(ki), (1, vocab_size), s_out)
    return params


# ----------------------------------------------------------------------------- main
if __name__ == "__main__":
    vocab_size, embed_dim, hidden, layer_size = 64, 16, 32, 2
    batch, step = 2, 8

    key = jax.random.PRNGKey(0)
    kp, k1, k2, k3 = jax.random.split(key, 4)
    params = init_params(kp, vocab_size, embed_dim, hidden, layer_size)

    Hp = _round_up(hidden, 128)
    Ep = _round_up(embed_dim, 128)
    Vp = _round_up(vocab_size, 128)
    Bp = _round_up(batch, 8)

    packed = pack_params(params, Hp, Ep, Vp)

    input_ids = jax.random.randint(k1, (1, batch), 0, vocab_size)              # (1, B)
    encoder_outs = jax.random.normal(k2, (step, batch, hidden), jnp.float32)   # (S, B, H)
    last_hidden = jax.random.normal(k3, (layer_size, batch, hidden), jnp.float32)

    # once-per-sequence prep (hoisted out of the decode loop)
    enc, enc_proj = prepare_encoder(packed, encoder_outs, Bp, Hp)

    # per-step glue: embedding gather (plain JAX) + sublane padding of the tiny operands
    emb = packed['embed'][input_ids[0]]                                        # (B, Ep) bf16
    emb = jnp.pad(emb, ((0, Bp - batch), (0, 0)))
    h0 = jnp.pad(last_hidden, ((0, 0), (0, Bp - batch), (0, Hp - hidden)))

    logp_p, hidden_p, attw_p = decoder_forward(packed, emb, enc, enc_proj, h0)
    jax.block_until_ready((logp_p, hidden_p, attw_p))

    # slice away padding (outside the kernel)
    logp = logp_p[:batch, :vocab_size]
    hidden_out = hidden_p[:, :batch, :hidden]
    attw = attw_p[:batch, :step]

    # correctness check against pure-JAX reference (same packed operands)
    logp_r, hidden_r, attw_r = decoder_ref(packed, emb, enc, enc_proj, h0)
    np.testing.assert_allclose(np.asarray(logp),
                               np.asarray(logp_r[:batch, :vocab_size]),
                               rtol=2e-3, atol=2e-3)
    np.testing.assert_allclose(np.asarray(hidden_out),
                               np.asarray(hidden_r[:, :batch, :hidden]),
                               rtol=2e-3, atol=2e-3)
    np.testing.assert_allclose(np.asarray(attw),
                               np.asarray(attw_r[:batch, :step]),
                               rtol=2e-3, atol=2e-3)

    print("KERNEL_OK")
</pallas_src>

<mosaic_0001>
module attributes {stable_mosaic.version = 11 : i64} {
  func.func @_decoder_kernel(%arg0: i32, %arg1: memref<8x8x128xbf16, #tpu.memory_space<vmem>>, %arg2: memref<8x8x128xbf16, #tpu.memory_space<vmem>>, %arg3: memref<8x128xbf16, #tpu.memory_space<vmem>>, %arg4: memref<2x8x128xf32, #tpu.memory_space<vmem>>, %arg5: memref<128x128xbf16, #tpu.memory_space<vmem>>, %arg6: memref<1x128xf32, #tpu.memory_space<vmem>>, %arg7: memref<1x128xf32, #tpu.memory_space<vmem>>, %arg8: memref<128x384xbf16, #tpu.memory_space<vmem>>, %arg9: memref<128x384xbf16, #tpu.memory_space<vmem>>, %arg10: memref<128x384xbf16, #tpu.memory_space<vmem>>, %arg11: memref<1x384xf32, #tpu.memory_space<vmem>>, %arg12: memref<1x384xf32, #tpu.memory_space<vmem>>, %arg13: memref<128x384xbf16, #tpu.memory_space<vmem>>, %arg14: memref<128x384xbf16, #tpu.memory_space<vmem>>, %arg15: memref<1x384xf32, #tpu.memory_space<vmem>>, %arg16: memref<1x384xf32, #tpu.memory_space<vmem>>, %arg17: memref<128x128xbf16, #tpu.memory_space<vmem>>, %arg18: memref<128x128xbf16, #tpu.memory_space<vmem>>, %arg19: memref<1x128xf32, #tpu.memory_space<vmem>>, %arg20: memref<8x128xf32, #tpu.memory_space<vmem>>, %arg21: memref<2x8x128xf32, #tpu.memory_space<vmem>>, %arg22: memref<8x8xf32, #tpu.memory_space<vmem>>) attributes {dimension_semantics = [#tpu.dimension_semantics<arbitrary>], iteration_bounds = array<i64: 1>, scalar_prefetch = 0 : i64, scratch_operands = 0 : i64, tpu.core_type = #tpu.core_type<tc>, window_params = [{pipeline_mode = #tpu.pipeline_mode<synchronous>, transform_indices = @transform_0, window_bounds = array<i64: 8, 8, 128>}, {pipeline_mode = #tpu.pipeline_mode<synchronous>, transform_indices = @transform_1, window_bounds = array<i64: 8, 8, 128>}, {pipeline_mode = #tpu.pipeline_mode<synchronous>, transform_indices = @transform_2, window_bounds = array<i64: 8, 128>}, {pipeline_mode = #tpu.pipeline_mode<synchronous>, transform_indices = @transform_3, window_bounds = array<i64: 2, 8, 128>}, {pipeline_mode = #tpu.pipeline_mode<synchronous>, transform_indices = @transform_4, window_bounds = array<i64: 128, 128>}, {pipeline_mode = #tpu.pipeline_mode<synchronous>, transform_indices = @transform_5, window_bounds = array<i64: 1, 128>}, {pipeline_mode = #tpu.pipeline_mode<synchronous>, transform_indices = @transform_6, window_bounds = array<i64: 1, 128>}, {pipeline_mode = #tpu.pipeline_mode<synchronous>, transform_indices = @transform_7, window_bounds = array<i64: 128, 384>}, {pipeline_mode = #tpu.pipeline_mode<synchronous>, transform_indices = @transform_8, window_bounds = array<i64: 128, 384>}, {pipeline_mode = #tpu.pipeline_mode<synchronous>, transform_indices = @transform_9, window_bounds = array<i64: 128, 384>}, {pipeline_mode = #tpu.pipeline_mode<synchronous>, transform_indices = @transform_10, window_bounds = array<i64: 1, 384>}, {pipeline_mode = #tpu.pipeline_mode<synchronous>, transform_indices = @transform_11, window_bounds = array<i64: 1, 384>}, {pipeline_mode = #tpu.pipeline_mode<synchronous>, transform_indices = @transform_12, window_bounds = array<i64: 128, 384>}, {pipeline_mode = #tpu.pipeline_mode<synchronous>, transform_indices = @transform_13, window_bounds = array<i64: 128, 384>}, {pipeline_mode = #tpu.pipeline_mode<synchronous>, transform_indices = @transform_14, window_bounds = array<i64: 1, 384>}, {pipeline_mode = #tpu.pipeline_mode<synchronous>, transform_indices = @transform_15, window_bounds = array<i64: 1, 384>}, {pipeline_mode = #tpu.pipeline_mode<synchronous>, transform_indices = @transform_16, window_bounds = array<i64: 128, 128>}, {pipeline_mode = #tpu.pipeline_mode<synchronous>, transform_indices = @transform_17, window_bounds = array<i64: 128, 128>}, {pipeline_mode = #tpu.pipeline_mode<synchronous>, transform_indices = @transform_18, window_bounds = array<i64: 1, 128>}, {pipeline_mode = #tpu.pipeline_mode<synchronous>, transform_indices = @transform_19, window_bounds = array<i64: 8, 128>}, {pipeline_mode = #tpu.pipeline_mode<synchronous>, transform_indices = @transform_20, window_bounds = array<i64: 2, 8, 128>}, {pipeline_mode = #tpu.pipeline_mode<synchronous>, transform_indices = @transform_21, window_bounds = array<i64: 8, 8>}]} {
    %c0 = arith.constant 0 : index
    %c0_0 = arith.constant 0 : index
    %c0_1 = arith.constant 0 : index
    %0 = vector.load %arg1[%c0, %c0_0, %c0_1] : memref<8x8x128xbf16, #tpu.memory_space<vmem>>, vector<8x8x128xbf16>
    %c1 = arith.constant 1 : index
    %c0_2 = arith.constant 0 : index
    %c0_3 = arith.constant 0 : index
    %1 = vector.load %arg4[%c1, %c0_2, %c0_3] : memref<2x8x128xf32, #tpu.memory_space<vmem>>, vector<1x8x128xf32>
    %2 = vector.shape_cast %1 : vector<1x8x128xf32> to vector<8x128xf32>
    %3 = arith.truncf %2 : vector<8x128xf32> to vector<8x128xbf16>
    %c0_4 = arith.constant 0 : index
    %c0_5 = arith.constant 0 : index
    %4 = vector.load %arg5[%c0_4, %c0_5] : memref<128x128xbf16, #tpu.memory_space<vmem>>, vector<128x128xbf16>
    %cst = arith.constant dense<0.000000e+00> : vector<8x128xf32>
    %5 = tpu.matmul %3, %4, %cst {dimension_numbers = #tpu.dot_dimension_numbers<[1], [0], [0], [1], [0, 0, 1, 1], [], []>} : vector<8x128xbf16>, vector<128x128xbf16>, vector<8x128xf32> -> vector<8x128xf32>
    %c0_6 = arith.constant 0 : index
    %c0_7 = arith.constant 0 : index
    %c0_8 = arith.constant 0 : index
    %6 = vector.load %arg2[%c0_6, %c0_7, %c0_8] : memref<8x8x128xbf16, #tpu.memory_space<vmem>>, vector<8x8x128xbf16>
    %7 = arith.extf %6 : vector<8x8x128xbf16> to vector<8x8x128xf32>
    %8 = vector.shape_cast %5 : vector<8x128xf32> to vector<8x1x128xf32>
    %9 = vector.broadcast %8 : vector<8x1x128xf32> to vector<8x8x128xf32>
    %10 = arith.addf %7, %9 : vector<8x8x128xf32>
    %c0_9 = arith.constant 0 : index
    %c0_10 = arith.constant 0 : index
    %11 = vector.load %arg6[%c0_9, %c0_10] : memref<1x128xf32, #tpu.memory_space<vmem>>, vector<1x128xf32>
    %12 = vector.shape_cast %11 : vector<1x128xf32> to vector<1x1x128xf32>
    %13 = vector.broadcast %12 : vector<1x1x128xf32> to vector<8x8x128xf32>
    %14 = arith.addf %10, %13 : vector<8x8x128xf32>
    %cst_11 = arith.constant 0.000000e+00 : f32
    %15 = vector.broadcast %cst_11 : f32 to vector<8x8x128xf32>
    %16 = arith.maximumf %14, %15 : vector<8x8x128xf32>
    %c0_12 = arith.constant 0 : index
    %c0_13 = arith.constant 0 : index
    %17 = vector.load %arg7[%c0_12, %c0_13] : memref<1x128xf32, #tpu.memory_space<vmem>>, vector<1x128xf32>
    %18 = vector.shape_cast %17 : vector<1x128xf32> to vector<1x1x128xf32>
    %19 = vector.broadcast %18 : vector<1x1x128xf32> to vector<8x8x128xf32>
    %20 = arith.mulf %16, %19 : vector<8x8x128xf32>
    %cst_14 = arith.constant dense<0.000000e+00> : vector<8x8xf32>
    %21 = vector.multi_reduction <add>, %20, %cst_14 [2] : vector<8x8x128xf32> to vector<8x8xf32>
    %cst_15 = arith.constant dense<0xFF800000> : vector<8xf32>
    %22 = vector.multi_reduction <maximumf>, %21, %cst_15 [1] : vector<8x8xf32> to vector<8xf32>
    %23 = vector.shape_cast %22 : vector<8xf32> to vector<8x1xf32>
    %24 = vector.broadcast %23 : vector<8x1xf32> to vector<8x8xf32>
    %25 = arith.subf %21, %24 : vector<8x8xf32>
    %26 = math.exp %25 : vector<8x8xf32>
    %cst_16 = arith.constant dense<0.000000e+00> : vector<8xf32>
    %27 = vector.multi_reduction <add>, %26, %cst_16 [1] : vector<8x8xf32> to vector<8xf32>
    %28 = vector.shape_cast %27 : vector<8xf32> to vector<8x1xf32>
    %29 = vector.broadcast %28 : vector<8x1xf32> to vector<8x8xf32>
    %30 = arith.divf %26, %29 : vector<8x8xf32>
    %c0_17 = arith.constant 0 : index
    %c0_18 = arith.constant 0 : index
    %31 = vector.load %arg22[%c0_17, %c0_18] : memref<8x8xf32, #tpu.memory_space<vmem>>, vector<8x8xf32>
    tpu.vector_store %arg22[%c0_17, %c0_18], %30 {strides = array<i32>} : memref<8x8xf32, #tpu.memory_space<vmem>>, vector<8x8xf32>,
    %32 = vector.shape_cast %30 : vector<8x8xf32> to vector<8x1x8xf32>
    %33 = arith.truncf %32 : vector<8x1x8xf32> to vector<8x1x8xbf16>
    "tpu.trace_start"() <{level = 10 : i32, message = "bqs,bsh->bqh"}> : () -> ()
    %cst_19 = arith.constant dense<0.000000e+00> : vector<8x1x128xf32>
    %34 = tpu.matmul %33, %0, %cst_19 {dimension_numbers = #tpu.dot_dimension_numbers<[2], [1], [1], [2], [0, 0, 0, 1, 1, 2], [0], [0]>} : vector<8x1x8xbf16>, vector<8x8x128xbf16>, vector<8x1x128xf32> -> vector<8x1x128xf32>
    "tpu.trace_stop"() : () -> ()
    %35 = vector.shape_cast %34 : vector<8x1x128xf32> to vector<8x128xf32>
    %c0_20 = arith.constant 0 : index
    %c0_21 = arith.constant 0 : index
    %36 = vector.load %arg3[%c0_20, %c0_21] : memref<8x128xbf16, #tpu.memory_space<vmem>>, vector<8x128xbf16>
    %c0_22 = arith.constant 0 : index
    %c0_23 = arith.constant 0 : index
    %c0_24 = arith.constant 0 : index
    %37 = vector.load %arg4[%c0_22, %c0_23, %c0_24] : memref<2x8x128xf32, #tpu.memory_space<vmem>>, vector<1x8x128xf32>
    %38 = vector.shape_cast %37 : vector<1x8x128xf32> to vector<8x128xf32>
    %39 = arith.truncf %35 : vector<8x128xf32> to vector<8x128xbf16>
    %c0_25 = arith.constant 0 : index
    %c0_26 = arith.constant 0 : index
    %40 = vector.load %arg9[%c0_25, %c0_26] : memref<128x384xbf16, #tpu.memory_space<vmem>>, vector<128x384xbf16>
    %cst_27 = arith.constant dense<0.000000e+00> : vector<8x384xf32>
    %41 = tpu.matmul %39, %40, %cst_27 {dimension_numbers = #tpu.dot_dimension_numbers<[1], [0], [0], [1], [0, 0, 1, 1], [], []>} : vector<8x128xbf16>, vector<128x384xbf16>, vector<8x384xf32> -> vector<8x384xf32>
    %c0_28 = arith.constant 0 : index
    %c0_29 = arith.constant 0 : index
    %42 = vector.load %arg11[%c0_28, %c0_29] : memref<1x384xf32, #tpu.memory_space<vmem>>, vector<1x384xf32>
    %43 = vector.broadcast %42 : vector<1x384xf32> to vector<8x384xf32>
    %44 = arith.addf %41, %43 : vector<8x384xf32>
    %c0_30 = arith.constant 0 : index
    %c0_31 = arith.constant 0 : index
    %45 = vector.load %arg8[%c0_30, %c0_31] : memref<128x384xbf16, #tpu.memory_space<vmem>>, vector<128x384xbf16>
    %cst_32 = arith.constant dense<0.000000e+00> : vector<8x384xf32>
    %46 = tpu.matmul %36, %45, %cst_32 {dimension_numbers = #tpu.dot_dimension_numbers<[1], [0], [0], [1], [0, 0, 1, 1], [], []>} : vector<8x128xbf16>, vector<128x384xbf16>, vector<8x384xf32> -> vector<8x384xf32>
    %47 = arith.addf %44, %46 : vector<8x384xf32>
    %48 = arith.truncf %38 : vector<8x128xf32> to vector<8x128xbf16>
    %c0_33 = arith.constant 0 : index
    %c0_34 = arith.constant 0 : index
    %49 = vector.load %arg10[%c0_33, %c0_34] : memref<128x384xbf16, #tpu.memory_space<vmem>>, vector<128x384xbf16>
    %cst_35 = arith.constant dense<0.000000e+00> : vector<8x384xf32>
    %50 = tpu.matmul %48, %49, %cst_35 {dimension_numbers = #tpu.dot_dimension_numbers<[1], [0], [0], [1], [0, 0, 1, 1], [], []>} : vector<8x128xbf16>, vector<128x384xbf16>, vector<8x384xf32> -> vector<8x384xf32>
    %c0_36 = arith.constant 0 : index
    %c0_37 = arith.constant 0 : index
    %51 = vector.load %arg12[%c0_36, %c0_37] : memref<1x384xf32, #tpu.memory_space<vmem>>, vector<1x384xf32>
    %52 = vector.broadcast %51 : vector<1x384xf32> to vector<8x384xf32>
    %53 = arith.addf %50, %52 : vector<8x384xf32>
    %54 = vector.extract_strided_slice %47 {offsets = [0, 0], sizes = [8, 128], strides = [1, 1]} : vector<8x384xf32> to vector<8x128xf32>
    %55 = vector.extract_strided_slice %53 {offsets = [0, 0], sizes = [8, 128], strides = [1, 1]} : vector<8x384xf32> to vector<8x128xf32>
    %56 = arith.addf %54, %55 : vector<8x128xf32>
    %57 = arith.negf %56 : vector<8x128xf32>
    %58 = math.exp %57 : vector<8x128xf32>
    %cst_38 = arith.constant 1.000000e+00 : f32
    %59 = vector.broadcast %cst_38 : f32 to vector<8x128xf32>
    %60 = arith.addf %59, %58 : vector<8x128xf32>
    %61 = arith.divf %59, %60 : vector<8x128xf32>
    %62 = vector.extract_strided_slice %47 {offsets = [0, 128], sizes = [8, 128], strides = [1, 1]} : vector<8x384xf32> to vector<8x128xf32>
    %63 = vector.extract_strided_slice %53 {offsets = [0, 128], sizes = [8, 128], strides = [1, 1]} : vector<8x384xf32> to vector<8x128xf32>
    %64 = arith.addf %62, %63 : vector<8x128xf32>
    %65 = arith.negf %64 : vector<8x128xf32>
    %66 = math.exp %65 : vector<8x128xf32>
    %cst_39 = arith.constant 1.000000e+00 : f32
    %67 = vector.broadcast %cst_39 : f32 to vector<8x128xf32>
    %68 = arith.addf %67, %66 : vector<8x128xf32>
    %69 = arith.divf %67, %68 : vector<8x128xf32>
    %70 = vector.extract_strided_slice %47 {offsets = [0, 256], sizes = [8, 128], strides = [1, 1]} : vector<8x384xf32> to vector<8x128xf32>
    %71 = vector.extract_strided_slice %53 {offsets = [0, 256], sizes = [8, 128], strides = [1, 1]} : vector<8x384xf32> to vector<8x128xf32>
    %72 = arith.mulf %61, %71 : vector<8x128xf32>
    %73 = arith.addf %70, %72 : vector<8x128xf32>
    %74 = math.tanh %73 : vector<8x128xf32>
    %cst_40 = arith.constant 1.000000e+00 : f32
    %75 = vector.broadcast %cst_40 : f32 to vector<8x128xf32>
    %76 = arith.subf %75, %69 : vector<8x128xf32>
    %77 = arith.mulf %76, %74 : vector<8x128xf32>
    %78 = arith.mulf %69, %38 : vector<8x128xf32>
    %79 = arith.addf %77, %78 : vector<8x128xf32>
    %c0_41 = arith.constant 0 : index
    %c0_42 = arith.constant 0 : index
    %c0_43 = arith.constant 0 : index
    %80 = vector.load %arg21[%c0_41, %c0_42, %c0_43] : memref<2x8x128xf32, #tpu.memory_space<vmem>>, vector<1x8x128xf32>
    %81 = vector.shape_cast %80 : vector<1x8x128xf32> to vector<8x128xf32>
    %82 = vector.shape_cast %79 : vector<8x128xf32> to vector<1x8x128xf32>
    tpu.vector_store %arg21[%c0_41, %c0_42, %c0_43], %82 {strides = array<i32>} : memref<2x8x128xf32, #tpu.memory_space<vmem>>, vector<1x8x128xf32>,
    %c1_44 = arith.constant 1 : index
    %c0_45 = arith.constant 0 : index
    %c0_46 = arith.constant 0 : index
    %83 = vector.load %arg4[%c1_44, %c0_45, %c0_46] : memref<2x8x128xf32, #tpu.memory_space<vmem>>, vector<1x8x128xf32>
    %84 = vector.shape_cast %83 : vector<1x8x128xf32> to vector<8x128xf32>
    %85 = arith.truncf %79 : vector<8x128xf32> to vector<8x128xbf16>
    %c0_47 = arith.constant 0 : index
    %c0_48 = arith.constant 0 : index
    %86 = vector.load %arg13[%c0_47, %c0_48] : memref<128x384xbf16, #tpu.memory_space<vmem>>, vector<128x384xbf16>
    %cst_49 = arith.constant dense<0.000000e+00> : vector<8x384xf32>
    %87 = tpu.matmul %85, %86, %cst_49 {dimension_numbers = #tpu.dot_dimension_numbers<[1], [0], [0], [1], [0, 0, 1, 1], [], []>} : vector<8x128xbf16>, vector<128x384xbf16>, vector<8x384xf32> -> vector<8x384xf32>
    %c0_50 = arith.constant 0 : index
    %c0_51 = arith.constant 0 : index
    %88 = vector.load %arg15[%c0_50, %c0_51] : memref<1x384xf32, #tpu.memory_space<vmem>>, vector<1x384xf32>
    %89 = vector.broadcast %88 : vector<1x384xf32> to vector<8x384xf32>
    %90 = arith.addf %87, %89 : vector<8x384xf32>
    %91 = arith.truncf %84 : vector<8x128xf32> to vector<8x128xbf16>
    %c0_52 = arith.constant 0 : index
    %c0_53 = arith.constant 0 : index
    %92 = vector.load %arg14[%c0_52, %c0_53] : memref<128x384xbf16, #tpu.memory_space<vmem>>, vector<128x384xbf16>
    %cst_54 = arith.constant dense<0.000000e+00> : vector<8x384xf32>
    %93 = tpu.matmul %91, %92, %cst_54 {dimension_numbers = #tpu.dot_dimension_numbers<[1], [0], [0], [1], [0, 0, 1, 1], [], []>} : vector<8x128xbf16>, vector<128x384xbf16>, vector<8x384xf32> -> vector<8x384xf32>
    %c0_55 = arith.constant 0 : index
    %c0_56 = arith.constant 0 : index
    %94 = vector.load %arg16[%c0_55, %c0_56] : memref<1x384xf32, #tpu.memory_space<vmem>>, vector<1x384xf32>
    %95 = vector.broadcast %94 : vector<1x384xf32> to vector<8x384xf32>
    %96 = arith.addf %93, %95 : vector<8x384xf32>
    %97 = vector.extract_strided_slice %90 {offsets = [0, 0], sizes = [8, 128], strides = [1, 1]} : vector<8x384xf32> to vector<8x128xf32>
    %98 = vector.extract_strided_slice %96 {offsets = [0, 0], sizes = [8, 128], strides = [1, 1]} : vector<8x384xf32> to vector<8x128xf32>
    %99 = arith.addf %97, %98 : vector<8x128xf32>
    %100 = arith.negf %99 : vector<8x128xf32>
    %101 = math.exp %100 : vector<8x128xf32>
    %cst_57 = arith.constant 1.000000e+00 : f32
    %102 = vector.broadcast %cst_57 : f32 to vector<8x128xf32>
    %103 = arith.addf %102, %101 : vector<8x128xf32>
    %104 = arith.divf %102, %103 : vector<8x128xf32>
    %105 = vector.extract_strided_slice %90 {offsets = [0, 128], sizes = [8, 128], strides = [1, 1]} : vector<8x384xf32> to vector<8x128xf32>
    %106 = vector.extract_strided_slice %96 {offsets = [0, 128], sizes = [8, 128], strides = [1, 1]} : vector<8x384xf32> to vector<8x128xf32>
    %107 = arith.addf %105, %106 : vector<8x128xf32>
    %108 = arith.negf %107 : vector<8x128xf32>
    %109 = math.exp %108 : vector<8x128xf32>
    %cst_58 = arith.constant 1.000000e+00 : f32
    %110 = vector.broadcast %cst_58 : f32 to vector<8x128xf32>
    %111 = arith.addf %110, %109 : vector<8x128xf32>
    %112 = arith.divf %110, %111 : vector<8x128xf32>
    %113 = vector.extract_strided_slice %90 {offsets = [0, 256], sizes = [8, 128], strides = [1, 1]} : vector<8x384xf32> to vector<8x128xf32>
    %114 = vector.extract_strided_slice %96 {offsets = [0, 256], sizes = [8, 128], strides = [1, 1]} : vector<8x384xf32> to vector<8x128xf32>
    %115 = arith.mulf %104, %114 : vector<8x128xf32>
    %116 = arith.addf %113, %115 : vector<8x128xf32>
    %117 = math.tanh %116 : vector<8x128xf32>
    %cst_59 = arith.constant 1.000000e+00 : f32
    %118 = vector.broadcast %cst_59 : f32 to vector<8x128xf32>
    %119 = arith.subf %118, %112 : vector<8x128xf32>
    %120 = arith.mulf %119, %117 : vector<8x128xf32>
    %121 = arith.mulf %112, %84 : vector<8x128xf32>
    %122 = arith.addf %120, %121 : vector<8x128xf32>
    %c1_60 = arith.constant 1 : index
    %c0_61 = arith.constant 0 : index
    %c0_62 = arith.constant 0 : index
    %123 = vector.load %arg21[%c1_60, %c0_61, %c0_62] : memref<2x8x128xf32, #tpu.memory_space<vmem>>, vector<1x8x128xf32>
    %124 = vector.shape_cast %123 : vector<1x8x128xf32> to vector<8x128xf32>
    %125 = vector.shape_cast %122 : vector<8x128xf32> to vector<1x8x128xf32>
    tpu.vector_store %arg21[%c1_60, %c0_61, %c0_62], %125 {strides = array<i32>} : memref<2x8x128xf32, #tpu.memory_space<vmem>>, vector<1x8x128xf32>,
    %126 = arith.truncf %122 : vector<8x128xf32> to vector<8x128xbf16>
    %c0_63 = arith.constant 0 : index
    %c0_64 = arith.constant 0 : index
    %127 = vector.load %arg17[%c0_63, %c0_64] : memref<128x128xbf16, #tpu.memory_space<vmem>>, vector<128x128xbf16>
    %cst_65 = arith.constant dense<0.000000e+00> : vector<8x128xf32>
    %128 = tpu.matmul %126, %127, %cst_65 {dimension_numbers = #tpu.dot_dimension_numbers<[1], [0], [0], [1], [0, 0, 1, 1], [], []>} : vector<8x128xbf16>, vector<128x128xbf16>, vector<8x128xf32> -> vector<8x128xf32>
    %129 = arith.truncf %35 : vector<8x128xf32> to vector<8x128xbf16>
    %c0_66 = arith.constant 0 : index
    %c0_67 = arith.constant 0 : index
    %130 = vector.load %arg18[%c0_66, %c0_67] : memref<128x128xbf16, #tpu.memory_space<vmem>>, vector<128x128xbf16>
    %cst_68 = arith.constant dense<0.000000e+00> : vector<8x128xf32>
    %131 = tpu.matmul %129, %130, %cst_68 {dimension_numbers = #tpu.dot_dimension_numbers<[1], [0], [0], [1], [0, 0, 1, 1], [], []>} : vector<8x128xbf16>, vector<128x128xbf16>, vector<8x128xf32> -> vector<8x128xf32>
    %132 = arith.addf %128, %131 : vector<8x128xf32>
    %c0_69 = arith.constant 0 : index
    %c0_70 = arith.constant 0 : index
    %133 = vector.load %arg19[%c0_69, %c0_70] : memref<1x128xf32, #tpu.memory_space<vmem>>, vector<1x128xf32>
    %134 = vector.broadcast %133 : vector<1x128xf32> to vector<8x128xf32>
    %135 = arith.addf %132, %134 : vector<8x128xf32>
    %cst_71 = arith.constant dense<0xFF800000> : vector<8xf32>
    %136 = vector.multi_reduction <maximumf>, %135, %cst_71 [1] : vector<8x128xf32> to vector<8xf32>
    %137 = vector.shape_cast %136 : vector<8xf32> to vector<8x1xf32>
    %138 = vector.broadcast %137 : vector<8x1xf32> to vector<8x128xf32>
    %139 = arith.subf %135, %138 : vector<8x128xf32>
    %140 = math.exp %139 : vector<8x128xf32>
    %cst_72 = arith.constant dense<0.000000e+00> : vector<8xf32>
    %141 = vector.multi_reduction <add>, %140, %cst_72 [1] : vector<8x128xf32> to vector<8xf32>
    %142 = vector.shape_cast %141 : vector<8xf32> to vector<8x1xf32>
    %143 = math.log %142 : vector<8x1xf32>
    %144 = vector.broadcast %143 : vector<8x1xf32> to vector<8x128xf32>
    %145 = arith.subf %139, %144 : vector<8x128xf32>
    %c0_73 = arith.constant 0 : index
    %c0_74 = arith.constant 0 : index
    %146 = vector.load %arg20[%c0_73, %c0_74] : memref<8x128xf32, #tpu.memory_space<vmem>>, vector<8x128xf32>
    tpu.vector_store %arg20[%c0_73, %c0_74], %145 {strides = array<i32>} : memref<8x128xf32, #tpu.memory_space<vmem>>, vector<8x128xf32>,
    return
  }
  func.func @transform_0(%arg0: i32) -> (i32, i32, i32) {
    %c0_i32 = arith.constant 0 : i32
    %c0_i32_0 = arith.constant 0 : i32
    %c0_i32_1 = arith.constant 0 : i32
    %c0_i32_2 = arith.constant 0 : i32
    return %c0_i32, %c0_i32_0, %c0_i32_1 : i32, i32, i32
  }
  func.func @transform_1(%arg0: i32) -> (i32, i32, i32) {
    %c0_i32 = arith.constant 0 : i32
    %c0_i32_0 = arith.constant 0 : i32
    %c0_i32_1 = arith.constant 0 : i32
    %c0_i32_2 = arith.constant 0 : i32
    return %c0_i32, %c0_i32_0, %c0_i32_1 : i32, i32, i32
  }
  func.func @transform_2(%arg0: i32) -> (i32, i32) {
    %c0_i32 = arith.constant 0 : i32
    %c0_i32_0 = arith.constant 0 : i32
    %c0_i32_1 = arith.constant 0 : i32
    return %c0_i32, %c0_i32_0 : i32, i32
  }
  func.func @transform_3(%arg0: i32) -> (i32, i32, i32) {
    %c0_i32 = arith.constant 0 : i32
    %c0_i32_0 = arith.constant 0 : i32
    %c0_i32_1 = arith.constant 0 : i32
    %c0_i32_2 = arith.constant 0 : i32
    return %c0_i32, %c0_i32_0, %c0_i32_1 : i32, i32, i32
  }
  func.func @transform_4(%arg0: i32) -> (i32, i32) {
    %c0_i32 = arith.constant 0 : i32
    %c0_i32_0 = arith.constant 0 : i32
    %c0_i32_1 = arith.constant 0 : i32
    return %c0_i32, %c0_i32_0 : i32, i32
  }
  func.func @transform_5(%arg0: i32) -> (i32, i32) {
    %c0_i32 = arith.constant 0 : i32
    %c0_i32_0 = arith.constant 0 : i32
    %c0_i32_1 = arith.constant 0 : i32
    return %c0_i32, %c0_i32_0 : i32, i32
  }
  func.func @transform_6(%arg0: i32) -> (i32, i32) {
    %c0_i32 = arith.constant 0 : i32
    %c0_i32_0 = arith.constant 0 : i32
    %c0_i32_1 = arith.constant 0 : i32
    return %c0_i32, %c0_i32_0 : i32, i32
  }
  func.func @transform_7(%arg0: i32) -> (i32, i32) {
    %c0_i32 = arith.constant 0 : i32
    %c0_i32_0 = arith.constant 0 : i32
    %c0_i32_1 = arith.constant 0 : i32
    return %c0_i32, %c0_i32_0 : i32, i32
  }
  func.func @transform_8(%arg0: i32) -> (i32, i32) {
    %c0_i32 = arith.constant 0 : i32
    %c0_i32_0 = arith.constant 0 : i32
    %c0_i32_1 = arith.constant 0 : i32
    return %c0_i32, %c0_i32_0 : i32, i32
  }
  func.func @transform_9(%arg0: i32) -> (i32, i32) {
    %c0_i32 = arith.constant 0 : i32
    %c0_i32_0 = arith.constant 0 : i32
    %c0_i32_1 = arith.constant 0 : i32
    return %c0_i32, %c0_i32_0 : i32, i32
  }
  func.func @transform_10(%arg0: i32) -> (i32, i32) {
    %c0_i32 = arith.constant 0 : i32
    %c0_i32_0 = arith.constant 0 : i32
    %c0_i32_1 = arith.constant 0 : i32
    return %c0_i32, %c0_i32_0 : i32, i32
  }
  func.func @transform_11(%arg0: i32) -> (i32, i32) {
    %c0_i32 = arith.constant 0 : i32
    %c0_i32_0 = arith.constant 0 : i32
    %c0_i32_1 = arith.constant 0 : i32
    return %c0_i32, %c0_i32_0 : i32, i32
  }
  func.func @transform_12(%arg0: i32) -> (i32, i32) {
    %c0_i32 = arith.constant 0 : i32
    %c0_i32_0 = arith.constant 0 : i32
    %c0_i32_1 = arith.constant 0 : i32
    return %c0_i32, %c0_i32_0 : i32, i32
  }
  func.func @transform_13(%arg0: i32) -> (i32, i32) {
    %c0_i32 = arith.constant 0 : i32
    %c0_i32_0 = arith.constant 0 : i32
    %c0_i32_1 = arith.constant 0 : i32
    return %c0_i32, %c0_i32_0 : i32, i32
  }
  func.func @transform_14(%arg0: i32) -> (i32, i32) {
    %c0_i32 = arith.constant 0 : i32
    %c0_i32_0 = arith.constant 0 : i32
    %c0_i32_1 = arith.constant 0 : i32
    return %c0_i32, %c0_i32_0 : i32, i32
  }
  func.func @transform_15(%arg0: i32) -> (i32, i32) {
    %c0_i32 = arith.constant 0 : i32
    %c0_i32_0 = arith.constant 0 : i32
    %c0_i32_1 = arith.constant 0 : i32
    return %c0_i32, %c0_i32_0 : i32, i32
  }
  func.func @transform_16(%arg0: i32) -> (i32, i32) {
    %c0_i32 = arith.constant 0 : i32
    %c0_i32_0 = arith.constant 0 : i32
    %c0_i32_1 = arith.constant 0 : i32
    return %c0_i32, %c0_i32_0 : i32, i32
  }
  func.func @transform_17(%arg0: i32) -> (i32, i32) {
    %c0_i32 = arith.constant 0 : i32
    %c0_i32_0 = arith.constant 0 : i32
    %c0_i32_1 = arith.constant 0 : i32
    return %c0_i32, %c0_i32_0 : i32, i32
  }
  func.func @transform_18(%arg0: i32) -> (i32, i32) {
    %c0_i32 = arith.constant 0 : i32
    %c0_i32_0 = arith.constant 0 : i32
    %c0_i32_1 = arith.constant 0 : i32
    return %c0_i32, %c0_i32_0 : i32, i32
  }
  func.func @transform_19(%arg0: i32) -> (i32, i32) {
    %c0_i32 = arith.constant 0 : i32
    %c0_i32_0 = arith.constant 0 : i32
    %c0_i32_1 = arith.constant 0 : i32
    return %c0_i32, %c0_i32_0 : i32, i32
  }
  func.func @transform_20(%arg0: i32) -> (i32, i32, i32) {
    %c0_i32 = arith.constant 0 : i32
    %c0_i32_0 = arith.constant 0 : i32
    %c0_i32_1 = arith.constant 0 : i32
    %c0_i32_2 = arith.constant 0 : i32
    return %c0_i32, %c0_i32_0, %c0_i32_1 : i32, i32, i32
  }
  func.func @transform_21(%arg0: i32) -> (i32, i32) {
    %c0_i32 = arith.constant 0 : i32
    %c0_i32_0 = arith.constant 0 : i32
    %c0_i32_1 = arith.constant 0 : i32
    return %c0_i32, %c0_i32_0 : i32, i32
  }
}

</mosaic_0001>

<llo_original>
// kernel: decoder_forward.1
$region0: #{decoder_forward.1}
  #allocation0 [shape = 'u32[]', space=smem, size = 0x4, offset = 0x4, fixed_abs, tag = 'smem constant byte address 0x4 - core index']
  #allocation1 [shape = 'u32[144,128]{1,0:T(1,128)}', space=vmem, size = 0x12000, scoped, tag = 'internal scratch']
  %s0 = inlined_call_operand.hbm [shape: bf16[8,8,128], index: 0, kind: input, shape index: {}]
  %s1 = inlined_call_operand.hbm [shape: bf16[8,8,128], index: 1, kind: input, shape index: {}]
  %s2 = inlined_call_operand.vmem [shape: bf16[8,128], index: 2, kind: input, shape index: {}]
  %s3 = inlined_call_operand.hbm [shape: f32[2,8,128], index: 3, kind: input, shape index: {}, may-alias: {3,20}]
  %s4 = inlined_call_operand.vmem [shape: bf16[128,128], index: 4, kind: input, shape index: {}]
  %s5 = inlined_call_operand.vmem [shape: f32[1,128], index: 5, kind: input, shape index: {}]
  %s6 = inlined_call_operand.vmem [shape: f32[1,128], index: 6, kind: input, shape index: {}]
  %s7 = inlined_call_operand.hbm [shape: bf16[128,384], index: 7, kind: input, shape index: {}]
  %s8 = inlined_call_operand.hbm [shape: bf16[128,384], index: 8, kind: input, shape index: {}]
  %s9 = inlined_call_operand.hbm [shape: bf16[128,384], index: 9, kind: input, shape index: {}]
  %s10 = inlined_call_operand.vmem [shape: f32[1,384], index: 10, kind: input, shape index: {}]
  %s11 = inlined_call_operand.vmem [shape: f32[1,384], index: 11, kind: input, shape index: {}]
  %s12 = inlined_call_operand.hbm [shape: bf16[128,384], index: 12, kind: input, shape index: {}]
  %s13 = inlined_call_operand.hbm [shape: bf16[128,384], index: 13, kind: input, shape index: {}]
  %s14 = inlined_call_operand.vmem [shape: f32[1,384], index: 14, kind: input, shape index: {}]
  %s15 = inlined_call_operand.vmem [shape: f32[1,384], index: 15, kind: input, shape index: {}]
  %s16 = inlined_call_operand.hbm [shape: bf16[128,128], index: 16, kind: input, shape index: {}]
  %s17 = inlined_call_operand.hbm [shape: bf16[128,128], index: 17, kind: input, shape index: {}]
  %s18 = inlined_call_operand.vmem [shape: f32[1,128], index: 18, kind: input, shape index: {}]
  %s19 = inlined_call_operand.hbm [shape: f32[8,128], index: 19, kind: output, shape index: {0}]
  %s20 = inlined_call_operand.hbm [shape: f32[2,8,128], index: 20, kind: output, shape index: {1}, may-alias: {3,20}]
  %s21 = inlined_call_operand.hbm [shape: f32[8,8], index: 21, kind: output, shape index: {2}]
  %22 = xla_tuple %s19, %s20, %s21
  %s23 = sld [smem:[#allocation0]]
  $region142: #{decoder_forward.1} parent=0
    _
  %s25 = ssub.s32 1, %s23
  %s26 = scalar_select 0, %s25, %s23
  $region1: #{decoder_forward.1} parent=0
    #allocation2 [shape = 'u8[16384]{0}', space=vmem, size = 0x4000, scoped, tag = 'input window, operand 0, single buffered']
    #allocation3 [shape = 's32[1]{0}', space=sflag, size = 0x4, scoped, tag = 'scoped memory for decoder_forward.1']
    #allocation4 [shape = 's32[1]{0}', space=sflag, size = 0x4, scoped, tag = 'scoped memory for decoder_forward.1']
    #allocation5 [shape = 'u8[16384]{0}', space=vmem, size = 0x4000, scoped, tag = 'input window, operand 1, single buffered']
    #allocation6 [shape = 's32[1]{0}', space=sflag, size = 0x4, scoped, tag = 'scoped memory for decoder_forward.1']
    #allocation7 [shape = 'u8[8192]{0}', space=vmem, size = 0x2000, scoped, tag = 'input window, operand 3, single buffered']
    #allocation8 [shape = 'u8[98304]{0}', space=vmem, size = 0x18000, scoped, tag = 'input window, operand 7, single buffered']
    #allocation9 [shape = 's32[1]{0}', space=sflag, size = 0x4, scoped, tag = 'scoped memory for decoder_forward.1']
    #allocation10 [shape = 'u8[98304]{0}', space=vmem, size = 0x18000, scoped, tag = 'input window, operand 8, single buffered']
    #allocation11 [shape = 'u8[98304]{0}', space=vmem, size = 0x18000, scoped, tag = 'input window, operand 9, single buffered']
    #allocation12 [shape = 's32[1]{0}', space=sflag, size = 0x4, scoped, tag = 'scoped memory for decoder_forward.1']
    #allocation13 [shape = 'u8[98304]{0}', space=vmem, size = 0x18000, scoped, tag = 'input window, operand 12, single buffered']
    #allocation14 [shape = 'u8[98304]{0}', space=vmem, size = 0x18000, scoped, tag = 'input window, operand 13, single buffered']
    #allocation15 [shape = 's32[1]{0}', space=sflag, size = 0x4, scoped, tag = 'scoped memory for decoder_forward.1']
    #allocation16 [shape = 'u8[32768]{0}', space=vmem, size = 0x8000, scoped, tag = 'input window, operand 16, single buffered']
    #allocation17 [shape = 'u8[32768]{0}', space=vmem, size = 0x8000, scoped, tag = 'input window, operand 17, single buffered']
    #allocation18 [shape = 's32[1]{0}', space=sflag, size = 0x4, scoped, tag = 'scoped memory for decoder_forward.1']
    #allocation19 [shape = 'u8[4096]{0}', space=vmem, size = 0x1000, scoped, tag = 'output window, operand 0, single buffered']
    #allocation20 [shape = 'u8[8192]{0}', space=vmem, size = 0x2000, scoped, tag = 'output window, operand 1, single buffered']
    #allocation21 [shape = 's32[1]{0}', space=sflag, size = 0x4, scoped, tag = 'scoped memory for decoder_forward.1']
    #allocation22 [shape = 'u8[4096]{0}', space=vmem, size = 0x1000, scoped, tag = 'output window, operand 2, single buffered']
    %27 = vsyncpa [#allocation3], 0
    %28 = vsyncpa [#allocation6], 0
    %29 = vsyncpa [#allocation9], 0
    %30 = vsyncpa [#allocation12], 0
    %31 = vsyncpa [#allocation15], 0
    %32 = vsyncpa [#allocation18], 0
    %33 = vsyncpa [#allocation4], 0
    %34 = vsyncpa [#allocation21], 0
    // Predicated region
    $region2: #{decoder_forward.1} parent=1 // pred_check
      _
    $region3: #{decoder_forward.1} parent=1 // pred_check_branch
      %36 = sbr.rel (0) target = $region5
    $region4: #{decoder_forward.1} parent=1 // pred_region
      %s38 = ssub.s32 512, 512
      %39 = vsyncadd [#allocation3], %s38
      %s40 = sshll.u32 [#allocation2], 4
      %s41 = int_to_ptr.vmem [resolvable:$true] %s40
      %46 = dma.hbm_to_vmem [thread:$0]  %s0, 512, %s41, [#allocation3], 64, 64, 4
    $region5: #{decoder_forward.1} parent=1 // pred_fallthru
      _
    // Predicated region
    $region6: #{decoder_forward.1} parent=1 // pred_check
      _
    $region7: #{decoder_forward.1} parent=1 // pred_check_branch
      %48 = sbr.rel (0) target = $region9
    $region8: #{decoder_forward.1} parent=1 // pred_region
      %s50 = ssub.s32 512, 512
      %51 = vsyncadd [#allocation6], %s50
      %s52 = sshll.u32 [#allocation5], 4
      %s53 = int_to_ptr.vmem [resolvable:$true] %s52
      %58 = dma.hbm_to_vmem [thread:$0]  %s1, 512, %s53, [#allocation6], 64, 64, 4
    $region9: #{decoder_forward.1} parent=1 // pred_fallthru
      _
    // Predicated region
    $region10: #{decoder_forward.1} parent=1 // pred_check
      _
    $region11: #{decoder_forward.1} parent=1 // pred_check_branch
      %60 = sbr.rel (0) target = $region13
    $region12: #{decoder_forward.1} parent=1 // pred_region
      _
    $region13: #{decoder_forward.1} parent=1 // pred_fallthru
      _
    // Predicated region
    $region14: #{decoder_forward.1} parent=1 // pred_check
      _
    $region15: #{decoder_forward.1} parent=1 // pred_check_branch
      %62 = sbr.rel (0) target = $region17
    $region16: #{decoder_forward.1} parent=1 // pred_region
      %s64 = ssub.s32 256, 256
      %65 = vsyncadd [#allocation6], %s64
      %s66 = sshll.u32 [#allocation7], 4
      %s67 = int_to_ptr.vmem [resolvable:$true] %s66
      %72 = dma.hbm_to_vmem [thread:$0]  %s3, 256, %s67, [#allocation6], 128, 128, 8
    $region17: #{decoder_forward.1} parent=1 // pred_fallthru
      _
    // Predicated region
    $region18: #{decoder_forward.1} parent=1 // pred_check
      _
    $region19: #{decoder_forward.1} parent=1 // pred_check_branch
      %74 = sbr.rel (0) target = $region21
    $region20: #{decoder_forward.1} parent=1 // pred_region
      _
    $region21: #{decoder_forward.1} parent=1 // pred_fallthru
      _
    // Predicated region
    $region22: #{decoder_forward.1} parent=1 // pred_check
      _
    $region23: #{decoder_forward.1} parent=1 // pred_check_branch
      %76 = sbr.rel (0) target = $region25
    $region24: #{decoder_forward.1} parent=1 // pred_region
      _
    $region25: #{decoder_forward.1} parent=1 // pred_fallthru
      _
    // Predicated region
    $region26: #{decoder_forward.1} parent=1 // pred_check
      _
    $region27: #{decoder_forward.1} parent=1 // pred_check_branch
      %78 = sbr.rel (0) target = $region29
    $region28: #{decoder_forward.1} parent=1 // pred_region
      _
    $region29: #{decoder_forward.1} parent=1 // pred_fallthru
      _
    // Predicated region
    $region30: #{decoder_forward.1} parent=1 // pred_check
      _
    $region31: #{decoder_forward.1} parent=1 // pred_check_branch
      %80 = sbr.rel (0) target = $region33
    $region32: #{decoder_forward.1} parent=1 // pred_region
      %s82 = ssub.s32 3072, 3072
      %83 = vsyncadd [#allocation9], %s82
      %s84 = sshll.u32 [#allocation8], 4
      %s85 = int_to_ptr.vmem [resolvable:$true] %s84
      %90 = dma.hbm_to_vmem [thread:$0]  %s7, 3072, %s85, [#allocation9], 192, 192, 12
    $region33: #{decoder_forward.1} parent=1 // pred_fallthru
      _
    // Predicated region
    $region34: #{decoder_forward.1} parent=1 // pred_check
      _
    $region35: #{decoder_forward.1} parent=1 // pred_check_branch
      %92 = sbr.rel (0) target = $region37
    $region36: #{decoder_forward.1} parent=1 // pred_region
      %s94 = ssub.s32 3072, 3072
      %95 = vsyncadd [#allocation9], %s94
      %s96 = sshll.u32 [#allocation10], 4
      %s97 = int_to_ptr.vmem [resolvable:$true] %s96
      %102 = dma.hbm_to_vmem [thread:$0]  %s8, 3072, %s97, [#allocation9], 192, 192, 12
    $region37: #{decoder_forward.1} parent=1 // pred_fallthru
      _
    // Predicated region
    $region38: #{decoder_forward.1} parent=1 // pred_check
      _
    $region39: #{decoder_forward.1} parent=1 // pred_check_branch
      %104 = sbr.rel (0) target = $region41
    $region40: #{decoder_forward.1} parent=1 // pred_region
      %s106 = ssub.s32 3072, 3072
      %107 = vsyncadd [#allocation12], %s106
      %s108 = sshll.u32 [#allocation11], 4
      %s109 = int_to_ptr.vmem [resolvable:$true] %s108
      %114 = dma.hbm_to_vmem [thread:$0]  %s9, 3072, %s109, [#allocation12], 192, 192, 12
    $region41: #{decoder_forward.1} parent=1 // pred_fallthru
      _
    // Predicated region
    $region42: #{decoder_forward.1} parent=1 // pred_check
      _
    $region43: #{decoder_forward.1} parent=1 // pred_check_branch
      %116 = sbr.rel (0) target = $region45
    $region44: #{decoder_forward.1} parent=1 // pred_region
      _
    $region45: #{decoder_forward.1} parent=1 // pred_fallthru
      _
    // Predicated region
    $region46: #{decoder_forward.1} parent=1 // pred_check
      _
    $region47: #{decoder_forward.1} parent=1 // pred_check_branch
      %118 = sbr.rel (0) target = $region49
    $region48: #{decoder_forward.1} parent=1 // pred_region
      _
    $region49: #{decoder_forward.1} parent=1 // pred_fallthru
      _
    // Predicated region
    $region50: #{decoder_forward.1} parent=1 // pred_check
      _
    $region51: #{decoder_forward.1} parent=1 // pred_check_branch
      %120 = sbr.rel (0) target = $region53
    $region52: #{decoder_forward.1} parent=1 // pred_region
      %s122 = ssub.s32 3072, 3072
      %123 = vsyncadd [#allocation12], %s122
      %s124 = sshll.u32 [#allocation13], 4
      %s125 = int_to_ptr.vmem [resolvable:$true] %s124
      %130 = dma.hbm_to_vmem [thread:$0]  %s12, 3072, %s125, [#allocation12], 192, 192, 12
    $region53: #{decoder_forward.1} parent=1 // pred_fallthru
      _
    // Predicated region
    $region54: #{decoder_forward.1} parent=1 // pred_check
      _
    $region55: #{decoder_forward.1} parent=1 // pred_check_branch
      %132 = sbr.rel (0) target = $region57
    $region56: #{decoder_forward.1} parent=1 // pred_region
      %s134 = ssub.s32 3072, 3072
      %135 = vsyncadd [#allocation15], %s134
      %s136 = sshll.u32 [#allocation14], 4
      %s137 = int_to_ptr.vmem [resolvable:$true] %s136
      %142 = dma.hbm_to_vmem [thread:$0]  %s13, 3072, %s137, [#allocation15], 192, 192, 12
    $region57: #{decoder_forward.1} parent=1 // pred_fallthru
      _
    // Predicated region
    $region58: #{decoder_forward.1} parent=1 // pred_check
      _
    $region59: #{decoder_forward.1} parent=1 // pred_check_branch
      %144 = sbr.rel (0) target = $region61
    $region60: #{decoder_forward.1} parent=1 // pred_region
      _
    $region61: #{decoder_forward.1} parent=1 // pred_fallthru
      _
    // Predicated region
    $region62: #{decoder_forward.1} parent=1 // pred_check
      _
    $region63: #{decoder_forward.1} parent=1 // pred_check_branch
      %146 = sbr.rel (0) target = $region65
    $region64: #{decoder_forward.1} parent=1 // pred_region
      _
    $region65: #{decoder_forward.1} parent=1 // pred_fallthru
      _
    // Predicated region
    $region66: #{decoder_forward.1} parent=1 // pred_check
      _
    $region67: #{decoder_forward.1} parent=1 // pred_check_branch
      %148 = sbr.rel (0) target = $region69
    $region68: #{decoder_forward.1} parent=1 // pred_region
      %s150 = ssub.s32 1024, 1024
      %151 = vsyncadd [#allocation15], %s150
      %s152 = sshll.u32 [#allocation16], 4
      %s153 = int_to_ptr.vmem [resolvable:$true] %s152
      %158 = dma.hbm_to_vmem [thread:$0]  %s16, 1024, %s153, [#allocation15], 64, 64, 4
    $region69: #{decoder_forward.1} parent=1 // pred_fallthru
      _
    // Predicated region
    $region70: #{decoder_forward.1} parent=1 // pred_check
      _
    $region71: #{decoder_forward.1} parent=1 // pred_check_branch
      %160 = sbr.rel (0) target = $region73
    $region72: #{decoder_forward.1} parent=1 // pred_region
      %s162 = ssub.s32 1024, 1024
      %163 = vsyncadd [#allocation18], %s162
      %s164 = sshll.u32 [#allocation17], 4
      %s165 = int_to_ptr.vmem [resolvable:$true] %s164
      %170 = dma.hbm_to_vmem [thread:$0]  %s17, 1024, %s165, [#allocation18], 64, 64, 4
    $region73: #{decoder_forward.1} parent=1 // pred_fallthru
      _
    // Predicated region
    $region74: #{decoder_forward.1} parent=1 // pred_check
      _
    $region75: #{decoder_forward.1} parent=1 // pred_check_branch
      %172 = sbr.rel (0) target = $region77
    $region76: #{decoder_forward.1} parent=1 // pred_region
      _
    $region77: #{decoder_forward.1} parent=1 // pred_fallthru
      _
    // Predicated region
    $region78: #{decoder_forward.1} parent=1 // pred_check
      _
    $region79: #{decoder_forward.1} parent=1 // pred_check_branch
      %174 = sbr.rel (0) target = $region81
    $region80: #{decoder_forward.1} parent=1 // pred_region
      %175 = dma.done [#allocation3], 512
    $region81: #{decoder_forward.1} parent=1 // pred_fallthru
      _
    // Predicated region
    $region82: #{decoder_forward.1} parent=1 // pred_check
      _
    $region83: #{decoder_forward.1} parent=1 // pred_check_branch
      %177 = sbr.rel (0) target = $region85
    $region84: #{decoder_forward.1} parent=1 // pred_region
      %178 = dma.done [#allocation6], 512
    $region85: #{decoder_forward.1} parent=1 // pred_fallthru
      _
    // Predicated region
    $region86: #{decoder_forward.1} parent=1 // pred_check
      _
    $region87: #{decoder_forward.1} parent=1 // pred_check_branch
      %180 = sbr.rel (0) target = $region89
    $region88: #{decoder_forward.1} parent=1 // pred_region
      %181 = dma.done [#allocation6], 256
    $region89: #{decoder_forward.1} parent=1 // pred_fallthru
      _
    // Predicated region
    $region90: #{decoder_forward.1} parent=1 // pred_check
      _
    $region91: #{decoder_forward.1} parent=1 // pred_check_branch
      %183 = sbr.rel (0) target = $region93
    $region92: #{decoder_forward.1} parent=1 // pred_region
      %184 = dma.done [#allocation9], 3072
    $region93: #{decoder_forward.1} parent=1 // pred_fallthru
      _
    // Predicated region
    $region94: #{decoder_forward.1} parent=1 // pred_check
      _
    $region95: #{decoder_forward.1} parent=1 // pred_check_branch
      %186 = sbr.rel (0) target = $region97
    $region96: #{decoder_forward.1} parent=1 // pred_region
      %187 = dma.done [#allocation9], 3072
    $region97: #{decoder_forward.1} parent=1 // pred_fallthru
      _
    // Predicated region
    $region98: #{decoder_forward.1} parent=1 // pred_check
      _
    $region99: #{decoder_forward.1} parent=1 // pred_check_branch
      %189 = sbr.rel (0) target = $region101
    $region100: #{decoder_forward.1} parent=1 // pred_region
      %190 = dma.done [#allocation12], 3072
    $region101: #{decoder_forward.1} parent=1 // pred_fallthru
      _
    // Predicated region
    $region102: #{decoder_forward.1} parent=1 // pred_check
      _
    $region103: #{decoder_forward.1} parent=1 // pred_check_branch
      %192 = sbr.rel (0) target = $region105
    $region104: #{decoder_forward.1} parent=1 // pred_region
      %193 = dma.done [#allocation12], 3072
    $region105: #{decoder_forward.1} parent=1 // pred_fallthru
      _
    // Predicated region
    $region106: #{decoder_forward.1} parent=1 // pred_check
      _
    $region107: #{decoder_forward.1} parent=1 // pred_check_branch
      %195 = sbr.rel (0) target = $region109
    $region108: #{decoder_forward.1} parent=1 // pred_region
      %196 = dma.done [#allocation15], 3072
    $region109: #{decoder_forward.1} parent=1 // pred_fallthru
      _
    // Predicated region
    $region110: #{decoder_forward.1} parent=1 // pred_check
      _
    $region111: #{decoder_forward.1} parent=1 // pred_check_branch
      %198 = sbr.rel (0) target = $region113
    $region112: #{decoder_forward.1} parent=1 // pred_region
      %199 = dma.done [#allocation15], 1024
    $region113: #{decoder_forward.1} parent=1 // pred_fallthru
      _
    // Predicated region
    $region114: #{decoder_forward.1} parent=1 // pred_check
      _
    $region115: #{decoder_forward.1} parent=1 // pred_check_branch
      %201 = sbr.rel (0) target = $region117
    $region116: #{decoder_forward.1} parent=1 // pred_region
      %202 = dma.done [#allocation18], 1024
    $region117: #{decoder_forward.1} parent=1 // pred_fallthru
      _
    %v204 = vld [vmem:[#allocation2] sm:$0xf]
    %v205 = vld [vmem:[#allocation2 + $0x4] sm:$0xf]
    %v206 = vld [vmem:[#allocation2 + $0x8] sm:$0xf]
    %v207 = vld [vmem:[#allocation2 + $0xc] sm:$0xf]
    %v208 = vld [vmem:[#allocation2 + $0x10] sm:$0xf]
    %v209 = vld [vmem:[#allocation2 + $0x14] sm:$0xf]
    %v210 = vld [vmem:[#allocation2 + $0x18] sm:$0xf]
    %v211 = vld [vmem:[#allocation2 + $0x1c] sm:$0xf]
    %s212 = scalar_lea.vmem [#allocation7], 8
    %v213 = vld [vmem:[%s212] sm:$0xff]
    %v214 = vpack.c.bf16 %v213, %v213
    %v215 = vld [vmem:[%s4] sm:$0xf]
    %v216 = vld [vmem:[%s4 + $0x4] sm:$0xf]
    %v217 = vld [vmem:[%s4 + $0x8] sm:$0xf]
    %v218 = vld [vmem:[%s4 + $0xc] sm:$0xf]
    %v219 = vld [vmem:[%s4 + $0x10] sm:$0xf]
    %v220 = vld [vmem:[%s4 + $0x14] sm:$0xf]
    %v221 = vld [vmem:[%s4 + $0x18] sm:$0xf]
    %v222 = vld [vmem:[%s4 + $0x1c] sm:$0xf]
    %v223 = vld [vmem:[%s4 + $0x20] sm:$0xf]
    %v224 = vld [vmem:[%s4 + $0x24] sm:$0xf]
    %v225 = vld [vmem:[%s4 + $0x28] sm:$0xf]
    %v226 = vld [vmem:[%s4 + $0x2c] sm:$0xf]
    %v227 = vld [vmem:[%s4 + $0x30] sm:$0xf]
    %v228 = vld [vmem:[%s4 + $0x34] sm:$0xf]
    %v229 = vld [vmem:[%s4 + $0x38] sm:$0xf]
    %v230 = vld [vmem:[%s4 + $0x3c] sm:$0xf]
    %v247 = vunpack.c.l.b16 %v215
    %v248 = vunpack.c.l.b16 %v216
    %v249 = vunpack.c.l.b16 %v217
    %v250 = vunpack.c.l.b16 %v218
    %v251 = vunpack.c.l.b16 %v219
    %v252 = vunpack.c.l.b16 %v220
    %v253 = vunpack.c.l.b16 %v221
    %v254 = vunpack.c.l.b16 %v222
    %v255 = vunpack.c.l.b16 %v223
    %v256 = vunpack.c.l.b16 %v224
    %v257 = vunpack.c.l.b16 %v225
    %v258 = vunpack.c.l.b16 %v226
    %v259 = vunpack.c.l.b16 %v227
    %v260 = vunpack.c.l.b16 %v228
    %v261 = vunpack.c.l.b16 %v229
    %v262 = vunpack.c.l.b16 %v230
    %v263 = vpack.c.b16 %v248, %v247
    %v264 = vpack.c.b16 %v250, %v249
    %v265 = vpack.c.b16 %v252, %v251
    %v266 = vpack.c.b16 %v254, %v253
    %v267 = vpack.c.b16 %v256, %v255
    %v268 = vpack.c.b16 %v258, %v257
    %v269 = vpack.c.b16 %v260, %v259
    %v270 = vpack.c.b16 %v262, %v261
    %279 = vmatprep.subr.bf16.mxu0 0
    %280 = vmatpush1.bf16.msra.mxu0 %v263
    %281 = vmatprep.subr.bf16.mxu0 0
    %282 = vmatpush1.bf16.msra.mxu0 %v264
    %283 = vmatprep.subr.bf16.mxu0 0
    %284 = vmatpush1.bf16.msra.mxu0 %v265
    %285 = vmatprep.subr.bf16.mxu0 0
    %286 = vmatpush1.bf16.msra.mxu0 %v266
    %287 = vmatprep.subr.bf16.mxu0 0
    %288 = vmatpush1.bf16.msra.mxu0 %v267
    %289 = vmatprep.subr.bf16.mxu0 0
    %290 = vmatpush1.bf16.msra.mxu0 %v268
    %291 = vmatprep.subr.bf16.mxu0 0
    %292 = vmatpush1.bf16.msra.mxu0 %v269
    %293 = vmatprep.subr.bf16.mxu0 0
    %294 = vmatpush1.bf16.msra.mxu0 %v270
    %295 = vmatprep.subr.bf16.mxu0 0
    %296 = vmatpush1.bf16.msra.mxu0 0
    %297 = vmatprep.subr.bf16.mxu0 0
    %298 = vmatpush1.bf16.msra.mxu0 0
    %299 = vmatprep.subr.bf16.mxu0 0
    %300 = vmatpush1.bf16.msra.mxu0 0
    %301 = vmatprep.subr.bf16.mxu0 0
    %302 = vmatpush1.bf16.msra.mxu0 0
    %303 = vmatprep.subr.bf16.mxu0 0
    %304 = vmatpush1.bf16.msra.mxu0 0
    %305 = vmatprep.subr.bf16.mxu0 0
    %306 = vmatpush1.bf16.msra.mxu0 0
    %307 = vmatprep.subr.bf16.mxu0 0
    %308 = vmatpush1.bf16.msra.mxu0 0
    %309 = vmatprep.subr.bf16.mxu0 0
    %310 = vmatpush1.bf16.msra.mxu0 0
    %311 = vmatprep.mubr.bf16.mxu0 0
    %312 = vmatmul.mubr.bf16.gmra.mrb[0].mxu0 %v214
    %v313 = vpop.f32.mrb[0].mxu0
    %v314 = vadd.f32 0.0, %v313
    %v315 = vpop.f32.mrb[0].mxu0
    %v316 = vpop.f32.mrb[0].mxu0
    %v317 = vpop.f32.mrb[0].mxu0
    %318 = vdwg.mxu0
    %v319 = vld [vmem:[#allocation5] sm:$0xf]
    %v320 = vld [vmem:[#allocation5 + $0x4] sm:$0xf]
    %v321 = vld [vmem:[#allocation5 + $0x8] sm:$0xf]
    %v322 = vld [vmem:[#allocation5 + $0xc] sm:$0xf]
    %v323 = vld [vmem:[#allocation5 + $0x10] sm:$0xf]
    %v324 = vld [vmem:[#allocation5 + $0x14] sm:$0xf]
    %v325 = vld [vmem:[#allocation5 + $0x18] sm:$0xf]
    %v326 = vld [vmem:[#allocation5 + $0x1c] sm:$0xf]
    %v327 = vunpack.c.l.bf16 %v319
    %v328 = vunpack.c.l.bf16 %v320
    %v329 = vunpack.c.l.bf16 %v321
    %v330 = vunpack.c.l.bf16 %v322
    %v331 = vunpack.c.l.bf16 %v323
    %v332 = vunpack.c.l.bf16 %v324
    %v333 = vunpack.c.l.bf16 %v325
    %v334 = vunpack.c.l.bf16 %v326
    %v336 = vcombine.high %v314, %v314
    %v338 = vunpack.c.l.s4 1966171168
    %v339 = vunpack.c.0.s8 %v338
    %v340 = vlaneseq
    %v341 = vshrl.u32 %v340, 7
    %v342 = vsub.s32 %v339, %v341
    %v343 = vrot.slane %v314, %v342
    %v345 = vunpack.c.l.s4 1966171168
    %v346 = vunpack.c.0.s8 %v345
    %v347 = vlaneseq
    %v348 = vshrl.u32 %v347, 7
    %v349 = vsub.s32 %v346, %v348
    %v350 = vrot.slane %v336, %v349
    %v351 = vcombine.high %v343, %v343
    %v352 = vcombine.high %v350, %v350
    %v354 = vunpack.c.l.s4 1966171168
    %v355 = vunpack.c.0.s8 %v354
    %v356 = vlaneseq
    %v357 = vshrl.u32 %v356, 7
    %v358 = vsub.s32 %v355, %v357
    %v359 = vrot.slane %v343, %v358
    %v361 = vunpack.c.l.s4 1966171168
    %v362 = vunpack.c.0.s8 %v361
    %v363 = vlaneseq
    %v364 = vshrl.u32 %v363, 7
    %v365 = vsub.s32 %v362, %v364
    %v366 = vrot.slane %v350, %v365
    %v368 = vunpack.c.l.s4 1966171168
    %v369 = vunpack.c.0.s8 %v368
    %v370 = vlaneseq
    %v371 = vshrl.u32 %v370, 7
    %v372 = vsub.s32 %v369, %v371
    %v373 = vrot.slane %v351, %v372
    %v375 = vunpack.c.l.s4 1966171168
    %v376 = vunpack.c.0.s8 %v375
    %v377 = vlaneseq
    %v378 = vshrl.u32 %v377, 7
    %v379 = vsub.s32 %v376, %v378
    %v380 = vrot.slane %v352, %v379
    %v381 = vcombine.high %v359, %v359
    %v382 = vcombine.high %v366, %v366
    %v383 = vcombine.high %v373, %v373
    %v384 = vcombine.high %v380, %v380
    %v385 = vlaneseq
    %v386 = vshrl.u32 %v385, 7
    %v387 = vsub.s32 0, %v386
    %v388 = vrot.slane %v359, %v387
    %v389 = vlaneseq
    %v390 = vshrl.u32 %v389, 7
    %v391 = vsub.s32 0, %v390
    %v392 = vrot.slane %v373, %v391
    %v393 = vlaneseq
    %v394 = vshrl.u32 %v393, 7
    %v395 = vsub.s32 0, %v394
    %v396 = vrot.slane %v381, %v395
    %v397 = vlaneseq
    %v398 = vshrl.u32 %v397, 7
    %v399 = vsub.s32 0, %v398
    %v400 = vrot.slane %v383, %v399
    %v401 = vlaneseq
    %v402 = vshrl.u32 %v401, 7
    %v403 = vsub.s32 0, %v402
    %v404 = vrot.slane %v366, %v403
    %v405 = vlaneseq
    %v406 = vshrl.u32 %v405, 7
    %v407 = vsub.s32 0, %v406
    %v408 = vrot.slane %v380, %v407
    %v409 = vlaneseq
    %v410 = vshrl.u32 %v409, 7
    %v411 = vsub.s32 0, %v410
    %v412 = vrot.slane %v382, %v411
    %v413 = vlaneseq
    %v414 = vshrl.u32 %v413, 7
    %v415 = vsub.s32 0, %v414
    %v416 = vrot.slane %v384, %v415
    %v425 = vadd.f32 %v327, %v388
    %v426 = vadd.f32 %v328, %v392
    %v427 = vadd.f32 %v329, %v396
    %v428 = vadd.f32 %v330, %v400
    %v429 = vadd.f32 %v331, %v404
    %v430 = vadd.f32 %v332, %v408
    %v431 = vadd.f32 %v333, %v412
    %v432 = vadd.f32 %v334, %v416
    %v433 = vld [vmem:[%s5] sm:$0x1]
    %v435 = vlaneseq
    %v436 = vshrl.u32 %v435, 7
    %v437 = vsub.s32 0, %v436
    %v438 = vrot.slane %v433, %v437
    %v440 = vadd.f32 %v425, %v438
    %v441 = vadd.f32 %v426, %v438
    %v442 = vadd.f32 %v427, %v438
    %v443 = vadd.f32 %v428, %v438
    %v444 = vadd.f32 %v429, %v438
    %v445 = vadd.f32 %v430, %v438
    %v446 = vadd.f32 %v431, %v438
    %v447 = vadd.f32 %v432, %v438
    %v448 = vmax.f32 %v440, 0.0
    %v449 = vmax.f32 %v441, 0.0
    %v450 = vmax.f32 %v442, 0.0
    %v451 = vmax.f32 %v443, 0.0
    %v452 = vmax.f32 %v444, 0.0
    %v453 = vmax.f32 %v445, 0.0
    %v454 = vmax.f32 %v446, 0.0
    %v455 = vmax.f32 %v447, 0.0
    %v456 = vld [vmem:[%s6] sm:$0x1]
    %v458 = vlaneseq
    %v459 = vshrl.u32 %v458, 7
    %v460 = vsub.s32 0, %v459
    %v461 = vrot.slane %v456, %v460
    %v463 = vmul.f32 %v448, %v461
    %v464 = vmul.f32 %v449, %v461
    %v465 = vmul.f32 %v450, %v461
    %v466 = vmul.f32 %v451, %v461
    %v467 = vmul.f32 %v452, %v461
    %v468 = vmul.f32 %v453, %v461
    %v469 = vmul.f32 %v454, %v461
    %v470 = vmul.f32 %v455, %v461
    %471 = vadd.xlane.f32.xlu0 %v463
    %v472 = vpop.xlane.xlu0 %471
    %473 = vadd.xlane.f32.xlu0 %v464
    %v474 = vpop.xlane.xlu0 %473
    %475 = vadd.xlane.f32.xlu0 %v465
    %v476 = vpop.xlane.xlu0 %475
    %477 = vadd.xlane.f32.xlu0 %v466
    %v478 = vpop.xlane.xlu0 %477
    %479 = vadd.xlane.f32.xlu0 %v467
    %v480 = vpop.xlane.xlu0 %479
    %481 = vadd.xlane.f32.xlu0 %v468
    %v482 = vpop.xlane.xlu0 %481
    %483 = vadd.xlane.f32.xlu0 %v469
    %v484 = vpop.xlane.xlu0 %483
    %485 = vadd.xlane.f32.xlu0 %v470
    %v486 = vpop.xlane.xlu0 %485
    %v495 = vlaneseq
    %v496 = vand.u32 %v495, 127
    %v497 = vlaneseq
    %v498 = vshrl.u32 %v497, 7
    %v499 = vsub.s32 %v496, %v498
    %v500 = vrot.slane %v472, %v499
    %v501 = vlaneseq
    %v502 = vshrl.u32 %v501, 7
    %v503 = vsub.s32 %v496, %v502
    %v504 = vrot.slane %v474, %v503
    %v505 = vlaneseq
    %v506 = vshrl.u32 %v505, 7
    %v507 = vsub.s32 %v496, %v506
    %v508 = vrot.slane %v476, %v507
    %v509 = vlaneseq
    %v510 = vshrl.u32 %v509, 7
    %v511 = vsub.s32 %v496, %v510
    %v512 = vrot.slane %v478, %v511
    %v513 = vlaneseq
    %v514 = vshrl.u32 %v513, 7
    %v515 = vsub.s32 %v496, %v514
    %v516 = vrot.slane %v480, %v515
    %v517 = vlaneseq
    %v518 = vshrl.u32 %v517, 7
    %v519 = vsub.s32 %v496, %v518
    %v520 = vrot.slane %v482, %v519
    %v521 = vlaneseq
    %v522 = vshrl.u32 %v521, 7
    %v523 = vsub.s32 %v496, %v522
    %v524 = vrot.slane %v484, %v523
    %v525 = vlaneseq
    %v526 = vshrl.u32 %v525, 7
    %v527 = vsub.s32 %v496, %v526
    %v528 = vrot.slane %v486, %v527
    %vm529 = vcmask 1041409
    %v530 = vsel %vm529, %v504, %v500
    %vm531 = vcmask 1042434
    %v532 = vsel %vm531, %v508, %v530
    %vm533 = vcmask 1043459
    %v534 = vsel %vm533, %v512, %v532
    %vm535 = vcmask 1044484
    %v536 = vsel %vm535, %v516, %v534
    %vm537 = vcmask 1045509
    %v538 = vsel %vm537, %v520, %v536
    %vm539 = vcmask 1046534
    %v540 = vsel %vm539, %v524, %v538
    %vm541 = vcmask 1047559
    %v542 = vsel %vm541, %v528, %v540
    %vm544 = vcmask 64512
    %v545 = vsel %vm544, %v542, -inf
    %546 = vmax.xlane.f32.xlu0 %v545
    %v547 = vpop.xlane.xlu0 %546
    %v549 = vlaneseq
    %v550 = vshrl.u32 %v549, 7
    %v551 = vsub.s32 0, %v550
    %v552 = vrot.slane %v547, %v551
    %v553 = vlaneseq
    %v554 = vshrl.u32 %v553, 7
    %v555 = vsub.s32 1, %v554
    %v556 = vrot.slane %v547, %v555
    %v557 = vlaneseq
    %v558 = vshrl.u32 %v557, 7
    %v559 = vsub.s32 2, %v558
    %v560 = vrot.slane %v547, %v559
    %v561 = vlaneseq
    %v562 = vshrl.u32 %v561, 7
    %v563 = vsub.s32 3, %v562
    %v564 = vrot.slane %v547, %v563
    %v565 = vlaneseq
    %v566 = vshrl.u32 %v565, 7
    %v567 = vsub.s32 4, %v566
    %v568 = vrot.slane %v547, %v567
    %v569 = vlaneseq
    %v570 = vshrl.u32 %v569, 7
    %v571 = vsub.s32 5, %v570
    %v572 = vrot.slane %v547, %v571
    %v573 = vlaneseq
    %v574 = vshrl.u32 %v573, 7
    %v575 = vsub.s32 6, %v574
    %v576 = vrot.slane %v547, %v575
    %v577 = vlaneseq
    %v578 = vshrl.u32 %v577, 7
    %v579 = vsub.s32 7, %v578
    %v580 = vrot.slane %v547, %v579
    %v589 = vsub.f32 %v472, %v552
    %v590 = vsub.f32 %v474, %v556
    %v591 = vsub.f32 %v476, %v560
    %v592 = vsub.f32 %v478, %v564
    %v593 = vsub.f32 %v480, %v568
    %v594 = vsub.f32 %v482, %v572
    %v595 = vsub.f32 %v484, %v576
    %v596 = vsub.f32 %v486, %v580
    %v597 = vmul.f32 %v589, 1.442695
    %v598 = vpow.pop %v597
    %v599 = vmul.f32 %v590, 1.442695
    %v600 = vpow.pop %v599
    %v601 = vmul.f32 %v591, 1.442695
    %v602 = vpow.pop %v601
    %v603 = vmul.f32 %v592, 1.442695
    %v604 = vpow.pop %v603
    %v605 = vmul.f32 %v593, 1.442695
    %v606 = vpow.pop %v605
    %v607 = vmul.f32 %v594, 1.442695
    %v608 = vpow.pop %v607
    %v609 = vmul.f32 %v595, 1.442695
    %v610 = vpow.pop %v609
    %v611 = vmul.f32 %v596, 1.442695
    %v612 = vpow.pop %v611
    %621 = vset.pattern.permute.xlu0 0
    %622 = vperm.xlu0 %621, %v598
    %v623 = vpop.permute.xlu0 %622
    %624 = vset.pattern.permute.xlu0 0
    %625 = vperm.xlu0 %624, %v600
    %v626 = vpop.permute.xlu0 %625
    %627 = vset.pattern.permute.xlu0 0
    %628 = vperm.xlu0 %627, %v602
    %v629 = vpop.permute.xlu0 %628
    %630 = vset.pattern.permute.xlu0 0
    %631 = vperm.xlu0 %630, %v604
    %v632 = vpop.permute.xlu0 %631
    %633 = vset.pattern.permute.xlu0 0
    %634 = vperm.xlu0 %633, %v606
    %v635 = vpop.permute.xlu0 %634
    %636 = vset.pattern.permute.xlu0 0
    %637 = vperm.xlu0 %636, %v608
    %v638 = vpop.permute.xlu0 %637
    %639 = vset.pattern.permute.xlu0 0
    %640 = vperm.xlu0 %639, %v610
    %v641 = vpop.permute.xlu0 %640
    %642 = vset.pattern.permute.xlu0 0
    %643 = vperm.xlu0 %642, %v612
    %v644 = vpop.permute.xlu0 %643
    %v645 = vlaneseq
    %v646 = vshrl.u32 %v645, 7
    %v647 = vsub.s32 %v496, %v646
    %v648 = vrot.slane %v623, %v647
    %v649 = vlaneseq
    %v650 = vshrl.u32 %v649, 7
    %v651 = vsub.s32 %v496, %v650
    %v652 = vrot.slane %v626, %v651
    %v653 = vlaneseq
    %v654 = vshrl.u32 %v653, 7
    %v655 = vsub.s32 %v496, %v654
    %v656 = vrot.slane %v629, %v655
    %v657 = vlaneseq
    %v658 = vshrl.u32 %v657, 7
    %v659 = vsub.s32 %v496, %v658
    %v660 = vrot.slane %v632, %v659
    %v661 = vlaneseq
    %v662 = vshrl.u32 %v661, 7
    %v663 = vsub.s32 %v496, %v662
    %v664 = vrot.slane %v635, %v663
    %v665 = vlaneseq
    %v666 = vshrl.u32 %v665, 7
    %v667 = vsub.s32 %v496, %v666
    %v668 = vrot.slane %v638, %v667
    %v669 = vlaneseq
    %v670 = vshrl.u32 %v669, 7
    %v671 = vsub.s32 %v496, %v670
    %v672 = vrot.slane %v641, %v671
    %v673 = vlaneseq
    %v674 = vshrl.u32 %v673, 7
    %v675 = vsub.s32 %v496, %v674
    %v676 = vrot.slane %v644, %v675
    %v677 = vsel %vm529, %v652, %v648
    %v678 = vsel %vm531, %v656, %v677
    %v679 = vsel %vm533, %v660, %v678
    %v680 = vsel %vm535, %v664, %v679
    %v681 = vsel %vm537, %v668, %v680
    %v682 = vsel %vm539, %v672, %v681
    %v683 = vsel %vm541, %v676, %v682
    %v685 = vsel %vm544, %v683, 0.0
    %686 = vadd.xlane.f32.xlu0 %v685
    %v687 = vpop.xlane.xlu0 %686
    %v689 = vlaneseq
    %v690 = vshrl.u32 %v689, 7
    %v691 = vsub.s32 0, %v690
    %v692 = vrot.slane %v687, %v691
    %v693 = vlaneseq
    %v694 = vshrl.u32 %v693, 7
    %v695 = vsub.s32 1, %v694
    %v696 = vrot.slane %v687, %v695
    %v697 = vlaneseq
    %v698 = vshrl.u32 %v697, 7
    %v699 = vsub.s32 2, %v698
    %v700 = vrot.slane %v687, %v699
    %v701 = vlaneseq
    %v702 = vshrl.u32 %v701, 7
    %v703 = vsub.s32 3, %v702
    %v704 = vrot.slane %v687, %v703
    %v705 = vlaneseq
    %v706 = vshrl.u32 %v705, 7
    %v707 = vsub.s32 4, %v706
    %v708 = vrot.slane %v687, %v707
    %v709 = vlaneseq
    %v710 = vshrl.u32 %v709, 7
    %v711 = vsub.s32 5, %v710
    %v712 = vrot.slane %v687, %v711
    %v713 = vlaneseq
    %v714 = vshrl.u32 %v713, 7
    %v715 = vsub.s32 6, %v714
    %v716 = vrot.slane %v687, %v715
    %v717 = vlaneseq
    %v718 = vshrl.u32 %v717, 7
    %v719 = vsub.s32 7, %v718
    %v720 = vrot.slane %v687, %v719
    %v729 = vrcp.pop %v692
    %v730 = vmul.f32 %v598, %v729
    %v731 = vrcp.pop %v696
    %v732 = vmul.f32 %v600, %v731
    %v733 = vrcp.pop %v700
    %v734 = vmul.f32 %v602, %v733
    %v735 = vrcp.pop %v704
    %v736 = vmul.f32 %v604, %v735
    %v737 = vrcp.pop %v708
    %v738 = vmul.f32 %v606, %v737
    %v739 = vrcp.pop %v712
    %v740 = vmul.f32 %v608, %v739
    %v741 = vrcp.pop %v716
    %v742 = vmul.f32 %v610, %v741
    %v743 = vrcp.pop %v720
    %v744 = vmul.f32 %v612, %v743
    %753 = vset.pattern.permute.xlu0 0
    %754 = vperm.xlu0 %753, %v730
    %v755 = vpop.permute.xlu0 %754
    %756 = vset.pattern.permute.xlu0 0
    %757 = vperm.xlu0 %756, %v732
    %v758 = vpop.permute.xlu0 %757
    %759 = vset.pattern.permute.xlu0 0
    %760 = vperm.xlu0 %759, %v734
    %v761 = vpop.permute.xlu0 %760
    %762 = vset.pattern.permute.xlu0 0
    %763 = vperm.xlu0 %762, %v736
    %v764 = vpop.permute.xlu0 %763
    %765 = vset.pattern.permute.xlu0 0
    %766 = vperm.xlu0 %765, %v738
    %v767 = vpop.permute.xlu0 %766
    %768 = vset.pattern.permute.xlu0 0
    %769 = vperm.xlu0 %768, %v740
    %v770 = vpop.permute.xlu0 %769
    %771 = vset.pattern.permute.xlu0 0
    %772 = vperm.xlu0 %771, %v742
    %v773 = vpop.permute.xlu0 %772
    %774 = vset.pattern.permute.xlu0 0
    %775 = vperm.xlu0 %774, %v744
    %v776 = vpop.permute.xlu0 %775
    %v777 = vlaneseq
    %v778 = vshrl.u32 %v777, 7
    %v779 = vsub.s32 %v496, %v778
    %v780 = vrot.slane %v755, %v779
    %v781 = vlaneseq
    %v782 = vshrl.u32 %v781, 7
    %v783 = vsub.s32 %v496, %v782
    %v784 = vrot.slane %v758, %v783
    %v785 = vlaneseq
    %v786 = vshrl.u32 %v785, 7
    %v787 = vsub.s32 %v496, %v786
    %v788 = vrot.slane %v761, %v787
    %v789 = vlaneseq
    %v790 = vshrl.u32 %v789, 7
    %v791 = vsub.s32 %v496, %v790
    %v792 = vrot.slane %v764, %v791
    %v793 = vlaneseq
    %v794 = vshrl.u32 %v793, 7
    %v795 = vsub.s32 %v496, %v794
    %v796 = vrot.slane %v767, %v795
    %v797 = vlaneseq
    %v798 = vshrl.u32 %v797, 7
    %v799 = vsub.s32 %v496, %v798
    %v800 = vrot.slane %v770, %v799
    %v801 = vlaneseq
    %v802 = vshrl.u32 %v801, 7
    %v803 = vsub.s32 %v496, %v802
    %v804 = vrot.slane %v773, %v803
    %v805 = vlaneseq
    %v806 = vshrl.u32 %v805, 7
    %v807 = vsub.s32 %v496, %v806
    %v808 = vrot.slane %v776, %v807
    %v809 = vsel %vm529, %v784, %v780
    %v810 = vsel %vm531, %v788, %v809
    %v811 = vsel %vm533, %v792, %v810
    %v812 = vsel %vm535, %v796, %v811
    %v813 = vsel %vm537, %v800, %v812
    %v814 = vsel %vm539, %v804, %v813
    %v815 = vsel %vm541, %v808, %v814
    %817 = vst.msk [vmem:[#allocation22] sm:$0xff] %vm544, %v815
    %v818 = vpack.c.bf16 %v730, %v730
    %v819 = vpack.c.bf16 %v732, %v732
    %v820 = vpack.c.bf16 %v734, %v734
    %v821 = vpack.c.bf16 %v736, %v736
    %v822 = vpack.c.bf16 %v738, %v738
    %v823 = vpack.c.bf16 %v740, %v740
    %v824 = vpack.c.bf16 %v742, %v742
    %v825 = vpack.c.bf16 %v744, %v744
    %v827 = vunpack.c.l.b16 %v818
    %828 = vset.pattern.permute.xlu0 0
    %829 = vperm.xlu0 %828, %v827
    %v830 = vpop.permute.xlu0 %829
    %v831 = vlaneseq
    %v832 = vshrl.u32 %v831, 7
    %v833 = vsub.s32 %v496, %v832
    %v834 = vrot.slane %v830, %v833
    %v835 = vpack.c.b16 %v834, %v834
    %v837 = vsel %vm544, %v835, 0
    %vm839 = vcmask 1043456
    %v841 = vsel %vm839, %v204, 0
    %843 = vmatprep.subr.bf16.mxu0 0
    %844 = vmatpush1.bf16.msra.mxu0 %v841
    %845 = vmatprep.subr.bf16.mxu0 0
    %846 = vmatpush1.bf16.msra.mxu0 0
    %847 = vmatprep.subr.bf16.mxu0 0
    %848 = vmatpush1.bf16.msra.mxu0 0
    %849 = vmatprep.subr.bf16.mxu0 0
    %850 = vmatpush1.bf16.msra.mxu0 0
    %851 = vmatprep.subr.bf16.mxu0 0
    %852 = vmatpush1.bf16.msra.mxu0 0
    %853 = vmatprep.subr.bf16.mxu0 0
    %854 = vmatpush1.bf16.msra.mxu0 0
    %855 = vmatprep.subr.bf16.mxu0 0
    %856 = vmatpush1.bf16.msra.mxu0 0
    %857 = vmatprep.subr.bf16.mxu0 0
    %858 = vmatpush1.bf16.msra.mxu0 0
    %859 = vmatprep.subr.bf16.mxu0 0
    %860 = vmatpush1.bf16.msra.mxu0 0
    %861 = vmatprep.subr.bf16.mxu0 0
    %862 = vmatpush1.bf16.msra.mxu0 0
    %863 = vmatprep.subr.bf16.mxu0 0
    %864 = vmatpush1.bf16.msra.mxu0 0
    %865 = vmatprep.subr.bf16.mxu0 0
    %866 = vmatpush1.bf16.msra.mxu0 0
    %867 = vmatprep.subr.bf16.mxu0 0
    %868 = vmatpush1.bf16.msra.mxu0 0
    %869 = vmatprep.subr.bf16.mxu0 0
    %870 = vmatpush1.bf16.msra.mxu0 0
    %871 = vmatprep.subr.bf16.mxu0 0
    %872 = vmatpush1.bf16.msra.mxu0 0
    %873 = vmatprep.subr.bf16.mxu0 0
    %874 = vmatpush1.bf16.msra.mxu0 0
    %875 = vmatprep.mubr.bf16.mxu0 0
    %876 = vmatmul.mubr.bf16.gmra.mrb[0].mxu0 %v837
    %v877 = vpop.f32.mrb[0].mxu0
    %v878 = vadd.f32 0.0, %v877
    %v879 = vpop.f32.mrb[0].mxu0
    %v880 = vpop.f32.mrb[0].mxu0
    %v881 = vpop.f32.mrb[0].mxu0
    %882 = vdwg.mxu0
    %v884 = vunpack.c.l.b16 %v819
    %885 = vset.pattern.permute.xlu0 0
    %886 = vperm.xlu0 %885, %v884
    %v887 = vpop.permute.xlu0 %886
    %v888 = vlaneseq
    %v889 = vshrl.u32 %v888, 7
    %v890 = vsub.s32 %v496, %v889
    %v891 = vrot.slane %v887, %v890
    %v892 = vpack.c.b16 %v891, %v891
    %v894 = vsel %vm544, %v892, 0
    %v897 = vsel %vm839, %v205, 0
    %899 = vmatprep.subr.bf16.mxu0 0
    %900 = vmatpush1.bf16.msra.mxu0 %v897
    %901 = vmatprep.subr.bf16.mxu0 0
    %902 = vmatpush1.bf16.msra.mxu0 0
    %903 = vmatprep.subr.bf16.mxu0 0
    %904 = vmatpush1.bf16.msra.mxu0 0
    %905 = vmatprep.subr.bf16.mxu0 0
    %906 = vmatpush1.bf16.msra.mxu0 0
    %907 = vmatprep.subr.bf16.mxu0 0
    %908 = vmatpush1.bf16.msra.mxu0 0
    %909 = vmatprep.subr.bf16.mxu0 0
    %910 = vmatpush1.bf16.msra.mxu0 0
    %911 = vmatprep.subr.bf16.mxu0 0
    %912 = vmatpush1.bf16.msra.mxu0 0
    %913 = vmatprep.subr.bf16.mxu0 0
    %914 = vmatpush1.bf16.msra.mxu0 0
    %915 = vmatprep.subr.bf16.mxu0 0
    %916 = vmatpush1.bf16.msra.mxu0 0
    %917 = vmatprep.subr.bf16.mxu0 0
    %918 = vmatpush1.bf16.msra.mxu0 0
    %919 = vmatprep.subr.bf16.mxu0 0
    %920 = vmatpush1.bf16.msra.mxu0 0
    %921 = vmatprep.subr.bf16.mxu0 0
    %922 = vmatpush1.bf16.msra.mxu0 0
    %923 = vmatprep.subr.bf16.mxu0 0
    %924 = vmatpush1.bf16.msra.mxu0 0
    %925 = vmatprep.subr.bf16.mxu0 0
    %926 = vmatpush1.bf16.msra.mxu0 0
    %927 = vmatprep.subr.bf16.mxu0 0
    %928 = vmatpush1.bf16.msra.mxu0 0
    %929 = vmatprep.subr.bf16.mxu0 0
    %930 = vmatpush1.bf16.msra.mxu0 0
    %931 = vmatprep.mubr.bf16.mxu0 0
    %932 = vmatmul.mubr.bf16.gmra.mrb[0].mxu0 %v894
    %v933 = vpop.f32.mrb[0].mxu0
    %v934 = vadd.f32 0.0, %v933
    %v935 = vpop.f32.mrb[0].mxu0
    %v936 = vpop.f32.mrb[0].mxu0
    %v937 = vpop.f32.mrb[0].mxu0
    %938 = vdwg.mxu0
    %v940 = vunpack.c.l.b16 %v820
    %941 = vset.pattern.permute.xlu0 0
    %942 = vperm.xlu0 %941, %v940
    %v943 = vpop.permute.xlu0 %942
    %v944 = vlaneseq
    %v945 = vshrl.u32 %v944, 7
    %v946 = vsub.s32 %v496, %v945
    %v947 = vrot.slane %v943, %v946
    %v948 = vpack.c.b16 %v947, %v947
    %v950 = vsel %vm544, %v948, 0
    %v953 = vsel %vm839, %v206, 0
    %955 = vmatprep.subr.bf16.mxu0 0
    %956 = vmatpush1.bf16.msra.mxu0 %v953
    %957 = vmatprep.subr.bf16.mxu0 0
    %958 = vmatpush1.bf16.msra.mxu0 0
    %959 = vmatprep.subr.bf16.mxu0 0
    %960 = vmatpush1.bf16.msra.mxu0 0
    %961 = vmatprep.subr.bf16.mxu0 0
    %962 = vmatpush1.bf16.msra.mxu0 0
    %963 = vmatprep.subr.bf16.mxu0 0
    %964 = vmatpush1.bf16.msra.mxu0 0
    %965 = vmatprep.subr.bf16.mxu0 0
    %966 = vmatpush1.bf16.msra.mxu0 0
    %967 = vmatprep.subr.bf16.mxu0 0
    %968 = vmatpush1.bf16.msra.mxu0 0
    %969 = vmatprep.subr.bf16.mxu0 0
    %970 = vmatpush1.bf16.msra.mxu0 0
    %971 = vmatprep.subr.bf16.mxu0 0
    %972 = vmatpush1.bf16.msra.mxu0 0
    %973 = vmatprep.subr.bf16.mxu0 0
    %974 = vmatpush1.bf16.msra.mxu0 0
    %975 = vmatprep.subr.bf16.mxu0 0
    %976 = vmatpush1.bf16.msra.mxu0 0
    %977 = vmatprep.subr.bf16.mxu0 0
    %978 = vmatpush1.bf16.msra.mxu0 0
    %979 = vmatprep.subr.bf16.mxu0 0
    %980 = vmatpush1.bf16.msra.mxu0 0
    %981 = vmatprep.subr.bf16.mxu0 0
    %982 = vmatpush1.bf16.msra.mxu0 0
    %983 = vmatprep.subr.bf16.mxu0 0
    %984 = vmatpush1.bf16.msra.mxu0 0
    %985 = vmatprep.subr.bf16.mxu0 0
    %986 = vmatpush1.bf16.msra.mxu0 0
    %987 = vmatprep.mubr.bf16.mxu0 0
    %988 = vmatmul.mubr.bf16.gmra.mrb[0].mxu0 %v950
    %v989 = vpop.f32.mrb[0].mxu0
    %v990 = vadd.f32 0.0, %v989
    %v991 = vpop.f32.mrb[0].mxu0
    %v992 = vpop.f32.mrb[0].mxu0
    %v993 = vpop.f32.mrb[0].mxu0
    %994 = vdwg.mxu0
    %v996 = vunpack.c.l.b16 %v821
    %997 = vset.pattern.permute.xlu0 0
    %998 = vperm.xlu0 %997, %v996
    %v999 = vpop.permute.xlu0 %998
    %v1000 = vlaneseq
    %v1001 = vshrl.u32 %v1000, 7
    %v1002 = vsub.s32 %v496, %v1001
    %v1003 = vrot.slane %v999, %v1002
    %v1004 = vpack.c.b16 %v1003, %v1003
    %v1006 = vsel %vm544, %v1004, 0
    %v1009 = vsel %vm839, %v207, 0
    %1011 = vmatprep.subr.bf16.mxu0 0
    %1012 = vmatpush1.bf16.msra.mxu0 %v1009
    %1013 = vmatprep.subr.bf16.mxu0 0
    %1014 = vmatpush1.bf16.msra.mxu0 0
    %1015 = vmatprep.subr.bf16.mxu0 0
    %1016 = vmatpush1.bf16.msra.mxu0 0
    %1017 = vmatprep.subr.bf16.mxu0 0
    %1018 = vmatpush1.bf16.msra.mxu0 0
    %1019 = vmatprep.subr.bf16.mxu0 0
    %1020 = vmatpush1.bf16.msra.mxu0 0
    %1021 = vmatprep.subr.bf16.mxu0 0
    %1022 = vmatpush1.bf16.msra.mxu0 0
    %1023 = vmatprep.subr.bf16.mxu0 0
    %1024 = vmatpush1.bf16.msra.mxu0 0
    %1025 = vmatprep.subr.bf16.mxu0 0
    %1026 = vmatpush1.bf16.msra.mxu0 0
    %1027 = vmatprep.subr.bf16.mxu0 0
    %1028 = vmatpush1.bf16.msra.mxu0 0
    %1029 = vmatprep.subr.bf16.mxu0 0
    %1030 = vmatpush1.bf16.msra.mxu0 0
    %1031 = vmatprep.subr.bf16.mxu0 0
    %1032 = vmatpush1.bf16.msra.mxu0 0
    %1033 = vmatprep.subr.bf16.mxu0 0
    %1034 = vmatpush1.bf16.msra.mxu0 0
    %1035 = vmatprep.subr.bf16.mxu0 0
    %1036 = vmatpush1.bf16.msra.mxu0 0
    %1037 = vmatprep.subr.bf16.mxu0 0
    %1038 = vmatpush1.bf16.msra.mxu0 0
    %1039 = vmatprep.subr.bf16.mxu0 0
    %1040 = vmatpush1.bf16.msra.mxu0 0
    %1041 = vmatprep.subr.bf16.mxu0 0
    %1042 = vmatpush1.bf16.msra.mxu0 0
    %1043 = vmatprep.mubr.bf16.mxu0 0
    %1044 = vmatmul.mubr.bf16.gmra.mrb[0].mxu0 %v1006
    %v1045 = vpop.f32.mrb[0].mxu0
    %v1046 = vadd.f32 0.0, %v1045
    %v1047 = vpop.f32.mrb[0].mxu0
    %v1048 = vpop.f32.mrb[0].mxu0
    %v1049 = vpop.f32.mrb[0].mxu0
    %1050 = vdwg.mxu0
    %v1052 = vunpack.c.l.b16 %v822
    %1053 = vset.pattern.permute.xlu0 0
    %1054 = vperm.xlu0 %1053, %v1052
    %v1055 = vpop.permute.xlu0 %1054
    %v1056 = vlaneseq
    %v1057 = vshrl.u32 %v1056, 7
    %v1058 = vsub.s32 %v496, %v1057
    %v1059 = vrot.slane %v1055, %v1058
    %v1060 = vpack.c.b16 %v1059, %v1059
    %v1062 = vsel %vm544, %v1060, 0
    %v1065 = vsel %vm839, %v208, 0
    %1067 = vmatprep.subr.bf16.mxu0 0
    %1068 = vmatpush1.bf16.msra.mxu0 %v1065
    %1069 = vmatprep.subr.bf16.mxu0 0
    %1070 = vmatpush1.bf16.msra.mxu0 0
    %1071 = vmatprep.subr.bf16.mxu0 0
    %1072 = vmatpush1.bf16.msra.mxu0 0
    %1073 = vmatprep.subr.bf16.mxu0 0
    %1074 = vmatpush1.bf16.msra.mxu0 0
    %1075 = vmatprep.subr.bf16.mxu0 0
    %1076 = vmatpush1.bf16.msra.mxu0 0
    %1077 = vmatprep.subr.bf16.mxu0 0
    %1078 = vmatpush1.bf16.msra.mxu0 0
    %1079 = vmatprep.subr.bf16.mxu0 0
    %1080 = vmatpush1.bf16.msra.mxu0 0
    %1081 = vmatprep.subr.bf16.mxu0 0
    %1082 = vmatpush1.bf16.msra.mxu0 0
    %1083 = vmatprep.subr.bf16.mxu0 0
    %1084 = vmatpush1.bf16.msra.mxu0 0
    %1085 = vmatprep.subr.bf16.mxu0 0
    %1086 = vmatpush1.bf16.msra.mxu0 0
    %1087 = vmatprep.subr.bf16.mxu0 0
    %1088 = vmatpush1.bf16.msra.mxu0 0
    %1089 = vmatprep.subr.bf16.mxu0 0
    %1090 = vmatpush1.bf16.msra.mxu0 0
    %1091 = vmatprep.subr.bf16.mxu0 0
    %1092 = vmatpush1.bf16.msra.mxu0 0
    %1093 = vmatprep.subr.bf16.mxu0 0
    %1094 = vmatpush1.bf16.msra.mxu0 0
    %1095 = vmatprep.subr.bf16.mxu0 0
    %1096 = vmatpush1.bf16.msra.mxu0 0
    %1097 = vmatprep.subr.bf16.mxu0 0
    %1098 = vmatpush1.bf16.msra.mxu0 0
    %1099 = vmatprep.mubr.bf16.mxu0 0
    %1100 = vmatmul.mubr.bf16.gmra.mrb[0].mxu0 %v1062
    %v1101 = vpop.f32.mrb[0].mxu0
    %v1102 = vadd.f32 0.0, %v1101
    %v1103 = vpop.f32.mrb[0].mxu0
    %v1104 = vpop.f32.mrb[0].mxu0
    %v1105 = vpop.f32.mrb[0].mxu0
    %1106 = vdwg.mxu0
    %v1108 = vunpack.c.l.b16 %v823
    %1109 = vset.pattern.permute.xlu0 0
    %1110 = vperm.xlu0 %1109, %v1108
    %v1111 = vpop.permute.xlu0 %1110
    %v1112 = vlaneseq
    %v1113 = vshrl.u32 %v1112, 7
    %v1114 = vsub.s32 %v496, %v1113
    %v1115 = vrot.slane %v1111, %v1114
    %v1116 = vpack.c.b16 %v1115, %v1115
    %v1118 = vsel %vm544, %v1116, 0
    %v1121 = vsel %vm839, %v209, 0
    %1123 = vmatprep.subr.bf16.mxu0 0
    %1124 = vmatpush1.bf16.msra.mxu0 %v1121
    %1125 = vmatprep.subr.bf16.mxu0 0
    %1126 = vmatpush1.bf16.msra.mxu0 0
    %1127 = vmatprep.subr.bf16.mxu0 0
    %1128 = vmatpush1.bf16.msra.mxu0 0
    %1129 = vmatprep.subr.bf16.mxu0 0
    %1130 = vmatpush1.bf16.msra.mxu0 0
    %1131 = vmatprep.subr.bf16.mxu0 0
    %1132 = vmatpush1.bf16.msra.mxu0 0
    %1133 = vmatprep.subr.bf16.mxu0 0
    %1134 = vmatpush1.bf16.msra.mxu0 0
    %1135 = vmatprep.subr.bf16.mxu0 0
    %1136 = vmatpush1.bf16.msra.mxu0 0
    %1137 = vmatprep.subr.bf16.mxu0 0
    %1138 = vmatpush1.bf16.msra.mxu0 0
    %1139 = vmatprep.subr.bf16.mxu0 0
    %1140 = vmatpush1.bf16.msra.mxu0 0
    %1141 = vmatprep.subr.bf16.mxu0 0
    %1142 = vmatpush1.bf16.msra.mxu0 0
    %1143 = vmatprep.subr.bf16.mxu0 0
    %1144 = vmatpush1.bf16.msra.mxu0 0
    %1145 = vmatprep.subr.bf16.mxu0 0
    %1146 = vmatpush1.bf16.msra.mxu0 0
    %1147 = vmatprep.subr.bf16.mxu0 0
    %1148 = vmatpush1.bf16.msra.mxu0 0
    %1149 = vmatprep.subr.bf16.mxu0 0
    %1150 = vmatpush1.bf16.msra.mxu0 0
    %1151 = vmatprep.subr.bf16.mxu0 0
    %1152 = vmatpush1.bf16.msra.mxu0 0
    %1153 = vmatprep.subr.bf16.mxu0 0
    %1154 = vmatpush1.bf16.msra.mxu0 0
    %1155 = vmatprep.mubr.bf16.mxu0 0
    %1156 = vmatmul.mubr.bf16.gmra.mrb[0].mxu0 %v1118
    %v1157 = vpop.f32.mrb[0].mxu0
    %v1158 = vadd.f32 0.0, %v1157
    %v1159 = vpop.f32.mrb[0].mxu0
    %v1160 = vpop.f32.mrb[0].mxu0
    %v1161 = vpop.f32.mrb[0].mxu0
    %1162 = vdwg.mxu0
    %v1164 = vunpack.c.l.b16 %v824
    %1165 = vset.pattern.permute.xlu0 0
    %1166 = vperm.xlu0 %1165, %v1164
    %v1167 = vpop.permute.xlu0 %1166
    %v1168 = vlaneseq
    %v1169 = vshrl.u32 %v1168, 7
    %v1170 = vsub.s32 %v496, %v1169
    %v1171 = vrot.slane %v1167, %v1170
    %v1172 = vpack.c.b16 %v1171, %v1171
    %v1174 = vsel %vm544, %v1172, 0
    %v1177 = vsel %vm839, %v210, 0
    %1179 = vmatprep.subr.bf16.mxu0 0
    %1180 = vmatpush1.bf16.msra.mxu0 %v1177
    %1181 = vmatprep.subr.bf16.mxu0 0
    %1182 = vmatpush1.bf16.msra.mxu0 0
    %1183 = vmatprep.subr.bf16.mxu0 0
    %1184 = vmatpush1.bf16.msra.mxu0 0
    %1185 = vmatprep.subr.bf16.mxu0 0
    %1186 = vmatpush1.bf16.msra.mxu0 0
    %1187 = vmatprep.subr.bf16.mxu0 0
    %1188 = vmatpush1.bf16.msra.mxu0 0
    %1189 = vmatprep.subr.bf16.mxu0 0
    %1190 = vmatpush1.bf16.msra.mxu0 0
    %1191 = vmatprep.subr.bf16.mxu0 0
    %1192 = vmatpush1.bf16.msra.mxu0 0
    %1193 = vmatprep.subr.bf16.mxu0 0
    %1194 = vmatpush1.bf16.msra.mxu0 0
    %1195 = vmatprep.subr.bf16.mxu0 0
    %1196 = vmatpush1.bf16.msra.mxu0 0
    %1197 = vmatprep.subr.bf16.mxu0 0
    %1198 = vmatpush1.bf16.msra.mxu0 0
    %1199 = vmatprep.subr.bf16.mxu0 0
    %1200 = vmatpush1.bf16.msra.mxu0 0
    %1201 = vmatprep.subr.bf16.mxu0 0
    %1202 = vmatpush1.bf16.msra.mxu0 0
    %1203 = vmatprep.subr.bf16.mxu0 0
    %1204 = vmatpush1.bf16.msra.mxu0 0
    %1205 = vmatprep.subr.bf16.mxu0 0
    %1206 = vmatpush1.bf16.msra.mxu0 0
    %1207 = vmatprep.subr.bf16.mxu0 0
    %1208 = vmatpush1.bf16.msra.mxu0 0
    %1209 = vmatprep.subr.bf16.mxu0 0
    %1210 = vmatpush1.bf16.msra.mxu0 0
    %1211 = vmatprep.mubr.bf16.mxu0 0
    %1212 = vmatmul.mubr.bf16.gmra.mrb[0].mxu0 %v1174
    %v1213 = vpop.f32.mrb[0].mxu0
    %v1214 = vadd.f32 0.0, %v1213
    %v1215 = vpop.f32.mrb[0].mxu0
    %v1216 = vpop.f32.mrb[0].mxu0
    %v1217 = vpop.f32.mrb[0].mxu0
    %1218 = vdwg.mxu0
    %v1220 = vunpack.c.l.b16 %v825
    %1221 = vset.pattern.permute.xlu0 0
    %1222 = vperm.xlu0 %1221, %v1220
    %v1223 = vpop.permute.xlu0 %1222
    %v1224 = vlaneseq
    %v1225 = vshrl.u32 %v1224, 7
    %v1226 = vsub.s32 %v496, %v1225
    %v1227 = vrot.slane %v1223, %v1226
    %v1228 = vpack.c.b16 %v1227, %v1227
    %v1230 = vsel %vm544, %v1228, 0
    %v1233 = vsel %vm839, %v211, 0
    %1235 = vmatprep.subr.bf16.mxu0 0
    %1236 = vmatpush1.bf16.msra.mxu0 %v1233
    %1237 = vmatprep.subr.bf16.mxu0 0
    %1238 = vmatpush1.bf16.msra.mxu0 0
    %1239 = vmatprep.subr.bf16.mxu0 0
    %1240 = vmatpush1.bf16.msra.mxu0 0
    %1241 = vmatprep.subr.bf16.mxu0 0
    %1242 = vmatpush1.bf16.msra.mxu0 0
    %1243 = vmatprep.subr.bf16.mxu0 0
    %1244 = vmatpush1.bf16.msra.mxu0 0
    %1245 = vmatprep.subr.bf16.mxu0 0
    %1246 = vmatpush1.bf16.msra.mxu0 0
    %1247 = vmatprep.subr.bf16.mxu0 0
    %1248 = vmatpush1.bf16.msra.mxu0 0
    %1249 = vmatprep.subr.bf16.mxu0 0
    %1250 = vmatpush1.bf16.msra.mxu0 0
    %1251 = vmatprep.subr.bf16.mxu0 0
    %1252 = vmatpush1.bf16.msra.mxu0 0
    %1253 = vmatprep.subr.bf16.mxu0 0
    %1254 = vmatpush1.bf16.msra.mxu0 0
    %1255 = vmatprep.subr.bf16.mxu0 0
    %1256 = vmatpush1.bf16.msra.mxu0 0
    %1257 = vmatprep.subr.bf16.mxu0 0
    %1258 = vmatpush1.bf16.msra.mxu0 0
    %1259 = vmatprep.subr.bf16.mxu0 0
    %1260 = vmatpush1.bf16.msra.mxu0 0
    %1261 = vmatprep.subr.bf16.mxu0 0
    %1262 = vmatpush1.bf16.msra.mxu0 0
    %1263 = vmatprep.subr.bf16.mxu0 0
    %1264 = vmatpush1.bf16.msra.mxu0 0
    %1265 = vmatprep.subr.bf16.mxu0 0
    %1266 = vmatpush1.bf16.msra.mxu0 0
    %1267 = vmatprep.mubr.bf16.mxu0 0
    %1268 = vmatmul.mubr.bf16.gmra.mrb[0].mxu0 %v1230
    %v1269 = vpop.f32.mrb[0].mxu0
    %v1270 = vadd.f32 0.0, %v1269
    %v1271 = vpop.f32.mrb[0].mxu0
    %v1272 = vpop.f32.mrb[0].mxu0
    %v1273 = vpop.f32.mrb[0].mxu0
    %1274 = vdwg.mxu0
    %v1275 = vld [vmem:[%s2] sm:$0xf]
    %v1276 = vld [vmem:[#allocation7] sm:$0xff]
    %v1277 = vpack.c.bf16 %v878, %v878
    %v1278 = vpack.c.bf16 %v934, %v934
    %v1279 = vpack.c.bf16 %v990, %v990
    %v1280 = vpack.c.bf16 %v1046, %v1046
    %v1281 = vpack.c.bf16 %v1102, %v1102
    %v1282 = vpack.c.bf16 %v1158, %v1158
    %v1283 = vpack.c.bf16 %v1214, %v1214
    %v1284 = vpack.c.bf16 %v1270, %v1270
    %v1285 = vld [vmem:[#allocation10] sm:$0xff]
    %v1286 = vld [vmem:[#allocation10 + $0x8] sm:$0xf]
    %v1287 = vld [vmem:[#allocation10 + $0xc] sm:$0xff]
    %v1288 = vld [vmem:[#allocation10 + $0x14] sm:$0xf]
    %v1289 = vld [vmem:[#allocation10 + $0x18] sm:$0xff]
    %v1290 = vld [vmem:[#allocation10 + $0x20] sm:$0xf]
    %v1291 = vld [vmem:[#allocation10 + $0x24] sm:$0xff]
    %v1292 = vld [vmem:[#allocation10 + $0x2c] sm:$0xf]
    %v1293 = vld [vmem:[#allocation10 + $0x30] sm:$0xff]
    %v1294 = vld [vmem:[#allocation10 + $0x38] sm:$0xf]
    %v1295 = vld [vmem:[#allocation10 + $0x3c] sm:$0xff]
    %v1296 = vld [vmem:[#allocation10 + $0x44] sm:$0xf]
    %v1297 = vld [vmem:[#allocation10 + $0x48] sm:$0xff]
    %v1298 = vld [vmem:[#allocation10 + $0x50] sm:$0xf]
    %v1299 = vld [vmem:[#allocation10 + $0x54] sm:$0xff]
    %v1300 = vld [vmem:[#allocation10 + $0x5c] sm:$0xf]
    %v1301 = vld [vmem:[#allocation10 + $0x60] sm:$0xff]
    %v1302 = vld [vmem:[#allocation10 + $0x68] sm:$0xf]
    %v1303 = vld [vmem:[#allocation10 + $0x6c] sm:$0xff]
    %v1304 = vld [vmem:[#allocation10 + $0x74] sm:$0xf]
    %v1305 = vld [vmem:[#allocation10 + $0x78] sm:$0xff]
    %v1306 = vld [vmem:[#allocation10 + $0x80] sm:$0xf]
    %v1307 = vld [vmem:[#allocation10 + $0x84] sm:$0xff]
    %v1308 = vld [vmem:[#allocation10 + $0x8c] sm:$0xf]
    %v1309 = vld [vmem:[#allocation10 + $0x90] sm:$0xff]
    %v1310 = vld [vmem:[#allocation10 + $0x98] sm:$0xf]
    %v1311 = vld [vmem:[#allocation10 + $0x9c] sm:$0xff]
    %v1312 = vld [vmem:[#allocation10 + $0xa4] sm:$0xf]
    %v1313 = vld [vmem:[#allocation10 + $0xa8] sm:$0xff]
    %v1314 = vld [vmem:[#allocation10 + $0xb0] sm:$0xf]
    %v1315 = vld [vmem:[#allocation10 + $0xb4] sm:$0xff]
    %v1316 = vld [vmem:[#allocation10 + $0xbc] sm:$0xf]
    %v1317 = vld [vmem:[%s10] sm:$0x7]
    %v1319 = vlaneseq
    %v1320 = vshrl.u32 %v1319, 7
    %v1321 = vsub.s32 0, %v1320
    %v1322 = vrot.slane %v1317, %v1321
    %v1323 = vlaneseq
    %v1324 = vshrl.u32 %v1323, 7
    %v1325 = vsub.s32 1, %v1324
    %v1326 = vrot.slane %v1317, %v1325
    %v1327 = vlaneseq
    %v1328 = vshrl.u32 %v1327, 7
    %v1329 = vsub.s32 2, %v1328
    %v1330 = vrot.slane %v1317, %v1329
    %v1342 = vunpack.c.l.b16 %v1277
    %v1343 = vunpack.c.l.b16 %v1278
    %v1344 = vunpack.c.l.b16 %v1279
    %v1345 = vunpack.c.l.b16 %v1280
    %v1346 = vunpack.c.l.b16 %v1281
    %v1347 = vunpack.c.l.b16 %v1282
    %v1348 = vunpack.c.l.b16 %v1283
    %v1349 = vunpack.c.l.b16 %v1284
    %v1350 = vrot.slane %v1343, 7
    %v1351 = vsel %vm529, %v1350, %v1342
    %v1352 = vrot.slane %v1344, 6
    %v1353 = vsel %vm531, %v1352, %v1351
    %v1354 = vrot.slane %v1345, 5
    %v1355 = vsel %vm533, %v1354, %v1353
    %v1356 = vrot.slane %v1346, 4
    %v1357 = vsel %vm535, %v1356, %v1355
    %v1358 = vrot.slane %v1347, 3
    %v1359 = vsel %vm537, %v1358, %v1357
    %v1360 = vrot.slane %v1348, 2
    %v1361 = vsel %vm539, %v1360, %v1359
    %v1362 = vrot.slane %v1349, 1
    %v1363 = vsel %vm541, %v1362, %v1361
    %v1364 = vpack.c.b16 %v1363, %v1363
    %v1398 = vunpack.c.l.b16 %v1285
    %v1399 = vunpack.c.h.b16 %v1285
    %v1400 = vunpack.c.l.b16 %v1286
    %v1401 = vunpack.c.l.b16 %v1287
    %v1402 = vunpack.c.h.b16 %v1287
    %v1403 = vunpack.c.l.b16 %v1288
    %v1404 = vunpack.c.l.b16 %v1289
    %v1405 = vunpack.c.h.b16 %v1289
    %v1406 = vunpack.c.l.b16 %v1290
    %v1407 = vunpack.c.l.b16 %v1291
    %v1408 = vunpack.c.h.b16 %v1291
    %v1409 = vunpack.c.l.b16 %v1292
    %v1410 = vunpack.c.l.b16 %v1293
    %v1411 = vunpack.c.h.b16 %v1293
    %v1412 = vunpack.c.l.b16 %v1294
    %v1413 = vunpack.c.l.b16 %v1295
    %v1414 = vunpack.c.h.b16 %v1295
    %v1415 = vunpack.c.l.b16 %v1296
    %v1416 = vunpack.c.l.b16 %v1297
    %v1417 = vunpack.c.h.b16 %v1297
    %v1418 = vunpack.c.l.b16 %v1298
    %v1419 = vunpack.c.l.b16 %v1299
    %v1420 = vunpack.c.h.b16 %v1299
    %v1421 = vunpack.c.l.b16 %v1300
    %v1422 = vunpack.c.l.b16 %v1301
    %v1423 = vunpack.c.h.b16 %v1301
    %v1424 = vunpack.c.l.b16 %v1302
    %v1425 = vunpack.c.l.b16 %v1303
    %v1426 = vunpack.c.h.b16 %v1303
    %v1427 = vunpack.c.l.b16 %v1304
    %v1428 = vunpack.c.l.b16 %v1305
    %v1429 = vunpack.c.h.b16 %v1305
    %v1430 = vunpack.c.l.b16 %v1306
    %v1431 = vunpack.c.l.b16 %v1307
    %v1432 = vunpack.c.h.b16 %v1307
    %v1433 = vunpack.c.l.b16 %v1308
    %v1434 = vunpack.c.l.b16 %v1309
    %v1435 = vunpack.c.h.b16 %v1309
    %v1436 = vunpack.c.l.b16 %v1310
    %v1437 = vunpack.c.l.b16 %v1311
    %v1438 = vunpack.c.h.b16 %v1311
    %v1439 = vunpack.c.l.b16 %v1312
    %v1440 = vunpack.c.l.b16 %v1313
    %v1441 = vunpack.c.h.b16 %v1313
    %v1442 = vunpack.c.l.b16 %v1314
    %v1443 = vunpack.c.l.b16 %v1315
    %v1444 = vunpack.c.h.b16 %v1315
    %v1445 = vunpack.c.l.b16 %v1316
    %v1446 = vpack.c.b16 %v1401, %v1398
    %v1447 = vpack.c.b16 %v1402, %v1399
    %v1448 = vpack.c.b16 %v1403, %v1400
    %v1449 = vpack.c.b16 %v1407, %v1404
    %v1450 = vpack.c.b16 %v1408, %v1405
    %v1451 = vpack.c.b16 %v1409, %v1406
    %v1452 = vpack.c.b16 %v1413, %v1410
    %v1453 = vpack.c.b16 %v1414, %v1411
    %v1454 = vpack.c.b16 %v1415, %v1412
    %v1455 = vpack.c.b16 %v1419, %v1416
    %v1456 = vpack.c.b16 %v1420, %v1417
    %v1457 = vpack.c.b16 %v1421, %v1418
    %v1458 = vpack.c.b16 %v1425, %v1422
    %v1459 = vpack.c.b16 %v1426, %v1423
    %v1460 = vpack.c.b16 %v1427, %v1424
    %v1461 = vpack.c.b16 %v1431, %v1428
    %v1462 = vpack.c.b16 %v1432, %v1429
    %v1463 = vpack.c.b16 %v1433, %v1430
    %v1464 = vpack.c.b16 %v1437, %v1434
    %v1465 = vpack.c.b16 %v1438, %v1435
    %v1466 = vpack.c.b16 %v1439, %v1436
    %v1467 = vpack.c.b16 %v1443, %v1440
    %v1468 = vpack.c.b16 %v1444, %v1441
    %v1469 = vpack.c.b16 %v1445, %v1442
    %1494 = vmatprep.subr.bf16.mxu0 %v1447
    %1495 = vmatpush1.bf16.msra.mxu0 %v1446
    %1496 = vmatprep.subr.bf16.mxu0 %v1450
    %1497 = vmatpush1.bf16.msra.mxu0 %v1449
    %1498 = vmatprep.subr.bf16.mxu0 %v1453
    %1499 = vmatpush1.bf16.msra.mxu0 %v1452
    %1500 = vmatprep.subr.bf16.mxu0 %v1456
    %1501 = vmatpush1.bf16.msra.mxu0 %v1455
    %1502 = vmatprep.subr.bf16.mxu0 %v1459
    %1503 = vmatpush1.bf16.msra.mxu0 %v1458
    %1504 = vmatprep.subr.bf16.mxu0 %v1462
    %1505 = vmatpush1.bf16.msra.mxu0 %v1461
    %1506 = vmatprep.subr.bf16.mxu0 %v1465
    %1507 = vmatpush1.bf16.msra.mxu0 %v1464
    %1508 = vmatprep.subr.bf16.mxu0 %v1468
    %1509 = vmatpush1.bf16.msra.mxu0 %v1467
    %1510 = vmatprep.subr.bf16.mxu0 0
    %1511 = vmatpush1.bf16.msra.mxu0 0
    %1512 = vmatprep.subr.bf16.mxu0 0
    %1513 = vmatpush1.bf16.msra.mxu0 0
    %1514 = vmatprep.subr.bf16.mxu0 0
    %1515 = vmatpush1.bf16.msra.mxu0 0
    %1516 = vmatprep.subr.bf16.mxu0 0
    %1517 = vmatpush1.bf16.msra.mxu0 0
    %1518 = vmatprep.subr.bf16.mxu0 0
    %1519 = vmatpush1.bf16.msra.mxu0 0
    %1520 = vmatprep.subr.bf16.mxu0 0
    %1521 = vmatpush1.bf16.msra.mxu0 0
    %1522 = vmatprep.subr.bf16.mxu0 0
    %1523 = vmatpush1.bf16.msra.mxu0 0
    %1524 = vmatprep.subr.bf16.mxu0 0
    %1525 = vmatpush1.bf16.msra.mxu0 0
    %1526 = vmatprep.mubr.bf16.mxu0 0
    %1527 = vmatmul.mubr.bf16.gmra.mrb[0].mxu0 %v1364
    %v1528 = vpop.f32.mrb[0].mxu0
    %v1529 = vadd.f32 %v1322, %v1528
    %v1530 = vpop.f32.mrb[0].mxu0
    %v1531 = vadd.f32 %v1326, %v1530
    %v1532 = vpop.f32.mrb[0].mxu0
    %v1533 = vpop.f32.mrb[0].mxu0
    %1534 = vdwg.mxu0
    %1535 = vmatprep.subr.bf16.mxu0 0
    %1536 = vmatpush1.bf16.msra.mxu0 %v1448
    %1537 = vmatprep.subr.bf16.mxu0 0
    %1538 = vmatpush1.bf16.msra.mxu0 %v1451
    %1539 = vmatprep.subr.bf16.mxu0 0
    %1540 = vmatpush1.bf16.msra.mxu0 %v1454
    %1541 = vmatprep.subr.bf16.mxu0 0
    %1542 = vmatpush1.bf16.msra.mxu0 %v1457
    %1543 = vmatprep.subr.bf16.mxu0 0
    %1544 = vmatpush1.bf16.msra.mxu0 %v1460
    %1545 = vmatprep.subr.bf16.mxu0 0
    %1546 = vmatpush1.bf16.msra.mxu0 %v1463
    %1547 = vmatprep.subr.bf16.mxu0 0
    %1548 = vmatpush1.bf16.msra.mxu0 %v1466
    %1549 = vmatprep.subr.bf16.mxu0 0
    %1550 = vmatpush1.bf16.msra.mxu0 %v1469
    %1551 = vmatprep.subr.bf16.mxu0 0
    %1552 = vmatpush1.bf16.msra.mxu0 0
    %1553 = vmatprep.subr.bf16.mxu0 0
    %1554 = vmatpush1.bf16.msra.mxu0 0
    %1555 = vmatprep.subr.bf16.mxu0 0
    %1556 = vmatpush1.bf16.msra.mxu0 0
    %1557 = vmatprep.subr.bf16.mxu0 0
    %1558 = vmatpush1.bf16.msra.mxu0 0
    %1559 = vmatprep.subr.bf16.mxu0 0
    %1560 = vmatpush1.bf16.msra.mxu0 0
    %1561 = vmatprep.subr.bf16.mxu0 0
    %1562 = vmatpush1.bf16.msra.mxu0 0
    %1563 = vmatprep.subr.bf16.mxu0 0
    %1564 = vmatpush1.bf16.msra.mxu0 0
    %1565 = vmatprep.subr.bf16.mxu0 0
    %1566 = vmatpush1.bf16.msra.mxu0 0
    %1567 = vmatprep.mubr.bf16.mxu0 0
    %1568 = vmatmul.mubr.bf16.gmra.mrb[0].mxu0 %v1364
    %v1569 = vpop.f32.mrb[0].mxu0
    %v1570 = vadd.f32 %v1330, %v1569
    %v1571 = vpop.f32.mrb[0].mxu0
    %v1572 = vpop.f32.mrb[0].mxu0
    %v1573 = vpop.f32.mrb[0].mxu0
    %1574 = vdwg.mxu0
    %v1575 = vld [vmem:[#allocation8] sm:$0xff]
    %v1576 = vld [vmem:[#allocation8 + $0x8] sm:$0xf]
    %v1577 = vld [vmem:[#allocation8 + $0xc] sm:$0xff]
    %v1578 = vld [vmem:[#allocation8 + $0x14] sm:$0xf]
    %v1579 = vld [vmem:[#allocation8 + $0x18] sm:$0xff]
    %v1580 = vld [vmem:[#allocation8 + $0x20] sm:$0xf]
    %v1581 = vld [vmem:[#allocation8 + $0x24] sm:$0xff]
    %v1582 = vld [vmem:[#allocation8 + $0x2c] sm:$0xf]
    %v1583 = vld [vmem:[#allocation8 + $0x30] sm:$0xff]
    %v1584 = vld [vmem:[#allocation8 + $0x38] sm:$0xf]
    %v1585 = vld [vmem:[#allocation8 + $0x3c] sm:$0xff]
    %v1586 = vld [vmem:[#allocation8 + $0x44] sm:$0xf]
    %v1587 = vld [vmem:[#allocation8 + $0x48] sm:$0xff]
    %v1588 = vld [vmem:[#allocation8 + $0x50] sm:$0xf]
    %v1589 = vld [vmem:[#allocation8 + $0x54] sm:$0xff]
    %v1590 = vld [vmem:[#allocation8 + $0x5c] sm:$0xf]
    %v1591 = vld [vmem:[#allocation8 + $0x60] sm:$0xff]
    %v1592 = vld [vmem:[#allocation8 + $0x68] sm:$0xf]
    %v1593 = vld [vmem:[#allocation8 + $0x6c] sm:$0xff]
    %v1594 = vld [vmem:[#allocation8 + $0x74] sm:$0xf]
    %v1595 = vld [vmem:[#allocation8 + $0x78] sm:$0xff]
    %v1596 = vld [vmem:[#allocation8 + $0x80] sm:$0xf]
    %v1597 = vld [vmem:[#allocation8 + $0x84] sm:$0xff]
    %v1598 = vld [vmem:[#allocation8 + $0x8c] sm:$0xf]
    %v1599 = vld [vmem:[#allocation8 + $0x90] sm:$0xff]
    %v1600 = vld [vmem:[#allocation8 + $0x98] sm:$0xf]
    %v1601 = vld [vmem:[#allocation8 + $0x9c] sm:$0xff]
    %v1602 = vld [vmem:[#allocation8 + $0xa4] sm:$0xf]
    %v1603 = vld [vmem:[#allocation8 + $0xa8] sm:$0xff]
    %v1604 = vld [vmem:[#allocation8 + $0xb0] sm:$0xf]
    %v1605 = vld [vmem:[#allocation8 + $0xb4] sm:$0xff]
    %v1606 = vld [vmem:[#allocation8 + $0xbc] sm:$0xf]
    %v1639 = vunpack.c.l.b16 %v1575
    %v1640 = vunpack.c.h.b16 %v1575
    %v1641 = vunpack.c.l.b16 %v1576
    %v1642 = vunpack.c.l.b16 %v1577
    %v1643 = vunpack.c.h.b16 %v1577
    %v1644 = vunpack.c.l.b16 %v1578
    %v1645 = vunpack.c.l.b16 %v1579
    %v1646 = vunpack.c.h.b16 %v1579
    %v1647 = vunpack.c.l.b16 %v1580
    %v1648 = vunpack.c.l.b16 %v1581
    %v1649 = vunpack.c.h.b16 %v1581
    %v1650 = vunpack.c.l.b16 %v1582
    %v1651 = vunpack.c.l.b16 %v1583
    %v1652 = vunpack.c.h.b16 %v1583
    %v1653 = vunpack.c.l.b16 %v1584
    %v1654 = vunpack.c.l.b16 %v1585
    %v1655 = vunpack.c.h.b16 %v1585
    %v1656 = vunpack.c.l.b16 %v1586
    %v1657 = vunpack.c.l.b16 %v1587
    %v1658 = vunpack.c.h.b16 %v1587
    %v1659 = vunpack.c.l.b16 %v1588
    %v1660 = vunpack.c.l.b16 %v1589
    %v1661 = vunpack.c.h.b16 %v1589
    %v1662 = vunpack.c.l.b16 %v1590
    %v1663 = vunpack.c.l.b16 %v1591
    %v1664 = vunpack.c.h.b16 %v1591
    %v1665 = vunpack.c.l.b16 %v1592
    %v1666 = vunpack.c.l.b16 %v1593
    %v1667 = vunpack.c.h.b16 %v1593
    %v1668 = vunpack.c.l.b16 %v1594
    %v1669 = vunpack.c.l.b16 %v1595
    %v1670 = vunpack.c.h.b16 %v1595
    %v1671 = vunpack.c.l.b16 %v1596
    %v1672 = vunpack.c.l.b16 %v1597
    %v1673 = vunpack.c.h.b16 %v1597
    %v1674 = vunpack.c.l.b16 %v1598
    %v1675 = vunpack.c.l.b16 %v1599
    %v1676 = vunpack.c.h.b16 %v1599
    %v1677 = vunpack.c.l.b16 %v1600
    %v1678 = vunpack.c.l.b16 %v1601
    %v1679 = vunpack.c.h.b16 %v1601
    %v1680 = vunpack.c.l.b16 %v1602
    %v1681 = vunpack.c.l.b16 %v1603
    %v1682 = vunpack.c.h.b16 %v1603
    %v1683 = vunpack.c.l.b16 %v1604
    %v1684 = vunpack.c.l.b16 %v1605
    %v1685 = vunpack.c.h.b16 %v1605
    %v1686 = vunpack.c.l.b16 %v1606
    %v1687 = vpack.c.b16 %v1642, %v1639
    %v1688 = vpack.c.b16 %v1643, %v1640
    %v1689 = vpack.c.b16 %v1644, %v1641
    %v1690 = vpack.c.b16 %v1648, %v1645
    %v1691 = vpack.c.b16 %v1649, %v1646
    %v1692 = vpack.c.b16 %v1650, %v1647
    %v1693 = vpack.c.b16 %v1654, %v1651
    %v1694 = vpack.c.b16 %v1655, %v1652
    %v1695 = vpack.c.b16 %v1656, %v1653
    %v1696 = vpack.c.b16 %v1660, %v1657
    %v1697 = vpack.c.b16 %v1661, %v1658
    %v1698 = vpack.c.b16 %v1662, %v1659
    %v1699 = vpack.c.b16 %v1666, %v1663
    %v1700 = vpack.c.b16 %v1667, %v1664
    %v1701 = vpack.c.b16 %v1668, %v1665
    %v1702 = vpack.c.b16 %v1672, %v1669
    %v1703 = vpack.c.b16 %v1673, %v1670
    %v1704 = vpack.c.b16 %v1674, %v1671
    %v1705 = vpack.c.b16 %v1678, %v1675
    %v1706 = vpack.c.b16 %v1679, %v1676
    %v1707 = vpack.c.b16 %v1680, %v1677
    %v1708 = vpack.c.b16 %v1684, %v1681
    %v1709 = vpack.c.b16 %v1685, %v1682
    %v1710 = vpack.c.b16 %v1686, %v1683
    %1735 = vmatprep.subr.bf16.mxu0 %v1688
    %1736 = vmatpush1.bf16.msra.mxu0 %v1687
    %1737 = vmatprep.subr.bf16.mxu0 %v1691
    %1738 = vmatpush1.bf16.msra.mxu0 %v1690
    %1739 = vmatprep.subr.bf16.mxu0 %v1694
    %1740 = vmatpush1.bf16.msra.mxu0 %v1693
    %1741 = vmatprep.subr.bf16.mxu0 %v1697
    %1742 = vmatpush1.bf16.msra.mxu0 %v1696
    %1743 = vmatprep.subr.bf16.mxu0 %v1700
    %1744 = vmatpush1.bf16.msra.mxu0 %v1699
    %1745 = vmatprep.subr.bf16.mxu0 %v1703
    %1746 = vmatpush1.bf16.msra.mxu0 %v1702
    %1747 = vmatprep.subr.bf16.mxu0 %v1706
    %1748 = vmatpush1.bf16.msra.mxu0 %v1705
    %1749 = vmatprep.subr.bf16.mxu0 %v1709
    %1750 = vmatpush1.bf16.msra.mxu0 %v1708
    %1751 = vmatprep.subr.bf16.mxu0 0
    %1752 = vmatpush1.bf16.msra.mxu0 0
    %1753 = vmatprep.subr.bf16.mxu0 0
    %1754 = vmatpush1.bf16.msra.mxu0 0
    %1755 = vmatprep.subr.bf16.mxu0 0
    %1756 = vmatpush1.bf16.msra.mxu0 0
    %1757 = vmatprep.subr.bf16.mxu0 0
    %1758 = vmatpush1.bf16.msra.mxu0 0
    %1759 = vmatprep.subr.bf16.mxu0 0
    %1760 = vmatpush1.bf16.msra.mxu0 0
    %1761 = vmatprep.subr.bf16.mxu0 0
    %1762 = vmatpush1.bf16.msra.mxu0 0
    %1763 = vmatprep.subr.bf16.mxu0 0
    %1764 = vmatpush1.bf16.msra.mxu0 0
    %1765 = vmatprep.subr.bf16.mxu0 0
    %1766 = vmatpush1.bf16.msra.mxu0 0
    %1767 = vmatprep.mubr.bf16.mxu0 0
    %1768 = vmatmul.mubr.bf16.gmra.mrb[0].mxu0 %v1275
    %v1769 = vpop.f32.mrb[0].mxu0
    %v1770 = vadd.f32 0.0, %v1769
    %v1771 = vpop.f32.mrb[0].mxu0
    %v1772 = vadd.f32 0.0, %v1771
    %v1773 = vpop.f32.mrb[0].mxu0
    %v1774 = vpop.f32.mrb[0].mxu0
    %1775 = vdwg.mxu0
    %1776 = vmatprep.subr.bf16.mxu0 0
    %1777 = vmatpush1.bf16.msra.mxu0 %v1689
    %1778 = vmatprep.subr.bf16.mxu0 0
    %1779 = vmatpush1.bf16.msra.mxu0 %v1692
    %1780 = vmatprep.subr.bf16.mxu0 0
    %1781 = vmatpush1.bf16.msra.mxu0 %v1695
    %1782 = vmatprep.subr.bf16.mxu0 0
    %1783 = vmatpush1.bf16.msra.mxu0 %v1698
    %1784 = vmatprep.subr.bf16.mxu0 0
    %1785 = vmatpush1.bf16.msra.mxu0 %v1701
    %1786 = vmatprep.subr.bf16.mxu0 0
    %1787 = vmatpush1.bf16.msra.mxu0 %v1704
    %1788 = vmatprep.subr.bf16.mxu0 0
    %1789 = vmatpush1.bf16.msra.mxu0 %v1707
    %1790 = vmatprep.subr.bf16.mxu0 0
    %1791 = vmatpush1.bf16.msra.mxu0 %v1710
    %1792 = vmatprep.subr.bf16.mxu0 0
    %1793 = vmatpush1.bf16.msra.mxu0 0
    %1794 = vmatprep.subr.bf16.mxu0 0
    %1795 = vmatpush1.bf16.msra.mxu0 0
    %1796 = vmatprep.subr.bf16.mxu0 0
    %1797 = vmatpush1.bf16.msra.mxu0 0
    %1798 = vmatprep.subr.bf16.mxu0 0
    %1799 = vmatpush1.bf16.msra.mxu0 0
    %1800 = vmatprep.subr.bf16.mxu0 0
    %1801 = vmatpush1.bf16.msra.mxu0 0
    %1802 = vmatprep.subr.bf16.mxu0 0
    %1803 = vmatpush1.bf16.msra.mxu0 0
    %1804 = vmatprep.subr.bf16.mxu0 0
    %1805 = vmatpush1.bf16.msra.mxu0 0
    %1806 = vmatprep.subr.bf16.mxu0 0
    %1807 = vmatpush1.bf16.msra.mxu0 0
    %1808 = vmatprep.mubr.bf16.mxu0 0
    %1809 = vmatmul.mubr.bf16.gmra.mrb[0].mxu0 %v1275
    %v1810 = vpop.f32.mrb[0].mxu0
    %v1811 = vadd.f32 0.0, %v1810
    %v1812 = vpop.f32.mrb[0].mxu0
    %v1813 = vpop.f32.mrb[0].mxu0
    %v1814 = vpop.f32.mrb[0].mxu0
    %1815 = vdwg.mxu0
    %v1816 = vadd.f32 %v1529, %v1770
    %v1817 = vadd.f32 %v1531, %v1772
    %v1818 = vadd.f32 %v1570, %v1811
    %v1819 = vpack.c.bf16 %v1276, %v1276
    %v1820 = vld [vmem:[#allocation11] sm:$0xff]
    %v1821 = vld [vmem:[#allocation11 + $0x8] sm:$0xf]
    %v1822 = vld [vmem:[#allocation11 + $0xc] sm:$0xff]
    %v1823 = vld [vmem:[#allocation11 + $0x14] sm:$0xf]
    %v1824 = vld [vmem:[#allocation11 + $0x18] sm:$0xff]
    %v1825 = vld [vmem:[#allocation11 + $0x20] sm:$0xf]
    %v1826 = vld [vmem:[#allocation11 + $0x24] sm:$0xff]
    %v1827 = vld [vmem:[#allocation11 + $0x2c] sm:$0xf]
    %v1828 = vld [vmem:[#allocation11 + $0x30] sm:$0xff]
    %v1829 = vld [vmem:[#allocation11 + $0x38] sm:$0xf]
    %v1830 = vld [vmem:[#allocation11 + $0x3c] sm:$0xff]
    %v1831 = vld [vmem:[#allocation11 + $0x44] sm:$0xf]
    %v1832 = vld [vmem:[#allocation11 + $0x48] sm:$0xff]
    %v1833 = vld [vmem:[#allocation11 + $0x50] sm:$0xf]
    %v1834 = vld [vmem:[#allocation11 + $0x54] sm:$0xff]
    %v1835 = vld [vmem:[#allocation11 + $0x5c] sm:$0xf]
    %v1836 = vld [vmem:[#allocation11 + $0x60] sm:$0xff]
    %v1837 = vld [vmem:[#allocation11 + $0x68] sm:$0xf]
    %v1838 = vld [vmem:[#allocation11 + $0x6c] sm:$0xff]
    %v1839 = vld [vmem:[#allocation11 + $0x74] sm:$0xf]
    %v1840 = vld [vmem:[#allocation11 + $0x78] sm:$0xff]
    %v1841 = vld [vmem:[#allocation11 + $0x80] sm:$0xf]
    %v1842 = vld [vmem:[#allocation11 + $0x84] sm:$0xff]
    %v1843 = vld [vmem:[#allocation11 + $0x8c] sm:$0xf]
    %v1844 = vld [vmem:[#allocation11 + $0x90] sm:$0xff]
    %v1845 = vld [vmem:[#allocation11 + $0x98] sm:$0xf]
    %v1846 = vld [vmem:[#allocation11 + $0x9c] sm:$0xff]
    %v1847 = vld [vmem:[#allocation11 + $0xa4] sm:$0xf]
    %v1848 = vld [vmem:[#allocation11 + $0xa8] sm:$0xff]
    %v1849 = vld [vmem:[#allocation11 + $0xb0] sm:$0xf]
    %v1850 = vld [vmem:[#allocation11 + $0xb4] sm:$0xff]
    %v1851 = vld [vmem:[#allocation11 + $0xbc] sm:$0xf]
    %v1852 = vld [vmem:[%s11] sm:$0x7]
    %v1854 = vlaneseq
    %v1855 = vshrl.u32 %v1854, 7
    %v1856 = vsub.s32 0, %v1855
    %v1857 = vrot.slane %v1852, %v1856
    %v1858 = vlaneseq
    %v1859 = vshrl.u32 %v1858, 7
    %v1860 = vsub.s32 1, %v1859
    %v1861 = vrot.slane %v1852, %v1860
    %v1862 = vlaneseq
    %v1863 = vshrl.u32 %v1862, 7
    %v1864 = vsub.s32 2, %v1863
    %v1865 = vrot.slane %v1852, %v1864
    %v1901 = vunpack.c.l.b16 %v1820
    %v1902 = vunpack.c.h.b16 %v1820
    %v1903 = vunpack.c.l.b16 %v1821
    %v1904 = vunpack.c.l.b16 %v1822
    %v1905 = vunpack.c.h.b16 %v1822
    %v1906 = vunpack.c.l.b16 %v1823
    %v1907 = vunpack.c.l.b16 %v1824
    %v1908 = vunpack.c.h.b16 %v1824
    %v1909 = vunpack.c.l.b16 %v1825
    %v1910 = vunpack.c.l.b16 %v1826
    %v1911 = vunpack.c.h.b16 %v1826
    %v1912 = vunpack.c.l.b16 %v1827
    %v1913 = vunpack.c.l.b16 %v1828
    %v1914 = vunpack.c.h.b16 %v1828
    %v1915 = vunpack.c.l.b16 %v1829
    %v1916 = vunpack.c.l.b16 %v1830
    %v1917 = vunpack.c.h.b16 %v1830
    %v1918 = vunpack.c.l.b16 %v1831
    %v1919 = vunpack.c.l.b16 %v1832
    %v1920 = vunpack.c.h.b16 %v1832
    %v1921 = vunpack.c.l.b16 %v1833
    %v1922 = vunpack.c.l.b16 %v1834
    %v1923 = vunpack.c.h.b16 %v1834
    %v1924 = vunpack.c.l.b16 %v1835
    %v1925 = vunpack.c.l.b16 %v1836
    %v1926 = vunpack.c.h.b16 %v1836
    %v1927 = vunpack.c.l.b16 %v1837
    %v1928 = vunpack.c.l.b16 %v1838
    %v1929 = vunpack.c.h.b16 %v1838
    %v1930 = vunpack.c.l.b16 %v1839
    %v1931 = vunpack.c.l.b16 %v1840
    %v1932 = vunpack.c.h.b16 %v1840
    %v1933 = vunpack.c.l.b16 %v1841
    %v1934 = vunpack.c.l.b16 %v1842
    %v1935 = vunpack.c.h.b16 %v1842
    %v1936 = vunpack.c.l.b16 %v1843
    %v1937 = vunpack.c.l.b16 %v1844
    %v1938 = vunpack.c.h.b16 %v1844
    %v1939 = vunpack.c.l.b16 %v1845
    %v1940 = vunpack.c.l.b16 %v1846
    %v1941 = vunpack.c.h.b16 %v1846
    %v1942 = vunpack.c.l.b16 %v1847
    %v1943 = vunpack.c.l.b16 %v1848
    %v1944 = vunpack.c.h.b16 %v1848
    %v1945 = vunpack.c.l.b16 %v1849
    %v1946 = vunpack.c.l.b16 %v1850
    %v1947 = vunpack.c.h.b16 %v1850
    %v1948 = vunpack.c.l.b16 %v1851
    %v1949 = vpack.c.b16 %v1904, %v1901
    %v1950 = vpack.c.b16 %v1905, %v1902
    %v1951 = vpack.c.b16 %v1906, %v1903
    %v1952 = vpack.c.b16 %v1910, %v1907
    %v1953 = vpack.c.b16 %v1911, %v1908
    %v1954 = vpack.c.b16 %v1912, %v1909
    %v1955 = vpack.c.b16 %v1916, %v1913
    %v1956 = vpack.c.b16 %v1917, %v1914
    %v1957 = vpack.c.b16 %v1918, %v1915
    %v1958 = vpack.c.b16 %v1922, %v1919
    %v1959 = vpack.c.b16 %v1923, %v1920
    %v1960 = vpack.c.b16 %v1924, %v1921
    %v1961 = vpack.c.b16 %v1928, %v1925
    %v1962 = vpack.c.b16 %v1929, %v1926
    %v1963 = vpack.c.b16 %v1930, %v1927
    %v1964 = vpack.c.b16 %v1934, %v1931
    %v1965 = vpack.c.b16 %v1935, %v1932
    %v1966 = vpack.c.b16 %v1936, %v1933
    %v1967 = vpack.c.b16 %v1940, %v1937
    %v1968 = vpack.c.b16 %v1941, %v1938
    %v1969 = vpack.c.b16 %v1942, %v1939
    %v1970 = vpack.c.b16 %v1946, %v1943
    %v1971 = vpack.c.b16 %v1947, %v1944
    %v1972 = vpack.c.b16 %v1948, %v1945
    %1997 = vmatprep.subr.bf16.mxu0 %v1950
    %1998 = vmatpush1.bf16.msra.mxu0 %v1949
    %1999 = vmatprep.subr.bf16.mxu0 %v1953
    %2000 = vmatpush1.bf16.msra.mxu0 %v1952
    %2001 = vmatprep.subr.bf16.mxu0 %v1956
    %2002 = vmatpush1.bf16.msra.mxu0 %v1955
    %2003 = vmatprep.subr.bf16.mxu0 %v1959
    %2004 = vmatpush1.bf16.msra.mxu0 %v1958
    %2005 = vmatprep.subr.bf16.mxu0 %v1962
    %2006 = vmatpush1.bf16.msra.mxu0 %v1961
    %2007 = vmatprep.subr.bf16.mxu0 %v1965
    %2008 = vmatpush1.bf16.msra.mxu0 %v1964
    %2009 = vmatprep.subr.bf16.mxu0 %v1968
    %2010 = vmatpush1.bf16.msra.mxu0 %v1967
    %2011 = vmatprep.subr.bf16.mxu0 %v1971
    %2012 = vmatpush1.bf16.msra.mxu0 %v1970
    %2013 = vmatprep.subr.bf16.mxu0 0
    %2014 = vmatpush1.bf16.msra.mxu0 0
    %2015 = vmatprep.subr.bf16.mxu0 0
    %2016 = vmatpush1.bf16.msra.mxu0 0
    %2017 = vmatprep.subr.bf16.mxu0 0
    %2018 = vmatpush1.bf16.msra.mxu0 0
    %2019 = vmatprep.subr.bf16.mxu0 0
    %2020 = vmatpush1.bf16.msra.mxu0 0
    %2021 = vmatprep.subr.bf16.mxu0 0
    %2022 = vmatpush1.bf16.msra.mxu0 0
    %2023 = vmatprep.subr.bf16.mxu0 0
    %2024 = vmatpush1.bf16.msra.mxu0 0
    %2025 = vmatprep.subr.bf16.mxu0 0
    %2026 = vmatpush1.bf16.msra.mxu0 0
    %2027 = vmatprep.subr.bf16.mxu0 0
    %2028 = vmatpush1.bf16.msra.mxu0 0
    %2029 = vmatprep.mubr.bf16.mxu0 0
    %2030 = vmatmul.mubr.bf16.gmra.mrb[0].mxu0 %v1819
    %v2031 = vpop.f32.mrb[0].mxu0
    %v2032 = vadd.f32 %v1857, %v2031
    %v2033 = vpop.f32.mrb[0].mxu0
    %v2034 = vadd.f32 %v1861, %v2033
    %v2035 = vpop.f32.mrb[0].mxu0
    %v2036 = vpop.f32.mrb[0].mxu0
    %2037 = vdwg.mxu0
    %2038 = vmatprep.subr.bf16.mxu0 0
    %2039 = vmatpush1.bf16.msra.mxu0 %v1951
    %2040 = vmatprep.subr.bf16.mxu0 0
    %2041 = vmatpush1.bf16.msra.mxu0 %v1954
    %2042 = vmatprep.subr.bf16.mxu0 0
    %2043 = vmatpush1.bf16.msra.mxu0 %v1957
    %2044 = vmatprep.subr.bf16.mxu0 0
    %2045 = vmatpush1.bf16.msra.mxu0 %v1960
    %2046 = vmatprep.subr.bf16.mxu0 0
    %2047 = vmatpush1.bf16.msra.mxu0 %v1963
    %2048 = vmatprep.subr.bf16.mxu0 0
    %2049 = vmatpush1.bf16.msra.mxu0 %v1966
    %2050 = vmatprep.subr.bf16.mxu0 0
    %2051 = vmatpush1.bf16.msra.mxu0 %v1969
    %2052 = vmatprep.subr.bf16.mxu0 0
    %2053 = vmatpush1.bf16.msra.mxu0 %v1972
    %2054 = vmatprep.subr.bf16.mxu0 0
    %2055 = vmatpush1.bf16.msra.mxu0 0
    %2056 = vmatprep.subr.bf16.mxu0 0
    %2057 = vmatpush1.bf16.msra.mxu0 0
    %2058 = vmatprep.subr.bf16.mxu0 0
    %2059 = vmatpush1.bf16.msra.mxu0 0
    %2060 = vmatprep.subr.bf16.mxu0 0
    %2061 = vmatpush1.bf16.msra.mxu0 0
    %2062 = vmatprep.subr.bf16.mxu0 0
    %2063 = vmatpush1.bf16.msra.mxu0 0
    %2064 = vmatprep.subr.bf16.mxu0 0
    %2065 = vmatpush1.bf16.msra.mxu0 0
    %2066 = vmatprep.subr.bf16.mxu0 0
    %2067 = vmatpush1.bf16.msra.mxu0 0
    %2068 = vmatprep.subr.bf16.mxu0 0
    %2069 = vmatpush1.bf16.msra.mxu0 0
    %2070 = vmatprep.mubr.bf16.mxu0 0
    %2071 = vmatmul.mubr.bf16.gmra.mrb[0].mxu0 %v1819
    %v2072 = vpop.f32.mrb[0].mxu0
    %v2073 = vadd.f32 %v1865, %v2072
    %v2074 = vpop.f32.mrb[0].mxu0
    %v2075 = vpop.f32.mrb[0].mxu0
    %v2076 = vpop.f32.mrb[0].mxu0
    %2077 = vdwg.mxu0
    %v2078 = vadd.f32 %v1816, %v2032
    %v2079 = vxor.u32 %v2078, 2147483648
    %v2080 = vmul.f32 %v2079, 1.442695
    %v2081 = vpow.pop %v2080
    %v2082 = vadd.f32 %v2081, 1.0
    %v2083 = vrcp.pop %v2082
    %v2084 = vmul.f32 1.0, %v2083
    %v2085 = vadd.f32 %v1817, %v2034
    %v2086 = vxor.u32 %v2085, 2147483648
    %v2087 = vmul.f32 %v2086, 1.442695
    %v2088 = vpow.pop %v2087
    %v2089 = vadd.f32 %v2088, 1.0
    %v2090 = vrcp.pop %v2089
    %v2091 = vmul.f32 1.0, %v2090
    %v2092 = vmul.f32 %v2084, %v2073
    %v2093 = vadd.f32 %v1818, %v2092
    %v2094 = vtanh.pop %v2093
    %v2095 = vsub.f32 1.0, %v2091
    %v2096 = vmul.f32 %v2095, %v2094
    %v2097 = vmul.f32 %v2091, %v1276
    %v2098 = vadd.f32 %v2096, %v2097
    %2099 = vst [vmem:[#allocation20] sm:$0xff] %v2098
    %v2100 = vld [vmem:[%s212] sm:$0xff]
    %v2101 = vpack.c.bf16 %v2098, %v2098
    %v2102 = vld [vmem:[#allocation13] sm:$0xff]
    %v2103 = vld [vmem:[#allocation13 + $0x8] sm:$0xf]
    %v2104 = vld [vmem:[#allocation13 + $0xc] sm:$0xff]
    %v2105 = vld [vmem:[#allocation13 + $0x14] sm:$0xf]
    %v2106 = vld [vmem:[#allocation13 + $0x18] sm:$0xff]
    %v2107 = vld [vmem:[#allocation13 + $0x20] sm:$0xf]
    %v2108 = vld [vmem:[#allocation13 + $0x24] sm:$0xff]
    %v2109 = vld [vmem:[#allocation13 + $0x2c] sm:$0xf]
    %v2110 = vld [vmem:[#allocation13 + $0x30] sm:$0xff]
    %v2111 = vld [vmem:[#allocation13 + $0x38] sm:$0xf]
    %v2112 = vld [vmem:[#allocation13 + $0x3c] sm:$0xff]
    %v2113 = vld [vmem:[#allocation13 + $0x44] sm:$0xf]
    %v2114 = vld [vmem:[#allocation13 + $0x48] sm:$0xff]
    %v2115 = vld [vmem:[#allocation13 + $0x50] sm:$0xf]
    %v2116 = vld [vmem:[#allocation13 + $0x54] sm:$0xff]
    %v2117 = vld [vmem:[#allocation13 + $0x5c] sm:$0xf]
    %v2118 = vld [vmem:[#allocation13 + $0x60] sm:$0xff]
    %v2119 = vld [vmem:[#allocation13 + $0x68] sm:$0xf]
    %v2120 = vld [vmem:[#allocation13 + $0x6c] sm:$0xff]
    %v2121 = vld [vmem:[#allocation13 + $0x74] sm:$0xf]
    %v2122 = vld [vmem:[#allocation13 + $0x78] sm:$0xff]
    %v2123 = vld [vmem:[#allocation13 + $0x80] sm:$0xf]
    %v2124 = vld [vmem:[#allocation13 + $0x84] sm:$0xff]
    %v2125 = vld [vmem:[#allocation13 + $0x8c] sm:$0xf]
    %v2126 = vld [vmem:[#allocation13 + $0x90] sm:$0xff]
    %v2127 = vld [vmem:[#allocation13 + $0x98] sm:$0xf]
    %v2128 = vld [vmem:[#allocation13 + $0x9c] sm:$0xff]
    %v2129 = vld [vmem:[#allocation13 + $0xa4] sm:$0xf]
    %v2130 = vld [vmem:[#allocation13 + $0xa8] sm:$0xff]
    %v2131 = vld [vmem:[#allocation13 + $0xb0] sm:$0xf]
    %v2132 = vld [vmem:[#allocation13 + $0xb4] sm:$0xff]
    %v2133 = vld [vmem:[#allocation13 + $0xbc] sm:$0xf]
    %v2134 = vld [vmem:[%s14] sm:$0x7]
    %v2136 = vlaneseq
    %v2137 = vshrl.u32 %v2136, 7
    %v2138 = vsub.s32 0, %v2137
    %v2139 = vrot.slane %v2134, %v2138
    %v2140 = vlaneseq
    %v2141 = vshrl.u32 %v2140, 7
    %v2142 = vsub.s32 1, %v2141
    %v2143 = vrot.slane %v2134, %v2142
    %v2144 = vlaneseq
    %v2145 = vshrl.u32 %v2144, 7
    %v2146 = vsub.s32 2, %v2145
    %v2147 = vrot.slane %v2134, %v2146
    %v2183 = vunpack.c.l.b16 %v2102
    %v2184 = vunpack.c.h.b16 %v2102
    %v2185 = vunpack.c.l.b16 %v2103
    %v2186 = vunpack.c.l.b16 %v2104
    %v2187 = vunpack.c.h.b16 %v2104
    %v2188 = vunpack.c.l.b16 %v2105
    %v2189 = vunpack.c.l.b16 %v2106
    %v2190 = vunpack.c.h.b16 %v2106
    %v2191 = vunpack.c.l.b16 %v2107
    %v2192 = vunpack.c.l.b16 %v2108
    %v2193 = vunpack.c.h.b16 %v2108
    %v2194 = vunpack.c.l.b16 %v2109
    %v2195 = vunpack.c.l.b16 %v2110
    %v2196 = vunpack.c.h.b16 %v2110
    %v2197 = vunpack.c.l.b16 %v2111
    %v2198 = vunpack.c.l.b16 %v2112
    %v2199 = vunpack.c.h.b16 %v2112
    %v2200 = vunpack.c.l.b16 %v2113
    %v2201 = vunpack.c.l.b16 %v2114
    %v2202 = vunpack.c.h.b16 %v2114
    %v2203 = vunpack.c.l.b16 %v2115
    %v2204 = vunpack.c.l.b16 %v2116
    %v2205 = vunpack.c.h.b16 %v2116
    %v2206 = vunpack.c.l.b16 %v2117
    %v2207 = vunpack.c.l.b16 %v2118
    %v2208 = vunpack.c.h.b16 %v2118
    %v2209 = vunpack.c.l.b16 %v2119
    %v2210 = vunpack.c.l.b16 %v2120
    %v2211 = vunpack.c.h.b16 %v2120
    %v2212 = vunpack.c.l.b16 %v2121
    %v2213 = vunpack.c.l.b16 %v2122
    %v2214 = vunpack.c.h.b16 %v2122
    %v2215 = vunpack.c.l.b16 %v2123
    %v2216 = vunpack.c.l.b16 %v2124
    %v2217 = vunpack.c.h.b16 %v2124
    %v2218 = vunpack.c.l.b16 %v2125
    %v2219 = vunpack.c.l.b16 %v2126
    %v2220 = vunpack.c.h.b16 %v2126
    %v2221 = vunpack.c.l.b16 %v2127
    %v2222 = vunpack.c.l.b16 %v2128
    %v2223 = vunpack.c.h.b16 %v2128
    %v2224 = vunpack.c.l.b16 %v2129
    %v2225 = vunpack.c.l.b16 %v2130
    %v2226 = vunpack.c.h.b16 %v2130
    %v2227 = vunpack.c.l.b16 %v2131
    %v2228 = vunpack.c.l.b16 %v2132
    %v2229 = vunpack.c.h.b16 %v2132
    %v2230 = vunpack.c.l.b16 %v2133
    %v2231 = vpack.c.b16 %v2186, %v2183
    %v2232 = vpack.c.b16 %v2187, %v2184
    %v2233 = vpack.c.b16 %v2188, %v2185
    %v2234 = vpack.c.b16 %v2192, %v2189
    %v2235 = vpack.c.b16 %v2193, %v2190
    %v2236 = vpack.c.b16 %v2194, %v2191
    %v2237 = vpack.c.b16 %v2198, %v2195
    %v2238 = vpack.c.b16 %v2199, %v2196
    %v2239 = vpack.c.b16 %v2200, %v2197
    %v2240 = vpack.c.b16 %v2204, %v2201
    %v2241 = vpack.c.b16 %v2205, %v2202
    %v2242 = vpack.c.b16 %v2206, %v2203
    %v2243 = vpack.c.b16 %v2210, %v2207
    %v2244 = vpack.c.b16 %v2211, %v2208
    %v2245 = vpack.c.b16 %v2212, %v2209
    %v2246 = vpack.c.b16 %v2216, %v2213
    %v2247 = vpack.c.b16 %v2217, %v2214
    %v2248 = vpack.c.b16 %v2218, %v2215
    %v2249 = vpack.c.b16 %v2222, %v2219
    %v2250 = vpack.c.b16 %v2223, %v2220
    %v2251 = vpack.c.b16 %v2224, %v2221
    %v2252 = vpack.c.b16 %v2228, %v2225
    %v2253 = vpack.c.b16 %v2229, %v2226
    %v2254 = vpack.c.b16 %v2230, %v2227
    %2279 = vmatprep.subr.bf16.mxu0 %v2232
    %2280 = vmatpush1.bf16.msra.mxu0 %v2231
    %2281 = vmatprep.subr.bf16.mxu0 %v2235
    %2282 = vmatpush1.bf16.msra.mxu0 %v2234
    %2283 = vmatprep.subr.bf16.mxu0 %v2238
    %2284 = vmatpush1.bf16.msra.mxu0 %v2237
    %2285 = vmatprep.subr.bf16.mxu0 %v2241
    %2286 = vmatpush1.bf16.msra.mxu0 %v2240
    %2287 = vmatprep.subr.bf16.mxu0 %v2244
    %2288 = vmatpush1.bf16.msra.mxu0 %v2243
    %2289 = vmatprep.subr.bf16.mxu0 %v2247
    %2290 = vmatpush1.bf16.msra.mxu0 %v2246
    %2291 = vmatprep.subr.bf16.mxu0 %v2250
    %2292 = vmatpush1.bf16.msra.mxu0 %v2249
    %2293 = vmatprep.subr.bf16.mxu0 %v2253
    %2294 = vmatpush1.bf16.msra.mxu0 %v2252
    %2295 = vmatprep.subr.bf16.mxu0 0
    %2296 = vmatpush1.bf16.msra.mxu0 0
    %2297 = vmatprep.subr.bf16.mxu0 0
    %2298 = vmatpush1.bf16.msra.mxu0 0
    %2299 = vmatprep.subr.bf16.mxu0 0
    %2300 = vmatpush1.bf16.msra.mxu0 0
    %2301 = vmatprep.subr.bf16.mxu0 0
    %2302 = vmatpush1.bf16.msra.mxu0 0
    %2303 = vmatprep.subr.bf16.mxu0 0
    %2304 = vmatpush1.bf16.msra.mxu0 0
    %2305 = vmatprep.subr.bf16.mxu0 0
    %2306 = vmatpush1.bf16.msra.mxu0 0
    %2307 = vmatprep.subr.bf16.mxu0 0
    %2308 = vmatpush1.bf16.msra.mxu0 0
    %2309 = vmatprep.subr.bf16.mxu0 0
    %2310 = vmatpush1.bf16.msra.mxu0 0
    %2311 = vmatprep.mubr.bf16.mxu0 0
    %2312 = vmatmul.mubr.bf16.gmra.mrb[0].mxu0 %v2101
    %v2313 = vpop.f32.mrb[0].mxu0
    %v2314 = vadd.f32 %v2139, %v2313
    %v2315 = vpop.f32.mrb[0].mxu0
    %v2316 = vadd.f32 %v2143, %v2315
    %v2317 = vpop.f32.mrb[0].mxu0
    %v2318 = vpop.f32.mrb[0].mxu0
    %2319 = vdwg.mxu0
    %2320 = vmatprep.subr.bf16.mxu0 0
    %2321 = vmatpush1.bf16.msra.mxu0 %v2233
    %2322 = vmatprep.subr.bf16.mxu0 0
    %2323 = vmatpush1.bf16.msra.mxu0 %v2236
    %2324 = vmatprep.subr.bf16.mxu0 0
    %2325 = vmatpush1.bf16.msra.mxu0 %v2239
    %2326 = vmatprep.subr.bf16.mxu0 0
    %2327 = vmatpush1.bf16.msra.mxu0 %v2242
    %2328 = vmatprep.subr.bf16.mxu0 0
    %2329 = vmatpush1.bf16.msra.mxu0 %v2245
    %2330 = vmatprep.subr.bf16.mxu0 0
    %2331 = vmatpush1.bf16.msra.mxu0 %v2248
    %2332 = vmatprep.subr.bf16.mxu0 0
    %2333 = vmatpush1.bf16.msra.mxu0 %v2251
    %2334 = vmatprep.subr.bf16.mxu0 0
    %2335 = vmatpush1.bf16.msra.mxu0 %v2254
    %2336 = vmatprep.subr.bf16.mxu0 0
    %2337 = vmatpush1.bf16.msra.mxu0 0
    %2338 = vmatprep.subr.bf16.mxu0 0
    %2339 = vmatpush1.bf16.msra.mxu0 0
    %2340 = vmatprep.subr.bf16.mxu0 0
    %2341 = vmatpush1.bf16.msra.mxu0 0
    %2342 = vmatprep.subr.bf16.mxu0 0
    %2343 = vmatpush1.bf16.msra.mxu0 0
    %2344 = vmatprep.subr.bf16.mxu0 0
    %2345 = vmatpush1.bf16.msra.mxu0 0
    %2346 = vmatprep.subr.bf16.mxu0 0
    %2347 = vmatpush1.bf16.msra.mxu0 0
    %2348 = vmatprep.subr.bf16.mxu0 0
    %2349 = vmatpush1.bf16.msra.mxu0 0
    %2350 = vmatprep.subr.bf16.mxu0 0
    %2351 = vmatpush1.bf16.msra.mxu0 0
    %2352 = vmatprep.mubr.bf16.mxu0 0
    %2353 = vmatmul.mubr.bf16.gmra.mrb[0].mxu0 %v2101
    %v2354 = vpop.f32.mrb[0].mxu0
    %v2355 = vadd.f32 %v2147, %v2354
    %v2356 = vpop.f32.mrb[0].mxu0
    %v2357 = vpop.f32.mrb[0].mxu0
    %v2358 = vpop.f32.mrb[0].mxu0
    %2359 = vdwg.mxu0
    %v2360 = vpack.c.bf16 %v2100, %v2100
    %v2361 = vld [vmem:[#allocation14] sm:$0xff]
    %v2362 = vld [vmem:[#allocation14 + $0x8] sm:$0xf]
    %v2363 = vld [vmem:[#allocation14 + $0xc] sm:$0xff]
    %v2364 = vld [vmem:[#allocation14 + $0x14] sm:$0xf]
    %v2365 = vld [vmem:[#allocation14 + $0x18] sm:$0xff]
    %v2366 = vld [vmem:[#allocation14 + $0x20] sm:$0xf]
    %v2367 = vld [vmem:[#allocation14 + $0x24] sm:$0xff]
    %v2368 = vld [vmem:[#allocation14 + $0x2c] sm:$0xf]
    %v2369 = vld [vmem:[#allocation14 + $0x30] sm:$0xff]
    %v2370 = vld [vmem:[#allocation14 + $0x38] sm:$0xf]
    %v2371 = vld [vmem:[#allocation14 + $0x3c] sm:$0xff]
    %v2372 = vld [vmem:[#allocation14 + $0x44] sm:$0xf]
    %v2373 = vld [vmem:[#allocation14 + $0x48] sm:$0xff]
    %v2374 = vld [vmem:[#allocation14 + $0x50] sm:$0xf]
    %v2375 = vld [vmem:[#allocation14 + $0x54] sm:$0xff]
    %v2376 = vld [vmem:[#allocation14 + $0x5c] sm:$0xf]
    %v2377 = vld [vmem:[#allocation14 + $0x60] sm:$0xff]
    %v2378 = vld [vmem:[#allocation14 + $0x68] sm:$0xf]
    %v2379 = vld [vmem:[#allocation14 + $0x6c] sm:$0xff]
    %v2380 = vld [vmem:[#allocation14 + $0x74] sm:$0xf]
    %v2381 = vld [vmem:[#allocation14 + $0x78] sm:$0xff]
    %v2382 = vld [vmem:[#allocation14 + $0x80] sm:$0xf]
    %v2383 = vld [vmem:[#allocation14 + $0x84] sm:$0xff]
    %v2384 = vld [vmem:[#allocation14 + $0x8c] sm:$0xf]
    %v2385 = vld [vmem:[#allocation14 + $0x90] sm:$0xff]
    %v2386 = vld [vmem:[#allocation14 + $0x98] sm:$0xf]
    %v2387 = vld [vmem:[#allocation14 + $0x9c] sm:$0xff]
    %v2388 = vld [vmem:[#allocation14 + $0xa4] sm:$0xf]
    %v2389 = vld [vmem:[#allocation14 + $0xa8] sm:$0xff]
    %v2390 = vld [vmem:[#allocation14 + $0xb0] sm:$0xf]
    %v2391 = vld [vmem:[#allocation14 + $0xb4] sm:$0xff]
    %v2392 = vld [vmem:[#allocation14 + $0xbc] sm:$0xf]
    %v2393 = vld [vmem:[%s15] sm:$0x7]
    %v2395 = vlaneseq
    %v2396 = vshrl.u32 %v2395, 7
    %v2397 = vsub.s32 0, %v2396
    %v2398 = vrot.slane %v2393, %v2397
    %v2399 = vlaneseq
    %v2400 = vshrl.u32 %v2399, 7
    %v2401 = vsub.s32 1, %v2400
    %v2402 = vrot.slane %v2393, %v2401
    %v2403 = vlaneseq
    %v2404 = vshrl.u32 %v2403, 7
    %v2405 = vsub.s32 2, %v2404
    %v2406 = vrot.slane %v2393, %v2405
    %v2442 = vunpack.c.l.b16 %v2361
    %v2443 = vunpack.c.h.b16 %v2361
    %v2444 = vunpack.c.l.b16 %v2362
    %v2445 = vunpack.c.l.b16 %v2363
    %v2446 = vunpack.c.h.b16 %v2363
    %v2447 = vunpack.c.l.b16 %v2364
    %v2448 = vunpack.c.l.b16 %v2365
    %v2449 = vunpack.c.h.b16 %v2365
    %v2450 = vunpack.c.l.b16 %v2366
    %v2451 = vunpack.c.l.b16 %v2367
    %v2452 = vunpack.c.h.b16 %v2367
    %v2453 = vunpack.c.l.b16 %v2368
    %v2454 = vunpack.c.l.b16 %v2369
    %v2455 = vunpack.c.h.b16 %v2369
    %v2456 = vunpack.c.l.b16 %v2370
    %v2457 = vunpack.c.l.b16 %v2371
    %v2458 = vunpack.c.h.b16 %v2371
    %v2459 = vunpack.c.l.b16 %v2372
    %v2460 = vunpack.c.l.b16 %v2373
    %v2461 = vunpack.c.h.b16 %v2373
    %v2462 = vunpack.c.l.b16 %v2374
    %v2463 = vunpack.c.l.b16 %v2375
    %v2464 = vunpack.c.h.b16 %v2375
    %v2465 = vunpack.c.l.b16 %v2376
    %v2466 = vunpack.c.l.b16 %v2377
    %v2467 = vunpack.c.h.b16 %v2377
    %v2468 = vunpack.c.l.b16 %v2378
    %v2469 = vunpack.c.l.b16 %v2379
    %v2470 = vunpack.c.h.b16 %v2379
    %v2471 = vunpack.c.l.b16 %v2380
    %v2472 = vunpack.c.l.b16 %v2381
    %v2473 = vunpack.c.h.b16 %v2381
    %v2474 = vunpack.c.l.b16 %v2382
    %v2475 = vunpack.c.l.b16 %v2383
    %v2476 = vunpack.c.h.b16 %v2383
    %v2477 = vunpack.c.l.b16 %v2384
    %v2478 = vunpack.c.l.b16 %v2385
    %v2479 = vunpack.c.h.b16 %v2385
    %v2480 = vunpack.c.l.b16 %v2386
    %v2481 = vunpack.c.l.b16 %v2387
    %v2482 = vunpack.c.h.b16 %v2387
    %v2483 = vunpack.c.l.b16 %v2388
    %v2484 = vunpack.c.l.b16 %v2389
    %v2485 = vunpack.c.h.b16 %v2389
    %v2486 = vunpack.c.l.b16 %v2390
    %v2487 = vunpack.c.l.b16 %v2391
    %v2488 = vunpack.c.h.b16 %v2391
    %v2489 = vunpack.c.l.b16 %v2392
    %v2490 = vpack.c.b16 %v2445, %v2442
    %v2491 = vpack.c.b16 %v2446, %v2443
    %v2492 = vpack.c.b16 %v2447, %v2444
    %v2493 = vpack.c.b16 %v2451, %v2448
    %v2494 = vpack.c.b16 %v2452, %v2449
    %v2495 = vpack.c.b16 %v2453, %v2450
    %v2496 = vpack.c.b16 %v2457, %v2454
    %v2497 = vpack.c.b16 %v2458, %v2455
    %v2498 = vpack.c.b16 %v2459, %v2456
    %v2499 = vpack.c.b16 %v2463, %v2460
    %v2500 = vpack.c.b16 %v2464, %v2461
    %v2501 = vpack.c.b16 %v2465, %v2462
    %v2502 = vpack.c.b16 %v2469, %v2466
    %v2503 = vpack.c.b16 %v2470, %v2467
    %v2504 = vpack.c.b16 %v2471, %v2468
    %v2505 = vpack.c.b16 %v2475, %v2472
    %v2506 = vpack.c.b16 %v2476, %v2473
    %v2507 = vpack.c.b16 %v2477, %v2474
    %v2508 = vpack.c.b16 %v2481, %v2478
    %v2509 = vpack.c.b16 %v2482, %v2479
    %v2510 = vpack.c.b16 %v2483, %v2480
    %v2511 = vpack.c.b16 %v2487, %v2484
    %v2512 = vpack.c.b16 %v2488, %v2485
    %v2513 = vpack.c.b16 %v2489, %v2486
    %2538 = vmatprep.subr.bf16.mxu0 %v2491
    %2539 = vmatpush1.bf16.msra.mxu0 %v2490
    %2540 = vmatprep.subr.bf16.mxu0 %v2494
    %2541 = vmatpush1.bf16.msra.mxu0 %v2493
    %2542 = vmatprep.subr.bf16.mxu0 %v2497
    %2543 = vmatpush1.bf16.msra.mxu0 %v2496
    %2544 = vmatprep.subr.bf16.mxu0 %v2500
    %2545 = vmatpush1.bf16.msra.mxu0 %v2499
    %2546 = vmatprep.subr.bf16.mxu0 %v2503
    %2547 = vmatpush1.bf16.msra.mxu0 %v2502
    %2548 = vmatprep.subr.bf16.mxu0 %v2506
    %2549 = vmatpush1.bf16.msra.mxu0 %v2505
    %2550 = vmatprep.subr.bf16.mxu0 %v2509
    %2551 = vmatpush1.bf16.msra.mxu0 %v2508
    %2552 = vmatprep.subr.bf16.mxu0 %v2512
    %2553 = vmatpush1.bf16.msra.mxu0 %v2511
    %2554 = vmatprep.subr.bf16.mxu0 0
    %2555 = vmatpush1.bf16.msra.mxu0 0
    %2556 = vmatprep.subr.bf16.mxu0 0
    %2557 = vmatpush1.bf16.msra.mxu0 0
    %2558 = vmatprep.subr.bf16.mxu0 0
    %2559 = vmatpush1.bf16.msra.mxu0 0
    %2560 = vmatprep.subr.bf16.mxu0 0
    %2561 = vmatpush1.bf16.msra.mxu0 0
    %2562 = vmatprep.subr.bf16.mxu0 0
    %2563 = vmatpush1.bf16.msra.mxu0 0
    %2564 = vmatprep.subr.bf16.mxu0 0
    %2565 = vmatpush1.bf16.msra.mxu0 0
    %2566 = vmatprep.subr.bf16.mxu0 0
    %2567 = vmatpush1.bf16.msra.mxu0 0
    %2568 = vmatprep.subr.bf16.mxu0 0
    %2569 = vmatpush1.bf16.msra.mxu0 0
    %2570 = vmatprep.mubr.bf16.mxu0 0
    %2571 = vmatmul.mubr.bf16.gmra.mrb[0].mxu0 %v2360
    %v2572 = vpop.f32.mrb[0].mxu0
    %v2573 = vadd.f32 %v2398, %v2572
    %v2574 = vpop.f32.mrb[0].mxu0
    %v2575 = vadd.f32 %v2402, %v2574
    %v2576 = vpop.f32.mrb[0].mxu0
    %v2577 = vpop.f32.mrb[0].mxu0
    %2578 = vdwg.mxu0
    %2579 = vmatprep.subr.bf16.mxu0 0
    %2580 = vmatpush1.bf16.msra.mxu0 %v2492
    %2581 = vmatprep.subr.bf16.mxu0 0
    %2582 = vmatpush1.bf16.msra.mxu0 %v2495
    %2583 = vmatprep.subr.bf16.mxu0 0
    %2584 = vmatpush1.bf16.msra.mxu0 %v2498
    %2585 = vmatprep.subr.bf16.mxu0 0
    %2586 = vmatpush1.bf16.msra.mxu0 %v2501
    %2587 = vmatprep.subr.bf16.mxu0 0
    %2588 = vmatpush1.bf16.msra.mxu0 %v2504
    %2589 = vmatprep.subr.bf16.mxu0 0
    %2590 = vmatpush1.bf16.msra.mxu0 %v2507
    %2591 = vmatprep.subr.bf16.mxu0 0
    %2592 = vmatpush1.bf16.msra.mxu0 %v2510
    %2593 = vmatprep.subr.bf16.mxu0 0
    %2594 = vmatpush1.bf16.msra.mxu0 %v2513
    %2595 = vmatprep.subr.bf16.mxu0 0
    %2596 = vmatpush1.bf16.msra.mxu0 0
    %2597 = vmatprep.subr.bf16.mxu0 0
    %2598 = vmatpush1.bf16.msra.mxu0 0
    %2599 = vmatprep.subr.bf16.mxu0 0
    %2600 = vmatpush1.bf16.msra.mxu0 0
    %2601 = vmatprep.subr.bf16.mxu0 0
    %2602 = vmatpush1.bf16.msra.mxu0 0
    %2603 = vmatprep.subr.bf16.mxu0 0
    %2604 = vmatpush1.bf16.msra.mxu0 0
    %2605 = vmatprep.subr.bf16.mxu0 0
    %2606 = vmatpush1.bf16.msra.mxu0 0
    %2607 = vmatprep.subr.bf16.mxu0 0
    %2608 = vmatpush1.bf16.msra.mxu0 0
    %2609 = vmatprep.subr.bf16.mxu0 0
    %2610 = vmatpush1.bf16.msra.mxu0 0
    %2611 = vmatprep.mubr.bf16.mxu0 0
    %2612 = vmatmul.mubr.bf16.gmra.mrb[0].mxu0 %v2360
    %v2613 = vpop.f32.mrb[0].mxu0
    %v2614 = vadd.f32 %v2406, %v2613
    %v2615 = vpop.f32.mrb[0].mxu0
    %v2616 = vpop.f32.mrb[0].mxu0
    %v2617 = vpop.f32.mrb[0].mxu0
    %2618 = vdwg.mxu0
    %v2619 = vadd.f32 %v2314, %v2573
    %v2620 = vxor.u32 %v2619, 2147483648
    %v2621 = vmul.f32 %v2620, 1.442695
    %v2622 = vpow.pop %v2621
    %v2623 = vadd.f32 %v2622, 1.0
    %v2624 = vrcp.pop %v2623
    %v2625 = vmul.f32 1.0, %v2624
    %v2626 = vadd.f32 %v2316, %v2575
    %v2627 = vxor.u32 %v2626, 2147483648
    %v2628 = vmul.f32 %v2627, 1.442695
    %v2629 = vpow.pop %v2628
    %v2630 = vadd.f32 %v2629, 1.0
    %v2631 = vrcp.pop %v2630
    %v2632 = vmul.f32 1.0, %v2631
    %v2633 = vmul.f32 %v2625, %v2614
    %v2634 = vadd.f32 %v2355, %v2633
    %v2635 = vtanh.pop %v2634
    %v2636 = vsub.f32 1.0, %v2632
    %v2637 = vmul.f32 %v2636, %v2635
    %v2638 = vmul.f32 %v2632, %v2100
    %v2639 = vadd.f32 %v2637, %v2638
    %s2640 = scalar_lea.vmem [#allocation20], 8
    %2641 = vst [vmem:[%s2640] sm:$0xff] %v2639
    %v2642 = vpack.c.bf16 %v2639, %v2639
    %v2643 = vld [vmem:[#allocation16] sm:$0xf]
    %v2644 = vld [vmem:[#allocation16 + $0x4] sm:$0xf]
    %v2645 = vld [vmem:[#allocation16 + $0x8] sm:$0xf]
    %v2646 = vld [vmem:[#allocation16 + $0xc] sm:$0xf]
    %v2647 = vld [vmem:[#allocation16 + $0x10] sm:$0xf]
    %v2648 = vld [vmem:[#allocation16 + $0x14] sm:$0xf]
    %v2649 = vld [vmem:[#allocation16 + $0x18] sm:$0xf]
    %v2650 = vld [vmem:[#allocation16 + $0x1c] sm:$0xf]
    %v2651 = vld [vmem:[#allocation16 + $0x20] sm:$0xf]
    %v2652 = vld [vmem:[#allocation16 + $0x24] sm:$0xf]
    %v2653 = vld [vmem:[#allocation16 + $0x28] sm:$0xf]
    %v2654 = vld [vmem:[#allocation16 + $0x2c] sm:$0xf]
    %v2655 = vld [vmem:[#allocation16 + $0x30] sm:$0xf]
    %v2656 = vld [vmem:[#allocation16 + $0x34] sm:$0xf]
    %v2657 = vld [vmem:[#allocation16 + $0x38] sm:$0xf]
    %v2658 = vld [vmem:[#allocation16 + $0x3c] sm:$0xf]
    %v2659 = vld [vmem:[#allocation17] sm:$0xf]
    %v2660 = vld [vmem:[#allocation17 + $0x4] sm:$0xf]
    %v2661 = vld [vmem:[#allocation17 + $0x8] sm:$0xf]
    %v2662 = vld [vmem:[#allocation17 + $0xc] sm:$0xf]
    %v2663 = vld [vmem:[#allocation17 + $0x10] sm:$0xf]
    %v2664 = vld [vmem:[#allocation17 + $0x14] sm:$0xf]
    %v2665 = vld [vmem:[#allocation17 + $0x18] sm:$0xf]
    %v2666 = vld [vmem:[#allocation17 + $0x1c] sm:$0xf]
    %v2667 = vld [vmem:[#allocation17 + $0x20] sm:$0xf]
    %v2668 = vld [vmem:[#allocation17 + $0x24] sm:$0xf]
    %v2669 = vld [vmem:[#allocation17 + $0x28] sm:$0xf]
    %v2670 = vld [vmem:[#allocation17 + $0x2c] sm:$0xf]
    %v2671 = vld [vmem:[#allocation17 + $0x30] sm:$0xf]
    %v2672 = vld [vmem:[#allocation17 + $0x34] sm:$0xf]
    %v2673 = vld [vmem:[#allocation17 + $0x38] sm:$0xf]
    %v2674 = vld [vmem:[#allocation17 + $0x3c] sm:$0xf]
    %v2691 = vunpack.c.l.b16 %v2659
    %v2692 = vunpack.c.l.b16 %v2660
    %v2693 = vunpack.c.l.b16 %v2661
    %v2694 = vunpack.c.l.b16 %v2662
    %v2695 = vunpack.c.l.b16 %v2663
    %v2696 = vunpack.c.l.b16 %v2664
    %v2697 = vunpack.c.l.b16 %v2665
    %v2698 = vunpack.c.l.b16 %v2666
    %v2699 = vunpack.c.l.b16 %v2667
    %v2700 = vunpack.c.l.b16 %v2668
    %v2701 = vunpack.c.l.b16 %v2669
    %v2702 = vunpack.c.l.b16 %v2670
    %v2703 = vunpack.c.l.b16 %v2671
    %v2704 = vunpack.c.l.b16 %v2672
    %v2705 = vunpack.c.l.b16 %v2673
    %v2706 = vunpack.c.l.b16 %v2674
    %v2707 = vpack.c.b16 %v2692, %v2691
    %v2708 = vpack.c.b16 %v2694, %v2693
    %v2709 = vpack.c.b16 %v2696, %v2695
    %v2710 = vpack.c.b16 %v2698, %v2697
    %v2711 = vpack.c.b16 %v2700, %v2699
    %v2712 = vpack.c.b16 %v2702, %v2701
    %v2713 = vpack.c.b16 %v2704, %v2703
    %v2714 = vpack.c.b16 %v2706, %v2705
    %2723 = vmatprep.subr.bf16.mxu0 0
    %2724 = vmatpush1.bf16.msra.mxu0 %v2707
    %2725 = vmatprep.subr.bf16.mxu0 0
    %2726 = vmatpush1.bf16.msra.mxu0 %v2708
    %2727 = vmatprep.subr.bf16.mxu0 0
    %2728 = vmatpush1.bf16.msra.mxu0 %v2709
    %2729 = vmatprep.subr.bf16.mxu0 0
    %2730 = vmatpush1.bf16.msra.mxu0 %v2710
    %2731 = vmatprep.subr.bf16.mxu0 0
    %2732 = vmatpush1.bf16.msra.mxu0 %v2711
    %2733 = vmatprep.subr.bf16.mxu0 0
    %2734 = vmatpush1.bf16.msra.mxu0 %v2712
    %2735 = vmatprep.subr.bf16.mxu0 0
    %2736 = vmatpush1.bf16.msra.mxu0 %v2713
    %2737 = vmatprep.subr.bf16.mxu0 0
    %2738 = vmatpush1.bf16.msra.mxu0 %v2714
    %2739 = vmatprep.subr.bf16.mxu0 0
    %2740 = vmatpush1.bf16.msra.mxu0 0
    %2741 = vmatprep.subr.bf16.mxu0 0
    %2742 = vmatpush1.bf16.msra.mxu0 0
    %2743 = vmatprep.subr.bf16.mxu0 0
    %2744 = vmatpush1.bf16.msra.mxu0 0
    %2745 = vmatprep.subr.bf16.mxu0 0
    %2746 = vmatpush1.bf16.msra.mxu0 0
    %2747 = vmatprep.subr.bf16.mxu0 0
    %2748 = vmatpush1.bf16.msra.mxu0 0
    %2749 = vmatprep.subr.bf16.mxu0 0
    %2750 = vmatpush1.bf16.msra.mxu0 0
    %2751 = vmatprep.subr.bf16.mxu0 0
    %2752 = vmatpush1.bf16.msra.mxu0 0
    %2753 = vmatprep.subr.bf16.mxu0 0
    %2754 = vmatpush1.bf16.msra.mxu0 0
    %2755 = vmatprep.mubr.bf16.mxu0 0
    %2756 = vmatmul.mubr.bf16.gmra.mrb[0].mxu0 %v1364
    %v2757 = vpop.f32.mrb[0].mxu0
    %v2758 = vadd.f32 0.0, %v2757
    %v2759 = vpop.f32.mrb[0].mxu0
    %v2760 = vpop.f32.mrb[0].mxu0
    %v2761 = vpop.f32.mrb[0].mxu0
    %2762 = vdwg.mxu0
    %v2779 = vunpack.c.l.b16 %v2643
    %v2780 = vunpack.c.l.b16 %v2644
    %v2781 = vunpack.c.l.b16 %v2645
    %v2782 = vunpack.c.l.b16 %v2646
    %v2783 = vunpack.c.l.b16 %v2647
    %v2784 = vunpack.c.l.b16 %v2648
    %v2785 = vunpack.c.l.b16 %v2649
    %v2786 = vunpack.c.l.b16 %v2650
    %v2787 = vunpack.c.l.b16 %v2651
    %v2788 = vunpack.c.l.b16 %v2652
    %v2789 = vunpack.c.l.b16 %v2653
    %v2790 = vunpack.c.l.b16 %v2654
    %v2791 = vunpack.c.l.b16 %v2655
    %v2792 = vunpack.c.l.b16 %v2656
    %v2793 = vunpack.c.l.b16 %v2657
    %v2794 = vunpack.c.l.b16 %v2658
    %v2795 = vpack.c.b16 %v2780, %v2779
    %v2796 = vpack.c.b16 %v2782, %v2781
    %v2797 = vpack.c.b16 %v2784, %v2783
    %v2798 = vpack.c.b16 %v2786, %v2785
    %v2799 = vpack.c.b16 %v2788, %v2787
    %v2800 = vpack.c.b16 %v2790, %v2789
    %v2801 = vpack.c.b16 %v2792, %v2791
    %v2802 = vpack.c.b16 %v2794, %v2793
    %2811 = vmatprep.subr.bf16.mxu0 0
    %2812 = vmatpush1.bf16.msra.mxu0 %v2795
    %2813 = vmatprep.subr.bf16.mxu0 0
    %2814 = vmatpush1.bf16.msra.mxu0 %v2796
    %2815 = vmatprep.subr.bf16.mxu0 0
    %2816 = vmatpush1.bf16.msra.mxu0 %v2797
    %2817 = vmatprep.subr.bf16.mxu0 0
    %2818 = vmatpush1.bf16.msra.mxu0 %v2798
    %2819 = vmatprep.subr.bf16.mxu0 0
    %2820 = vmatpush1.bf16.msra.mxu0 %v2799
    %2821 = vmatprep.subr.bf16.mxu0 0
    %2822 = vmatpush1.bf16.msra.mxu0 %v2800
    %2823 = vmatprep.subr.bf16.mxu0 0
    %2824 = vmatpush1.bf16.msra.mxu0 %v2801
    %2825 = vmatprep.subr.bf16.mxu0 0
    %2826 = vmatpush1.bf16.msra.mxu0 %v2802
    %2827 = vmatprep.subr.bf16.mxu0 0
    %2828 = vmatpush1.bf16.msra.mxu0 0
    %2829 = vmatprep.subr.bf16.mxu0 0
    %2830 = vmatpush1.bf16.msra.mxu0 0
    %2831 = vmatprep.subr.bf16.mxu0 0
    %2832 = vmatpush1.bf16.msra.mxu0 0
    %2833 = vmatprep.subr.bf16.mxu0 0
    %2834 = vmatpush1.bf16.msra.mxu0 0
    %2835 = vmatprep.subr.bf16.mxu0 0
    %2836 = vmatpush1.bf16.msra.mxu0 0
    %2837 = vmatprep.subr.bf16.mxu0 0
    %2838 = vmatpush1.bf16.msra.mxu0 0
    %2839 = vmatprep.subr.bf16.mxu0 0
    %2840 = vmatpush1.bf16.msra.mxu0 0
    %2841 = vmatprep.subr.bf16.mxu0 0
    %2842 = vmatpush1.bf16.msra.mxu0 0
    %2843 = vmatprep.mubr.bf16.mxu0 0
    %2844 = vmatmul.mubr.bf16.gmra.mrb[0].mxu0 %v2642
    %v2845 = vpop.f32.mrb[0].mxu0
    %v2846 = vadd.f32 %v2758, %v2845
    %v2847 = vpop.f32.mrb[0].mxu0
    %v2848 = vpop.f32.mrb[0].mxu0
    %v2849 = vpop.f32.mrb[0].mxu0
    %2850 = vdwg.mxu0
    %v2851 = vld [vmem:[%s18] sm:$0x1]
    %v2853 = vlaneseq
    %v2854 = vshrl.u32 %v2853, 7
    %v2855 = vsub.s32 0, %v2854
    %v2856 = vrot.slane %v2851, %v2855
    %v2858 = vadd.f32 %v2846, %v2856
    %2859 = vmax.xlane.f32.xlu0 %v2858
    %v2860 = vpop.xlane.xlu0 %2859
    %v2861 = vsub.f32 %v2858, %v2860
    %v2862 = vmul.f32 %v2861, 1.442695
    %v2863 = vpow.pop %v2862
    %2864 = vadd.xlane.f32.xlu0 %v2863
    %v2865 = vpop.xlane.xlu0 %2864
    %v2866 = vlog2.pop %v2865
    %v2867 = vmul.f32 %v2866, 0.6931472
    %v2868 = vsub.f32 %v2861, %v2867
    %2869 = vst [vmem:[#allocation19] sm:$0xff] %v2868
    // Predicated region
    $region118: #{decoder_forward.1} parent=1 // pred_check
      _
    $region119: #{decoder_forward.1} parent=1 // pred_check_branch
      %2871 = sbr.rel (0) target = $region121
    $region120: #{decoder_forward.1} parent=1 // pred_region
      %s2873 = ssub.s32 128, 128
      %2874 = vsyncadd [#allocation4], %s2873
      %s2876 = sshll.u32 [#allocation19], 4
      %s2877 = int_to_ptr.vmem [resolvable:$true] %s2876
      %2879 = dma.vmem_to_hbm [thread:$0]  %s2877, 128, %s19, [#allocation4]
    $region121: #{decoder_forward.1} parent=1 // pred_fallthru
      _
    // Predicated region
    $region122: #{decoder_forward.1} parent=1 // pred_check
      _
    $region123: #{decoder_forward.1} parent=1 // pred_check_branch
      %2881 = sbr.rel (0) target = $region125
    $region124: #{decoder_forward.1} parent=1 // pred_region
      %s2883 = ssub.s32 256, 256
      %2884 = vsyncadd [#allocation21], %s2883
      %s2885 = sshll.u32 [#allocation20], 4
      %s2886 = int_to_ptr.vmem [resolvable:$true] %s2885
      %2891 = dma.vmem_to_hbm [thread:$0]  %s2886, 256, %s20, [#allocation21], 128, 128, 8
    $region125: #{decoder_forward.1} parent=1 // pred_fallthru
      _
    // Predicated region
    $region126: #{decoder_forward.1} parent=1 // pred_check
      _
    $region127: #{decoder_forward.1} parent=1 // pred_check_branch
      %2893 = sbr.rel (0) target = $region129
    $region128: #{decoder_forward.1} parent=1 // pred_region
      %s2895 = ssub.s32 128, 128
      %2896 = vsyncadd [#allocation21], %s2895
      %s2898 = sshll.u32 [#allocation22], 4
      %s2899 = int_to_ptr.vmem [resolvable:$true] %s2898
      %2901 = dma.vmem_to_hbm [thread:$0]  %s2899, 128, %s21, [#allocation21]
    $region129: #{decoder_forward.1} parent=1 // pred_fallthru
      _
    // Predicated region
    $region130: #{decoder_forward.1} parent=1 // pred_check
      _
    $region131: #{decoder_forward.1} parent=1 // pred_check_branch
      %2903 = sbr.rel (0) target = $region133
    $region132: #{decoder_forward.1} parent=1 // pred_region
      %2904 = dma.done [#allocation4], 128
    $region133: #{decoder_forward.1} parent=1 // pred_fallthru
      _
    // Predicated region
    $region134: #{decoder_forward.1} parent=1 // pred_check
      _
    $region135: #{decoder_forward.1} parent=1 // pred_check_branch
      %2906 = sbr.rel (0) target = $region137
    $region136: #{decoder_forward.1} parent=1 // pred_region
      %2907 = dma.done [#allocation21], 256
    $region137: #{decoder_forward.1} parent=1 // pred_fallthru
      _
    // Predicated region
    $region138: #{decoder_forward.1} parent=1 // pred_check
      _
    $region139: #{decoder_forward.1} parent=1 // pred_check_branch
      %2909 = sbr.rel (0) target = $region141
    $region140: #{decoder_forward.1} parent=1 // pred_region
      %2910 = dma.done [#allocation21], 128
    $region141: #{decoder_forward.1} parent=1 // pred_fallthru
      _
    %2911 = vsyncpa [#allocation3], 1
    %2912 = vsyncpa [#allocation6], 1
    %2913 = vsyncpa [#allocation9], 1
    %2914 = vsyncpa [#allocation12], 1
    %2915 = vsyncpa [#allocation15], 1
    %2916 = vsyncpa [#allocation18], 1
    %2917 = vsyncpa [#allocation4], 1
    %2918 = vsyncpa [#allocation21], 1

</llo_original>
